<compile_context>
chip_gen: v7x
topology: tpu7x:2x2x1
jax: 0.10.0
libtpu: 0.0.40
codegen_flags: <defaults>
</compile_context>

<pallas_src>
import jax
import jax.numpy as jnp
from jax.experimental import pallas as pl
from jax.experimental.pallas import tpu as pltpu

# True / 128-padded dims.
D_IN, D_PAD = 784, 896      # input / recon lane dim (896 = 7 * 128)
H, H_PAD = 400, 512         # hidden lane dim
L, L_PAD = 20, 128          # latent lane dim
BIAS_LEN = H_PAD + 2 * L_PAD + H_PAD + D_PAD   # 512 + 256 + 512 + 896 = 2176


def _round_up(n, m):
    return ((n + m - 1) // m) * m


# --------------------------------------------------------------------------------------
# Kernel
# --------------------------------------------------------------------------------------
def vae_kernel(x_ref, eps_ref, w1_ref, wml_ref, w3_ref, w4_ref, bias_ref,
               recon_ref, mulv_ref):
    # Static, 128-aligned slices of the packed bias buffer (f32).
    b1 = bias_ref[:, 0:H_PAD]                                   # (1, 512)
    bml = bias_ref[:, H_PAD:H_PAD + 2 * L_PAD]                  # (1, 256)
    b3 = bias_ref[:, H_PAD + 2 * L_PAD:2 * H_PAD + 2 * L_PAD]   # (1, 512)
    b4 = bias_ref[:, 2 * H_PAD + 2 * L_PAD:BIAS_LEN]            # (1, 896)

    cdt = w1_ref.dtype  # bf16 matmul-operand dtype for fc1 / fc3 / fc4

    # --- encode ---
    x = x_ref[...]                                               # (TB, 896) bf16
    h1 = jnp.dot(x, w1_ref[...], preferred_element_type=jnp.float32) + b1
    h1 = jnp.maximum(h1, 0.0)                                    # ReLU, (TB, 512) f32

    # Fused mu || logvar projection, kept in f32 (tiny matmul, tighter parity for exp()).
    mulv = jnp.dot(h1, wml_ref[...], preferred_element_type=jnp.float32) + bml  # (TB, 256)
    mu = mulv[:, :L_PAD]                                         # (TB, 128)
    logvar = mulv[:, L_PAD:]                                     # (TB, 128)

    # --- reparameterize: z = eps * exp(0.5 * logvar) + mu (f32) ---
    # eps pad lanes (>= 20) are zero, so z pad lanes stay zero before the w3 contraction.
    std = jnp.exp(0.5 * logvar)
    z = eps_ref[...].astype(jnp.float32) * std + mu              # (TB, 128) f32

    # --- decode ---
    h3 = jnp.dot(z.astype(cdt), w3_ref[...], preferred_element_type=jnp.float32) + b3
    h3 = jnp.maximum(h3, 0.0)                                    # (TB, 512) f32
    logits = jnp.dot(h3.astype(cdt), w4_ref[...], preferred_element_type=jnp.float32) + b4

    # Padded recon columns hold sigmoid(0)=0.5 and padded rows hold bias-driven values:
    # consumers of the padded output must ignore columns >= 784 and rows >= B.
    recon_ref[...] = jax.nn.sigmoid(logits).astype(recon_ref.dtype)   # bf16
    mulv_ref[...] = mulv                                              # f32


# --------------------------------------------------------------------------------------
# Parameter / input preparation (one-time, outside the hot loop)
# --------------------------------------------------------------------------------------
def prepare_params(p, weight_dtype=jnp.bfloat16):
    """Pad / fuse / cast the raw nn.Linear-shaped params once."""
    def pad2(a, rows, cols):
        return jnp.pad(a, ((0, rows - a.shape[0]), (0, cols - a.shape[1])))

    w1 = pad2(p["w1"], D_PAD, H_PAD).astype(weight_dtype)                    # (896, 512) bf16
    wml = pad2(
        jnp.concatenate([pad2(p["w21"], H, L_PAD), pad2(p["w22"], H, L_PAD)], axis=1),
        H_PAD, 2 * L_PAD).astype(jnp.float32)                               # (512, 256) f32
    w3 = pad2(p["w3"], L_PAD, H_PAD).astype(weight_dtype)                    # (128, 512) bf16
    w4 = pad2(p["w4"], H_PAD, D_PAD).astype(weight_dtype)                    # (512, 896) bf16

    bias = jnp.concatenate(
        [pad2(p["b1"], 1, H_PAD),
         pad2(p["b21"], 1, L_PAD), pad2(p["b22"], 1, L_PAD),
         pad2(p["b3"], 1, H_PAD),
         pad2(p["b4"], 1, D_PAD)], axis=1).astype(jnp.float32)               # (1, 2176)

    return {"w1": w1, "wml": wml, "w3": w3, "w4": w4, "bias": bias,
            "compute_dtype": weight_dtype}


def pick_batch_tile(B, tb=512, min_steps=2):
    """Pick TB to (a) minimize batch padding, (b) guarantee >= min_steps grid steps
    (v7x two-core split of the 'parallel' axis), (c) cap TB at `tb` (VMEM budget)."""
    n_steps = max(min_steps, pl.cdiv(B, tb))
    TB = _round_up(pl.cdiv(B, n_steps), 8)       # sublane-aligned rows
    B_pad = _round_up(B, TB)
    return TB, B_pad


def prepare_inputs(x, eps, TB, B_pad, compute_dtype=jnp.bfloat16):
    """One-time pad + cast of activations to lane-dense bf16 slabs (not the hot path)."""
    B = x.shape[0]
    x_p = jnp.pad(x, ((0, B_pad - B), (0, D_PAD - D_IN))).astype(compute_dtype)
    eps_p = jnp.pad(eps, ((0, B_pad - B), (0, L_PAD - L))).astype(compute_dtype)
    return x_p, eps_p


# --------------------------------------------------------------------------------------
# pallas_call wrappers
# --------------------------------------------------------------------------------------
def _resident_spec(shape):
    """Constant-index-map spec for weights/biases; single-buffered when supported."""
    index_map = lambda *_: (0,) * len(shape)
    if hasattr(pl, "Buffered"):
        try:
            return pl.BlockSpec(shape, index_map, pipeline_mode=pl.Buffered(1))
        except TypeError:
            pass
    return pl.BlockSpec(shape, index_map)


def vae_forward_padded(x_p, eps_p, prepped, TB):
    """HOT PATH. x_p: (B_pad, 896) bf16, eps_p: (B_pad, 128) bf16 (zero in lanes >= 20).
    Returns padded recon (B_pad, 896) bf16 and mu||logvar (B_pad, 256) f32."""
    B_pad = x_p.shape[0]
    grid = (B_pad // TB,)
    batch_row = lambda i: (i, 0)

    recon_p, mulv_p = pl.pallas_call(
        vae_kernel,
        grid=grid,
        out_shape=(jax.ShapeDtypeStruct((B_pad, D_PAD), jnp.bfloat16),       # recon (padded)
                   jax.ShapeDtypeStruct((B_pad, 2 * L_PAD), jnp.float32)),   # mu || logvar
        in_specs=[
            pl.BlockSpec((TB, D_PAD), batch_row),         # x
            pl.BlockSpec((TB, L_PAD), batch_row),         # eps
            _resident_spec((D_PAD, H_PAD)),               # w1
            _resident_spec((H_PAD, 2 * L_PAD)),           # w21 || w22 (fused, f32)
            _resident_spec((L_PAD, H_PAD)),               # w3
            _resident_spec((H_PAD, D_PAD)),               # w4
            _resident_spec((1, BIAS_LEN)),                # packed biases
        ],
        out_specs=(pl.BlockSpec((TB, D_PAD), batch_row),
                   pl.BlockSpec((TB, 2 * L_PAD), batch_row)),
        compiler_params=pltpu.CompilerParams(
            dimension_semantics=("parallel",),
            vmem_limit_bytes=48 << 20),
    )(x_p, eps_p, prepped["w1"], prepped["wml"], prepped["w3"], prepped["w4"],
      prepped["bias"])
    return recon_p, mulv_p


def vae_forward(x, eps, prepped, tb=512, min_steps=2):
    """Convenience wrapper (pads, runs the kernel, slices back). For steady-state use
    keep inputs pre-padded and consume the padded outputs of `vae_forward_padded`."""
    B = x.shape[0]
    TB, B_pad = pick_batch_tile(B, tb, min_steps)
    x_p, eps_p = prepare_inputs(x, eps, TB, B_pad, prepped["compute_dtype"])
    recon_p, mulv_p = vae_forward_padded(x_p, eps_p, prepped, TB)
    recon = recon_p[:B, :D_IN].astype(jnp.float32)
    mu = mulv_p[:B, :L]
    logvar = mulv_p[:B, L_PAD:L_PAD + L]
    return recon, mu, logvar


# --------------------------------------------------------------------------------------
# Synthetic params + pure-JAX reference
# --------------------------------------------------------------------------------------
def init_params(key):
    """Deterministic synthetic parameters with the nn.Linear shapes of the module."""
    def linear(k, fan_in, fan_out):
        kw, kb = jax.random.split(k)
        scale = 1.0 / jnp.sqrt(fan_in)
        w = jax.random.uniform(kw, (fan_in, fan_out), jnp.float32, -scale, scale)
        b = jax.random.uniform(kb, (1, fan_out), jnp.float32, -scale, scale)
        return w, b

    k1, k21, k22, k3, k4 = jax.random.split(key, 5)
    p = {}
    p["w1"], p["b1"] = linear(k1, 784, 400)
    p["w21"], p["b21"] = linear(k21, 400, 20)
    p["w22"], p["b22"] = linear(k22, 400, 20)
    p["w3"], p["b3"] = linear(k3, 20, 400)
    p["w4"], p["b4"] = linear(k4, 400, 784)
    return p


def vae_forward_ref(x, eps, p, match_kernel=True):
    """Pure-JAX reference.  match_kernel=True mirrors the kernel's dtype choices
    (bf16-operand fc1/fc3/fc4, f32 mu/logvar projection); False = full f32 module."""
    def mm_bf16(a, w):
        return jnp.dot(a.astype(jnp.bfloat16), w.astype(jnp.bfloat16),
                       preferred_element_type=jnp.float32)

    def mm_f32(a, w):
        return jnp.dot(a, w, preferred_element_type=jnp.float32)

    mm = mm_bf16 if match_kernel else mm_f32
    h1 = jax.nn.relu(mm(x, p["w1"]) + p["b1"])
    mu = mm_f32(h1, p["w21"]) + p["b21"]
    logvar = mm_f32(h1, p["w22"]) + p["b22"]
    z = eps * jnp.exp(0.5 * logvar) + mu
    h3 = jax.nn.relu(mm(z, p["w3"]) + p["b3"])
    recon = jax.nn.sigmoid(mm(h3, p["w4"]) + p["b4"])
    return recon, mu, logvar


if __name__ == "__main__":
    key = jax.random.PRNGKey(0)
    kx, keps, kp = jax.random.split(key, 3)

    params = init_params(kp)
    prepped = prepare_params(params)

    # B=8: single grid step.  B=300: TB=152, 2 grid steps (minimal padding, both cores).
    for B in (8, 300):
        x = jax.random.normal(jax.random.fold_in(kx, B), (B, 784), jnp.float32)
        # Round eps to bf16 once so the kernel (bf16 eps stream) and refs see identical noise.
        eps = jax.random.normal(jax.random.fold_in(keps, B), (B, 20),
                                jnp.float32).astype(jnp.bfloat16).astype(jnp.float32)

        recon, mu, logvar = vae_forward(x, eps, prepped)
        jax.block_until_ready((recon, mu, logvar))

        # Tight check vs a reference with matching matmul dtypes.
        r_q, mu_q, lv_q = vae_forward_ref(x, eps, params, match_kernel=True)
        assert jnp.allclose(recon, r_q, atol=1e-2), "recon mismatch (matched ref)"
        assert jnp.allclose(mu, mu_q, atol=1e-2), "mu mismatch (matched ref)"
        assert jnp.allclose(logvar, lv_q, atol=1e-2), "logvar mismatch (matched ref)"

        # Loose check vs the full-f32 reference (module semantics preserved).
        r_f, mu_f, lv_f = vae_forward_ref(x, eps, params, match_kernel=False)
        assert jnp.allclose(recon, r_f, atol=5e-2), "recon drift vs f32 ref"
        assert jnp.allclose(mu, mu_f, atol=5e-2), "mu drift vs f32 ref"
        assert jnp.allclose(logvar, lv_f, atol=5e-2), "logvar drift vs f32 ref"

    # TODO(synk): VAE.sample() (repeat + noisy mu/logvar) is host-side glue, not part of forward.
    print("KERNEL_OK")
</pallas_src>

<mosaic_0001>
module attributes {stable_mosaic.version = 11 : i64} {
  func.func @vae_kernel(%arg0: i32, %arg1: memref<8x896xbf16, #tpu.memory_space<vmem>>, %arg2: memref<8x128xbf16, #tpu.memory_space<vmem>>, %arg3: memref<896x512xbf16, #tpu.memory_space<vmem>>, %arg4: memref<512x256xf32, #tpu.memory_space<vmem>>, %arg5: memref<128x512xbf16, #tpu.memory_space<vmem>>, %arg6: memref<512x896xbf16, #tpu.memory_space<vmem>>, %arg7: memref<1x2176xf32, #tpu.memory_space<vmem>>, %arg8: memref<8x896xbf16, #tpu.memory_space<vmem>>, %arg9: memref<8x256xf32, #tpu.memory_space<vmem>>) attributes {dimension_semantics = [#tpu.dimension_semantics<parallel>], iteration_bounds = array<i64: 1>, scalar_prefetch = 0 : i64, scratch_operands = 0 : i64, tpu.core_type = #tpu.core_type<tc>, window_params = [{transform_indices = @transform_0, window_bounds = array<i64: 8, 896>}, {transform_indices = @transform_1, window_bounds = array<i64: 8, 128>}, {pipeline_mode = #tpu.pipeline_mode<synchronous>, transform_indices = @transform_2, window_bounds = array<i64: 896, 512>}, {pipeline_mode = #tpu.pipeline_mode<synchronous>, transform_indices = @transform_3, window_bounds = array<i64: 512, 256>}, {pipeline_mode = #tpu.pipeline_mode<synchronous>, transform_indices = @transform_4, window_bounds = array<i64: 128, 512>}, {pipeline_mode = #tpu.pipeline_mode<synchronous>, transform_indices = @transform_5, window_bounds = array<i64: 512, 896>}, {pipeline_mode = #tpu.pipeline_mode<synchronous>, transform_indices = @transform_6, window_bounds = array<i64: 1, 2176>}, {transform_indices = @transform_7, window_bounds = array<i64: 8, 896>}, {transform_indices = @transform_8, window_bounds = array<i64: 8, 256>}]} {
    %c0 = arith.constant 0 : index
    %c0_0 = arith.constant 0 : index
    %0 = vector.load %arg7[%c0, %c0_0] : memref<1x2176xf32, #tpu.memory_space<vmem>>, vector<1x512xf32>
    %c0_1 = arith.constant 0 : index
    %c512 = arith.constant 512 : index
    %1 = vector.load %arg7[%c0_1, %c512] : memref<1x2176xf32, #tpu.memory_space<vmem>>, vector<1x256xf32>
    %c0_2 = arith.constant 0 : index
    %c768 = arith.constant 768 : index
    %2 = vector.load %arg7[%c0_2, %c768] : memref<1x2176xf32, #tpu.memory_space<vmem>>, vector<1x512xf32>
    %c0_3 = arith.constant 0 : index
    %c1280 = arith.constant 1280 : index
    %3 = vector.load %arg7[%c0_3, %c1280] : memref<1x2176xf32, #tpu.memory_space<vmem>>, vector<1x896xf32>
    %c0_4 = arith.constant 0 : index
    %c0_5 = arith.constant 0 : index
    %4 = vector.load %arg1[%c0_4, %c0_5] : memref<8x896xbf16, #tpu.memory_space<vmem>>, vector<8x896xbf16>
    %c0_6 = arith.constant 0 : index
    %c0_7 = arith.constant 0 : index
    %5 = vector.load %arg3[%c0_6, %c0_7] : memref<896x512xbf16, #tpu.memory_space<vmem>>, vector<896x512xbf16>
    %cst = arith.constant dense<0.000000e+00> : vector<8x512xf32>
    %6 = tpu.matmul %4, %5, %cst {dimension_numbers = #tpu.dot_dimension_numbers<[1], [0], [0], [1], [0, 0, 1, 1], [], []>} : vector<8x896xbf16>, vector<896x512xbf16>, vector<8x512xf32> -> vector<8x512xf32>
    %7 = vector.broadcast %0 : vector<1x512xf32> to vector<8x512xf32>
    %8 = arith.addf %6, %7 : vector<8x512xf32>
    %cst_8 = arith.constant 0.000000e+00 : f32
    %9 = vector.broadcast %cst_8 : f32 to vector<8x512xf32>
    %10 = arith.maximumf %8, %9 : vector<8x512xf32>
    %c0_9 = arith.constant 0 : index
    %c0_10 = arith.constant 0 : index
    %11 = vector.load %arg4[%c0_9, %c0_10] : memref<512x256xf32, #tpu.memory_space<vmem>>, vector<512x256xf32>
    %cst_11 = arith.constant dense<0.000000e+00> : vector<8x256xf32>
    %12 = tpu.matmul %10, %11, %cst_11 {dimension_numbers = #tpu.dot_dimension_numbers<[1], [0], [0], [1], [0, 0, 1, 1], [], []>} : vector<8x512xf32>, vector<512x256xf32>, vector<8x256xf32> -> vector<8x256xf32>
    %13 = vector.broadcast %1 : vector<1x256xf32> to vector<8x256xf32>
    %14 = arith.addf %12, %13 : vector<8x256xf32>
    %15 = vector.extract_strided_slice %14 {offsets = [0, 0], sizes = [8, 128], strides = [1, 1]} : vector<8x256xf32> to vector<8x128xf32>
    %16 = vector.extract_strided_slice %14 {offsets = [0, 128], sizes = [8, 128], strides = [1, 1]} : vector<8x256xf32> to vector<8x128xf32>
    %cst_12 = arith.constant 5.000000e-01 : f32
    %17 = vector.broadcast %cst_12 : f32 to vector<8x128xf32>
    %18 = arith.mulf %17, %16 : vector<8x128xf32>
    %19 = math.exp %18 : vector<8x128xf32>
    %c0_13 = arith.constant 0 : index
    %c0_14 = arith.constant 0 : index
    %20 = vector.load %arg2[%c0_13, %c0_14] : memref<8x128xbf16, #tpu.memory_space<vmem>>, vector<8x128xbf16>
    %21 = arith.extf %20 : vector<8x128xbf16> to vector<8x128xf32>
    %22 = arith.mulf %21, %19 : vector<8x128xf32>
    %23 = arith.addf %22, %15 : vector<8x128xf32>
    %24 = arith.truncf %23 : vector<8x128xf32> to vector<8x128xbf16>
    %c0_15 = arith.constant 0 : index
    %c0_16 = arith.constant 0 : index
    %25 = vector.load %arg5[%c0_15, %c0_16] : memref<128x512xbf16, #tpu.memory_space<vmem>>, vector<128x512xbf16>
    %cst_17 = arith.constant dense<0.000000e+00> : vector<8x512xf32>
    %26 = tpu.matmul %24, %25, %cst_17 {dimension_numbers = #tpu.dot_dimension_numbers<[1], [0], [0], [1], [0, 0, 1, 1], [], []>} : vector<8x128xbf16>, vector<128x512xbf16>, vector<8x512xf32> -> vector<8x512xf32>
    %27 = vector.broadcast %2 : vector<1x512xf32> to vector<8x512xf32>
    %28 = arith.addf %26, %27 : vector<8x512xf32>
    %cst_18 = arith.constant 0.000000e+00 : f32
    %29 = vector.broadcast %cst_18 : f32 to vector<8x512xf32>
    %30 = arith.maximumf %28, %29 : vector<8x512xf32>
    %31 = arith.truncf %30 : vector<8x512xf32> to vector<8x512xbf16>
    %c0_19 = arith.constant 0 : index
    %c0_20 = arith.constant 0 : index
    %32 = vector.load %arg6[%c0_19, %c0_20] : memref<512x896xbf16, #tpu.memory_space<vmem>>, vector<512x896xbf16>
    %cst_21 = arith.constant dense<0.000000e+00> : vector<8x896xf32>
    %33 = tpu.matmul %31, %32, %cst_21 {dimension_numbers = #tpu.dot_dimension_numbers<[1], [0], [0], [1], [0, 0, 1, 1], [], []>} : vector<8x512xbf16>, vector<512x896xbf16>, vector<8x896xf32> -> vector<8x896xf32>
    %34 = vector.broadcast %3 : vector<1x896xf32> to vector<8x896xf32>
    %35 = arith.addf %33, %34 : vector<8x896xf32>
    %36 = arith.negf %35 : vector<8x896xf32>
    %37 = math.exp %36 : vector<8x896xf32>
    %cst_22 = arith.constant 1.000000e+00 : f32
    %38 = vector.broadcast %cst_22 : f32 to vector<8x896xf32>
    %39 = arith.addf %38, %37 : vector<8x896xf32>
    %40 = arith.divf %38, %39 : vector<8x896xf32>
    %41 = arith.truncf %40 : vector<8x896xf32> to vector<8x896xbf16>
    %c0_23 = arith.constant 0 : index
    %c0_24 = arith.constant 0 : index
    %42 = vector.load %arg8[%c0_23, %c0_24] : memref<8x896xbf16, #tpu.memory_space<vmem>>, vector<8x896xbf16>
    tpu.vector_store %arg8[%c0_23, %c0_24], %41 {strides = array<i32>} : memref<8x896xbf16, #tpu.memory_space<vmem>>, vector<8x896xbf16>,
    %c0_25 = arith.constant 0 : index
    %c0_26 = arith.constant 0 : index
    %43 = vector.load %arg9[%c0_25, %c0_26] : memref<8x256xf32, #tpu.memory_space<vmem>>, vector<8x256xf32>
    tpu.vector_store %arg9[%c0_25, %c0_26], %14 {strides = array<i32>} : memref<8x256xf32, #tpu.memory_space<vmem>>, vector<8x256xf32>,
    return
  }
  func.func @transform_0(%arg0: i32) -> (i32, i32) {
    %c0_i32 = arith.constant 0 : i32
    %c0_i32_0 = arith.constant 0 : i32
    return %arg0, %c0_i32 : i32, i32
  }
  func.func @transform_1(%arg0: i32) -> (i32, i32) {
    %c0_i32 = arith.constant 0 : i32
    %c0_i32_0 = arith.constant 0 : i32
    return %arg0, %c0_i32 : i32, i32
  }
  func.func @transform_2(%arg0: i32) -> (i32, i32) {
    %c0_i32 = arith.constant 0 : i32
    %c0_i32_0 = arith.constant 0 : i32
    %c0_i32_1 = arith.constant 0 : i32
    return %c0_i32, %c0_i32_0 : i32, i32
  }
  func.func @transform_3(%arg0: i32) -> (i32, i32) {
    %c0_i32 = arith.constant 0 : i32
    %c0_i32_0 = arith.constant 0 : i32
    %c0_i32_1 = arith.constant 0 : i32
    return %c0_i32, %c0_i32_0 : i32, i32
  }
  func.func @transform_4(%arg0: i32) -> (i32, i32) {
    %c0_i32 = arith.constant 0 : i32
    %c0_i32_0 = arith.constant 0 : i32
    %c0_i32_1 = arith.constant 0 : i32
    return %c0_i32, %c0_i32_0 : i32, i32
  }
  func.func @transform_5(%arg0: i32) -> (i32, i32) {
    %c0_i32 = arith.constant 0 : i32
    %c0_i32_0 = arith.constant 0 : i32
    %c0_i32_1 = arith.constant 0 : i32
    return %c0_i32, %c0_i32_0 : i32, i32
  }
  func.func @transform_6(%arg0: i32) -> (i32, i32) {
    %c0_i32 = arith.constant 0 : i32
    %c0_i32_0 = arith.constant 0 : i32
    %c0_i32_1 = arith.constant 0 : i32
    return %c0_i32, %c0_i32_0 : i32, i32
  }
  func.func @transform_7(%arg0: i32) -> (i32, i32) {
    %c0_i32 = arith.constant 0 : i32
    %c0_i32_0 = arith.constant 0 : i32
    return %arg0, %c0_i32 : i32, i32
  }
  func.func @transform_8(%arg0: i32) -> (i32, i32) {
    %c0_i32 = arith.constant 0 : i32
    %c0_i32_0 = arith.constant 0 : i32
    return %arg0, %c0_i32 : i32, i32
  }
}

</mosaic_0001>

<llo_original>
// kernel: tpu_custom_call.1
$region0: #{tpu_custom_call.1}
  #allocation0 [shape = 'u32[]', space=smem, size = 0x4, offset = 0x4, fixed_abs, tag = 'smem constant byte address 0x4 - core index']
  #allocation1 [shape = 'u32[144,128]{1,0:T(1,128)}', space=vmem, size = 0x12000, scoped, tag = 'internal scratch']
  %s0 = inlined_call_operand.hbm [shape: bf16[8,896], index: 0, kind: input, shape index: {}]
  %s1 = inlined_call_operand.hbm [shape: bf16[8,128], index: 1, kind: input, shape index: {}]
  %s2 = inlined_call_operand.hbm [shape: bf16[896,512], index: 2, kind: input, shape index: {}]
  %s3 = inlined_call_operand.hbm [shape: f32[512,256], index: 3, kind: input, shape index: {}]
  %s4 = inlined_call_operand.hbm [shape: bf16[128,512], index: 4, kind: input, shape index: {}]
  %s5 = inlined_call_operand.hbm [shape: bf16[512,896], index: 5, kind: input, shape index: {}]
  %s6 = inlined_call_operand.vmem [shape: f32[1,2176], index: 6, kind: input, shape index: {}]
  %s7 = inlined_call_operand.hbm [shape: bf16[8,896], index: 7, kind: output, shape index: {0}]
  %s8 = inlined_call_operand.hbm [shape: f32[8,256], index: 8, kind: output, shape index: {1}]
  %9 = xla_tuple %s7, %s8
  %s10 = sld [smem:[#allocation0]]
  $region70: #{tpu_custom_call.1} parent=0
    _
  %s12 = ssub.s32 1, %s10
  %s13 = scalar_select 0, %s12, %s10
  $region1: #{tpu_custom_call.1} parent=0
    #allocation2 [shape = 'u8[14336]{0}', space=vmem, size = 0x3800, scoped, tag = 'input window, operand 0, single buffered']
    #allocation3 [shape = 's32[1]{0}', space=sflag, size = 0x4, scoped, tag = 'scoped memory for tpu_custom_call.1']
    #allocation4 [shape = 's32[1]{0}', space=sflag, size = 0x4, scoped, tag = 'scoped memory for tpu_custom_call.1']
    #allocation5 [shape = 'u8[2048]{0}', space=vmem, size = 0x800, scoped, tag = 'input window, operand 1, single buffered']
    #allocation6 [shape = 's32[1]{0}', space=sflag, size = 0x4, scoped, tag = 'scoped memory for tpu_custom_call.1']
    #allocation7 [shape = 'u8[917504]{0}', space=vmem, size = 0xe0000, scoped, tag = 'input window, operand 2, single buffered']
    #allocation8 [shape = 'u8[524288]{0}', space=vmem, size = 0x80000, scoped, tag = 'input window, operand 3, single buffered']
    #allocation9 [shape = 's32[1]{0}', space=sflag, size = 0x4, scoped, tag = 'scoped memory for tpu_custom_call.1']
    #allocation10 [shape = 'u8[131072]{0}', space=vmem, size = 0x20000, scoped, tag = 'input window, operand 4, single buffered']
    #allocation11 [shape = 'u8[917504]{0}', space=vmem, size = 0xe0000, scoped, tag = 'input window, operand 5, single buffered']
    #allocation12 [shape = 's32[1]{0}', space=sflag, size = 0x4, scoped, tag = 'scoped memory for tpu_custom_call.1']
    #allocation13 [shape = 'u8[14336]{0}', space=vmem, size = 0x3800, scoped, tag = 'output window, operand 0, single buffered']
    #allocation14 [shape = 'u8[8192]{0}', space=vmem, size = 0x2000, scoped, tag = 'output window, operand 1, single buffered']
    #allocation15 [shape = 's32[1]{0}', space=sflag, size = 0x4, scoped, tag = 'scoped memory for tpu_custom_call.1']
    %14 = vsyncpa [#allocation3], 0
    %15 = vsyncpa [#allocation6], 0
    %16 = vsyncpa [#allocation9], 0
    %17 = vsyncpa [#allocation12], 0
    %18 = vsyncpa [#allocation4], 0
    %19 = vsyncpa [#allocation15], 0
    // Predicated region
    $region2: #{tpu_custom_call.1} parent=1 // pred_check
      _
    $region3: #{tpu_custom_call.1} parent=1 // pred_check_branch
      %21 = sbr.rel (0) target = $region5
    $region4: #{tpu_custom_call.1} parent=1 // pred_region
      %s23 = ssub.s32 448, 448
      %24 = vsyncadd [#allocation3], %s23
      %s26 = sshll.u32 [#allocation2], 4
      %s27 = int_to_ptr.vmem [resolvable:$true] %s26
      %29 = dma.hbm_to_vmem [thread:$0]  %s0, 448, %s27, [#allocation3]
    $region5: #{tpu_custom_call.1} parent=1 // pred_fallthru
      _
    // Predicated region
    $region6: #{tpu_custom_call.1} parent=1 // pred_check
      _
    $region7: #{tpu_custom_call.1} parent=1 // pred_check_branch
      %31 = sbr.rel (0) target = $region9
    $region8: #{tpu_custom_call.1} parent=1 // pred_region
      %s33 = ssub.s32 64, 64
      %34 = vsyncadd [#allocation6], %s33
      %s36 = sshll.u32 [#allocation5], 4
      %s37 = int_to_ptr.vmem [resolvable:$true] %s36
      %39 = dma.hbm_to_vmem [thread:$0]  %s1, 64, %s37, [#allocation6]
    $region9: #{tpu_custom_call.1} parent=1 // pred_fallthru
      _
    // Predicated region
    $region10: #{tpu_custom_call.1} parent=1 // pred_check
      _
    $region11: #{tpu_custom_call.1} parent=1 // pred_check_branch
      %41 = sbr.rel (0) target = $region13
    $region12: #{tpu_custom_call.1} parent=1 // pred_region
      %s43 = ssub.s32 28672, 28672
      %44 = vsyncadd [#allocation6], %s43
      %s45 = sshll.u32 [#allocation7], 4
      %s46 = int_to_ptr.vmem [resolvable:$true] %s45
      %51 = dma.hbm_to_vmem [thread:$0]  %s2, 28672, %s46, [#allocation6], 256, 256, 16
    $region13: #{tpu_custom_call.1} parent=1 // pred_fallthru
      _
    // Predicated region
    $region14: #{tpu_custom_call.1} parent=1 // pred_check
      _
    $region15: #{tpu_custom_call.1} parent=1 // pred_check_branch
      %53 = sbr.rel (0) target = $region17
    $region16: #{tpu_custom_call.1} parent=1 // pred_region
      %s55 = ssub.s32 16384, 16384
      %56 = vsyncadd [#allocation9], %s55
      %s57 = sshll.u32 [#allocation8], 4
      %s58 = int_to_ptr.vmem [resolvable:$true] %s57
      %63 = dma.hbm_to_vmem [thread:$0]  %s3, 16384, %s58, [#allocation9], 256, 256, 16
    $region17: #{tpu_custom_call.1} parent=1 // pred_fallthru
      _
    // Predicated region
    $region18: #{tpu_custom_call.1} parent=1 // pred_check
      _
    $region19: #{tpu_custom_call.1} parent=1 // pred_check_branch
      %65 = sbr.rel (0) target = $region21
    $region20: #{tpu_custom_call.1} parent=1 // pred_region
      %s67 = ssub.s32 4096, 4096
      %68 = vsyncadd [#allocation9], %s67
      %s69 = sshll.u32 [#allocation10], 4
      %s70 = int_to_ptr.vmem [resolvable:$true] %s69
      %75 = dma.hbm_to_vmem [thread:$0]  %s4, 4096, %s70, [#allocation9], 256, 256, 16
    $region21: #{tpu_custom_call.1} parent=1 // pred_fallthru
      _
    // Predicated region
    $region22: #{tpu_custom_call.1} parent=1 // pred_check
      _
    $region23: #{tpu_custom_call.1} parent=1 // pred_check_branch
      %77 = sbr.rel (0) target = $region25
    $region24: #{tpu_custom_call.1} parent=1 // pred_region
      %s79 = ssub.s32 28672, 28672
      %80 = vsyncadd [#allocation12], %s79
      %s81 = sshll.u32 [#allocation11], 4
      %s82 = int_to_ptr.vmem [resolvable:$true] %s81
      %87 = dma.hbm_to_vmem [thread:$0]  %s5, 28672, %s82, [#allocation12], 448, 448, 28
    $region25: #{tpu_custom_call.1} parent=1 // pred_fallthru
      _
    // Predicated region
    $region26: #{tpu_custom_call.1} parent=1 // pred_check
      _
    $region27: #{tpu_custom_call.1} parent=1 // pred_check_branch
      %89 = sbr.rel (0) target = $region29
    $region28: #{tpu_custom_call.1} parent=1 // pred_region
      _
    $region29: #{tpu_custom_call.1} parent=1 // pred_fallthru
      _
    // Predicated region
    $region30: #{tpu_custom_call.1} parent=1 // pred_check
      _
    $region31: #{tpu_custom_call.1} parent=1 // pred_check_branch
      %91 = sbr.rel (0) target = $region33
    $region32: #{tpu_custom_call.1} parent=1 // pred_region
      %92 = dma.done [#allocation3], 448
    $region33: #{tpu_custom_call.1} parent=1 // pred_fallthru
      _
    // Predicated region
    $region34: #{tpu_custom_call.1} parent=1 // pred_check
      _
    $region35: #{tpu_custom_call.1} parent=1 // pred_check_branch
      %94 = sbr.rel (0) target = $region37
    $region36: #{tpu_custom_call.1} parent=1 // pred_region
      %95 = dma.done [#allocation6], 64
    $region37: #{tpu_custom_call.1} parent=1 // pred_fallthru
      _
    // Predicated region
    $region38: #{tpu_custom_call.1} parent=1 // pred_check
      _
    $region39: #{tpu_custom_call.1} parent=1 // pred_check_branch
      %97 = sbr.rel (0) target = $region41
    $region40: #{tpu_custom_call.1} parent=1 // pred_region
      %98 = dma.done [#allocation6], 28672
    $region41: #{tpu_custom_call.1} parent=1 // pred_fallthru
      _
    // Predicated region
    $region42: #{tpu_custom_call.1} parent=1 // pred_check
      _
    $region43: #{tpu_custom_call.1} parent=1 // pred_check_branch
      %100 = sbr.rel (0) target = $region45
    $region44: #{tpu_custom_call.1} parent=1 // pred_region
      %101 = dma.done [#allocation9], 16384
    $region45: #{tpu_custom_call.1} parent=1 // pred_fallthru
      _
    // Predicated region
    $region46: #{tpu_custom_call.1} parent=1 // pred_check
      _
    $region47: #{tpu_custom_call.1} parent=1 // pred_check_branch
      %103 = sbr.rel (0) target = $region49
    $region48: #{tpu_custom_call.1} parent=1 // pred_region
      %104 = dma.done [#allocation9], 4096
    $region49: #{tpu_custom_call.1} parent=1 // pred_fallthru
      _
    // Predicated region
    $region50: #{tpu_custom_call.1} parent=1 // pred_check
      _
    $region51: #{tpu_custom_call.1} parent=1 // pred_check_branch
      %106 = sbr.rel (0) target = $region53
    $region52: #{tpu_custom_call.1} parent=1 // pred_region
      %107 = dma.done [#allocation12], 28672
    $region53: #{tpu_custom_call.1} parent=1 // pred_fallthru
      _
    %v109 = vld [vmem:[%s6] sm:$0xf]
    %v110 = vld [vmem:[%s6 + $0x4] sm:$0x3]
    %v111 = vld [vmem:[%s6 + $0x6] sm:$0xf]
    %v112 = vld [vmem:[%s6 + $0xa] sm:$0xff]
    %v113 = vld [vmem:[#allocation2] sm:$0xff]
    %v114 = vld [vmem:[#allocation2 + $0x8] sm:$0xff]
    %v115 = vld [vmem:[#allocation2 + $0x10] sm:$0xff]
    %v116 = vld [vmem:[#allocation2 + $0x18] sm:$0xf]
    %v117 = vld [vmem:[#allocation7] sm:$0xff]
    %v118 = vld [vmem:[#allocation7 + $0x8] sm:$0xff]
    %v119 = vld [vmem:[#allocation7 + $0x10] sm:$0xff]
    %v120 = vld [vmem:[#allocation7 + $0x18] sm:$0xff]
    %v121 = vld [vmem:[#allocation7 + $0x20] sm:$0xff]
    %v122 = vld [vmem:[#allocation7 + $0x28] sm:$0xff]
    %v123 = vld [vmem:[#allocation7 + $0x30] sm:$0xff]
    %v124 = vld [vmem:[#allocation7 + $0x38] sm:$0xff]
    %v125 = vld [vmem:[#allocation7 + $0x40] sm:$0xff]
    %v126 = vld [vmem:[#allocation7 + $0x48] sm:$0xff]
    %v127 = vld [vmem:[#allocation7 + $0x50] sm:$0xff]
    %v128 = vld [vmem:[#allocation7 + $0x58] sm:$0xff]
    %v129 = vld [vmem:[#allocation7 + $0x60] sm:$0xff]
    %v130 = vld [vmem:[#allocation7 + $0x68] sm:$0xff]
    %v131 = vld [vmem:[#allocation7 + $0x70] sm:$0xff]
    %v132 = vld [vmem:[#allocation7 + $0x78] sm:$0xff]
    %v133 = vld [vmem:[#allocation7 + $0x80] sm:$0xff]
    %v134 = vld [vmem:[#allocation7 + $0x88] sm:$0xff]
    %v135 = vld [vmem:[#allocation7 + $0x90] sm:$0xff]
    %v136 = vld [vmem:[#allocation7 + $0x98] sm:$0xff]
    %v137 = vld [vmem:[#allocation7 + $0xa0] sm:$0xff]
    %v138 = vld [vmem:[#allocation7 + $0xa8] sm:$0xff]
    %v139 = vld [vmem:[#allocation7 + $0xb0] sm:$0xff]
    %v140 = vld [vmem:[#allocation7 + $0xb8] sm:$0xff]
    %v141 = vld [vmem:[#allocation7 + $0xc0] sm:$0xff]
    %v142 = vld [vmem:[#allocation7 + $0xc8] sm:$0xff]
    %v143 = vld [vmem:[#allocation7 + $0xd0] sm:$0xff]
    %v144 = vld [vmem:[#allocation7 + $0xd8] sm:$0xff]
    %v145 = vld [vmem:[#allocation7 + $0xe0] sm:$0xff]
    %v146 = vld [vmem:[#allocation7 + $0xe8] sm:$0xff]
    %v147 = vld [vmem:[#allocation7 + $0xf0] sm:$0xff]
    %v148 = vld [vmem:[#allocation7 + $0xf8] sm:$0xff]
    %v149 = vld [vmem:[#allocation7 + $0x100] sm:$0xff]
    %v150 = vld [vmem:[#allocation7 + $0x108] sm:$0xff]
    %v151 = vld [vmem:[#allocation7 + $0x110] sm:$0xff]
    %v152 = vld [vmem:[#allocation7 + $0x118] sm:$0xff]
    %v153 = vld [vmem:[#allocation7 + $0x120] sm:$0xff]
    %v154 = vld [vmem:[#allocation7 + $0x128] sm:$0xff]
    %v155 = vld [vmem:[#allocation7 + $0x130] sm:$0xff]
    %v156 = vld [vmem:[#allocation7 + $0x138] sm:$0xff]
    %v157 = vld [vmem:[#allocation7 + $0x140] sm:$0xff]
    %v158 = vld [vmem:[#allocation7 + $0x148] sm:$0xff]
    %v159 = vld [vmem:[#allocation7 + $0x150] sm:$0xff]
    %v160 = vld [vmem:[#allocation7 + $0x158] sm:$0xff]
    %v161 = vld [vmem:[#allocation7 + $0x160] sm:$0xff]
    %v162 = vld [vmem:[#allocation7 + $0x168] sm:$0xff]
    %v163 = vld [vmem:[#allocation7 + $0x170] sm:$0xff]
    %v164 = vld [vmem:[#allocation7 + $0x178] sm:$0xff]
    %v165 = vld [vmem:[#allocation7 + $0x180] sm:$0xff]
    %v166 = vld [vmem:[#allocation7 + $0x188] sm:$0xff]
    %v167 = vld [vmem:[#allocation7 + $0x190] sm:$0xff]
    %v168 = vld [vmem:[#allocation7 + $0x198] sm:$0xff]
    %v169 = vld [vmem:[#allocation7 + $0x1a0] sm:$0xff]
    %v170 = vld [vmem:[#allocation7 + $0x1a8] sm:$0xff]
    %v171 = vld [vmem:[#allocation7 + $0x1b0] sm:$0xff]
    %v172 = vld [vmem:[#allocation7 + $0x1b8] sm:$0xff]
    %v173 = vld [vmem:[#allocation7 + $0x1c0] sm:$0xff]
    %v174 = vld [vmem:[#allocation7 + $0x1c8] sm:$0xff]
    %v175 = vld [vmem:[#allocation7 + $0x1d0] sm:$0xff]
    %v176 = vld [vmem:[#allocation7 + $0x1d8] sm:$0xff]
    %v177 = vld [vmem:[#allocation7 + $0x1e0] sm:$0xff]
    %v178 = vld [vmem:[#allocation7 + $0x1e8] sm:$0xff]
    %v179 = vld [vmem:[#allocation7 + $0x1f0] sm:$0xff]
    %v180 = vld [vmem:[#allocation7 + $0x1f8] sm:$0xff]
    %v181 = vld [vmem:[#allocation7 + $0x200] sm:$0xff]
    %v182 = vld [vmem:[#allocation7 + $0x208] sm:$0xff]
    %v183 = vld [vmem:[#allocation7 + $0x210] sm:$0xff]
    %v184 = vld [vmem:[#allocation7 + $0x218] sm:$0xff]
    %v185 = vld [vmem:[#allocation7 + $0x220] sm:$0xff]
    %v186 = vld [vmem:[#allocation7 + $0x228] sm:$0xff]
    %v187 = vld [vmem:[#allocation7 + $0x230] sm:$0xff]
    %v188 = vld [vmem:[#allocation7 + $0x238] sm:$0xff]
    %v189 = vld [vmem:[#allocation7 + $0x240] sm:$0xff]
    %v190 = vld [vmem:[#allocation7 + $0x248] sm:$0xff]
    %v191 = vld [vmem:[#allocation7 + $0x250] sm:$0xff]
    %v192 = vld [vmem:[#allocation7 + $0x258] sm:$0xff]
    %v193 = vld [vmem:[#allocation7 + $0x260] sm:$0xff]
    %v194 = vld [vmem:[#allocation7 + $0x268] sm:$0xff]
    %v195 = vld [vmem:[#allocation7 + $0x270] sm:$0xff]
    %v196 = vld [vmem:[#allocation7 + $0x278] sm:$0xff]
    %v197 = vld [vmem:[#allocation7 + $0x280] sm:$0xff]
    %v198 = vld [vmem:[#allocation7 + $0x288] sm:$0xff]
    %v199 = vld [vmem:[#allocation7 + $0x290] sm:$0xff]
    %v200 = vld [vmem:[#allocation7 + $0x298] sm:$0xff]
    %v201 = vld [vmem:[#allocation7 + $0x2a0] sm:$0xff]
    %v202 = vld [vmem:[#allocation7 + $0x2a8] sm:$0xff]
    %v203 = vld [vmem:[#allocation7 + $0x2b0] sm:$0xff]
    %v204 = vld [vmem:[#allocation7 + $0x2b8] sm:$0xff]
    %v205 = vld [vmem:[#allocation7 + $0x2c0] sm:$0xff]
    %v206 = vld [vmem:[#allocation7 + $0x2c8] sm:$0xff]
    %v207 = vld [vmem:[#allocation7 + $0x2d0] sm:$0xff]
    %v208 = vld [vmem:[#allocation7 + $0x2d8] sm:$0xff]
    %v209 = vld [vmem:[#allocation7 + $0x2e0] sm:$0xff]
    %v210 = vld [vmem:[#allocation7 + $0x2e8] sm:$0xff]
    %v211 = vld [vmem:[#allocation7 + $0x2f0] sm:$0xff]
    %v212 = vld [vmem:[#allocation7 + $0x2f8] sm:$0xff]
    %v213 = vld [vmem:[#allocation7 + $0x300] sm:$0xff]
    %v214 = vld [vmem:[#allocation7 + $0x308] sm:$0xff]
    %v215 = vld [vmem:[#allocation7 + $0x310] sm:$0xff]
    %v216 = vld [vmem:[#allocation7 + $0x318] sm:$0xff]
    %v217 = vld [vmem:[#allocation7 + $0x320] sm:$0xff]
    %v218 = vld [vmem:[#allocation7 + $0x328] sm:$0xff]
    %v219 = vld [vmem:[#allocation7 + $0x330] sm:$0xff]
    %v220 = vld [vmem:[#allocation7 + $0x338] sm:$0xff]
    %v221 = vld [vmem:[#allocation7 + $0x340] sm:$0xff]
    %v222 = vld [vmem:[#allocation7 + $0x348] sm:$0xff]
    %v223 = vld [vmem:[#allocation7 + $0x350] sm:$0xff]
    %v224 = vld [vmem:[#allocation7 + $0x358] sm:$0xff]
    %v225 = vld [vmem:[#allocation7 + $0x360] sm:$0xff]
    %v226 = vld [vmem:[#allocation7 + $0x368] sm:$0xff]
    %v227 = vld [vmem:[#allocation7 + $0x370] sm:$0xff]
    %v228 = vld [vmem:[#allocation7 + $0x378] sm:$0xff]
    %v229 = vld [vmem:[#allocation7 + $0x380] sm:$0xff]
    %v230 = vld [vmem:[#allocation7 + $0x388] sm:$0xff]
    %v231 = vld [vmem:[#allocation7 + $0x390] sm:$0xff]
    %v232 = vld [vmem:[#allocation7 + $0x398] sm:$0xff]
    %v233 = vld [vmem:[#allocation7 + $0x3a0] sm:$0xff]
    %v234 = vld [vmem:[#allocation7 + $0x3a8] sm:$0xff]
    %v235 = vld [vmem:[#allocation7 + $0x3b0] sm:$0xff]
    %v236 = vld [vmem:[#allocation7 + $0x3b8] sm:$0xff]
    %v237 = vld [vmem:[#allocation7 + $0x3c0] sm:$0xff]
    %v238 = vld [vmem:[#allocation7 + $0x3c8] sm:$0xff]
    %v239 = vld [vmem:[#allocation7 + $0x3d0] sm:$0xff]
    %v240 = vld [vmem:[#allocation7 + $0x3d8] sm:$0xff]
    %v241 = vld [vmem:[#allocation7 + $0x3e0] sm:$0xff]
    %v242 = vld [vmem:[#allocation7 + $0x3e8] sm:$0xff]
    %v243 = vld [vmem:[#allocation7 + $0x3f0] sm:$0xff]
    %v244 = vld [vmem:[#allocation7 + $0x3f8] sm:$0xff]
    %v245 = vld [vmem:[#allocation7 + $0x400] sm:$0xff]
    %v246 = vld [vmem:[#allocation7 + $0x408] sm:$0xff]
    %v247 = vld [vmem:[#allocation7 + $0x410] sm:$0xff]
    %v248 = vld [vmem:[#allocation7 + $0x418] sm:$0xff]
    %v249 = vld [vmem:[#allocation7 + $0x420] sm:$0xff]
    %v250 = vld [vmem:[#allocation7 + $0x428] sm:$0xff]
    %v251 = vld [vmem:[#allocation7 + $0x430] sm:$0xff]
    %v252 = vld [vmem:[#allocation7 + $0x438] sm:$0xff]
    %v253 = vld [vmem:[#allocation7 + $0x440] sm:$0xff]
    %v254 = vld [vmem:[#allocation7 + $0x448] sm:$0xff]
    %v255 = vld [vmem:[#allocation7 + $0x450] sm:$0xff]
    %v256 = vld [vmem:[#allocation7 + $0x458] sm:$0xff]
    %v257 = vld [vmem:[#allocation7 + $0x460] sm:$0xff]
    %v258 = vld [vmem:[#allocation7 + $0x468] sm:$0xff]
    %v259 = vld [vmem:[#allocation7 + $0x470] sm:$0xff]
    %v260 = vld [vmem:[#allocation7 + $0x478] sm:$0xff]
    %v261 = vld [vmem:[#allocation7 + $0x480] sm:$0xff]
    %v262 = vld [vmem:[#allocation7 + $0x488] sm:$0xff]
    %v263 = vld [vmem:[#allocation7 + $0x490] sm:$0xff]
    %v264 = vld [vmem:[#allocation7 + $0x498] sm:$0xff]
    %v265 = vld [vmem:[#allocation7 + $0x4a0] sm:$0xff]
    %v266 = vld [vmem:[#allocation7 + $0x4a8] sm:$0xff]
    %v267 = vld [vmem:[#allocation7 + $0x4b0] sm:$0xff]
    %v268 = vld [vmem:[#allocation7 + $0x4b8] sm:$0xff]
    %v269 = vld [vmem:[#allocation7 + $0x4c0] sm:$0xff]
    %v270 = vld [vmem:[#allocation7 + $0x4c8] sm:$0xff]
    %v271 = vld [vmem:[#allocation7 + $0x4d0] sm:$0xff]
    %v272 = vld [vmem:[#allocation7 + $0x4d8] sm:$0xff]
    %v273 = vld [vmem:[#allocation7 + $0x4e0] sm:$0xff]
    %v274 = vld [vmem:[#allocation7 + $0x4e8] sm:$0xff]
    %v275 = vld [vmem:[#allocation7 + $0x4f0] sm:$0xff]
    %v276 = vld [vmem:[#allocation7 + $0x4f8] sm:$0xff]
    %v277 = vld [vmem:[#allocation7 + $0x500] sm:$0xff]
    %v278 = vld [vmem:[#allocation7 + $0x508] sm:$0xff]
    %v279 = vld [vmem:[#allocation7 + $0x510] sm:$0xff]
    %v280 = vld [vmem:[#allocation7 + $0x518] sm:$0xff]
    %v281 = vld [vmem:[#allocation7 + $0x520] sm:$0xff]
    %v282 = vld [vmem:[#allocation7 + $0x528] sm:$0xff]
    %v283 = vld [vmem:[#allocation7 + $0x530] sm:$0xff]
    %v284 = vld [vmem:[#allocation7 + $0x538] sm:$0xff]
    %v285 = vld [vmem:[#allocation7 + $0x540] sm:$0xff]
    %v286 = vld [vmem:[#allocation7 + $0x548] sm:$0xff]
    %v287 = vld [vmem:[#allocation7 + $0x550] sm:$0xff]
    %v288 = vld [vmem:[#allocation7 + $0x558] sm:$0xff]
    %v289 = vld [vmem:[#allocation7 + $0x560] sm:$0xff]
    %v290 = vld [vmem:[#allocation7 + $0x568] sm:$0xff]
    %v291 = vld [vmem:[#allocation7 + $0x570] sm:$0xff]
    %v292 = vld [vmem:[#allocation7 + $0x578] sm:$0xff]
    %v293 = vld [vmem:[#allocation7 + $0x580] sm:$0xff]
    %v294 = vld [vmem:[#allocation7 + $0x588] sm:$0xff]
    %v295 = vld [vmem:[#allocation7 + $0x590] sm:$0xff]
    %v296 = vld [vmem:[#allocation7 + $0x598] sm:$0xff]
    %v297 = vld [vmem:[#allocation7 + $0x5a0] sm:$0xff]
    %v298 = vld [vmem:[#allocation7 + $0x5a8] sm:$0xff]
    %v299 = vld [vmem:[#allocation7 + $0x5b0] sm:$0xff]
    %v300 = vld [vmem:[#allocation7 + $0x5b8] sm:$0xff]
    %v301 = vld [vmem:[#allocation7 + $0x5c0] sm:$0xff]
    %v302 = vld [vmem:[#allocation7 + $0x5c8] sm:$0xff]
    %v303 = vld [vmem:[#allocation7 + $0x5d0] sm:$0xff]
    %v304 = vld [vmem:[#allocation7 + $0x5d8] sm:$0xff]
    %v305 = vld [vmem:[#allocation7 + $0x5e0] sm:$0xff]
    %v306 = vld [vmem:[#allocation7 + $0x5e8] sm:$0xff]
    %v307 = vld [vmem:[#allocation7 + $0x5f0] sm:$0xff]
    %v308 = vld [vmem:[#allocation7 + $0x5f8] sm:$0xff]
    %v309 = vld [vmem:[#allocation7 + $0x600] sm:$0xff]
    %v310 = vld [vmem:[#allocation7 + $0x608] sm:$0xff]
    %v311 = vld [vmem:[#allocation7 + $0x610] sm:$0xff]
    %v312 = vld [vmem:[#allocation7 + $0x618] sm:$0xff]
    %v313 = vld [vmem:[#allocation7 + $0x620] sm:$0xff]
    %v314 = vld [vmem:[#allocation7 + $0x628] sm:$0xff]
    %v315 = vld [vmem:[#allocation7 + $0x630] sm:$0xff]
    %v316 = vld [vmem:[#allocation7 + $0x638] sm:$0xff]
    %v317 = vld [vmem:[#allocation7 + $0x640] sm:$0xff]
    %v318 = vld [vmem:[#allocation7 + $0x648] sm:$0xff]
    %v319 = vld [vmem:[#allocation7 + $0x650] sm:$0xff]
    %v320 = vld [vmem:[#allocation7 + $0x658] sm:$0xff]
    %v321 = vld [vmem:[#allocation7 + $0x660] sm:$0xff]
    %v322 = vld [vmem:[#allocation7 + $0x668] sm:$0xff]
    %v323 = vld [vmem:[#allocation7 + $0x670] sm:$0xff]
    %v324 = vld [vmem:[#allocation7 + $0x678] sm:$0xff]
    %v325 = vld [vmem:[#allocation7 + $0x680] sm:$0xff]
    %v326 = vld [vmem:[#allocation7 + $0x688] sm:$0xff]
    %v327 = vld [vmem:[#allocation7 + $0x690] sm:$0xff]
    %v328 = vld [vmem:[#allocation7 + $0x698] sm:$0xff]
    %v329 = vld [vmem:[#allocation7 + $0x6a0] sm:$0xff]
    %v330 = vld [vmem:[#allocation7 + $0x6a8] sm:$0xff]
    %v331 = vld [vmem:[#allocation7 + $0x6b0] sm:$0xff]
    %v332 = vld [vmem:[#allocation7 + $0x6b8] sm:$0xff]
    %v333 = vld [vmem:[#allocation7 + $0x6c0] sm:$0xff]
    %v334 = vld [vmem:[#allocation7 + $0x6c8] sm:$0xff]
    %v335 = vld [vmem:[#allocation7 + $0x6d0] sm:$0xff]
    %v336 = vld [vmem:[#allocation7 + $0x6d8] sm:$0xff]
    %v337 = vld [vmem:[#allocation7 + $0x6e0] sm:$0xff]
    %v338 = vld [vmem:[#allocation7 + $0x6e8] sm:$0xff]
    %v339 = vld [vmem:[#allocation7 + $0x6f0] sm:$0xff]
    %v340 = vld [vmem:[#allocation7 + $0x6f8] sm:$0xff]
    %v342 = vlaneseq
    %v343 = vshrl.u32 %v342, 7
    %v344 = vsub.s32 0, %v343
    %v345 = vrot.slane %v109, %v344
    %v346 = vlaneseq
    %v347 = vshrl.u32 %v346, 7
    %v348 = vsub.s32 1, %v347
    %v349 = vrot.slane %v109, %v348
    %v350 = vlaneseq
    %v351 = vshrl.u32 %v350, 7
    %v352 = vsub.s32 2, %v351
    %v353 = vrot.slane %v109, %v352
    %v354 = vlaneseq
    %v355 = vshrl.u32 %v354, 7
    %v356 = vsub.s32 3, %v355
    %v357 = vrot.slane %v109, %v356
    %v366 = vunpack.c.l.b16 %v113
    %v367 = vunpack.c.h.b16 %v113
    %v368 = vunpack.c.l.b16 %v114
    %v369 = vunpack.c.h.b16 %v114
    %v370 = vunpack.c.l.b16 %v115
    %v371 = vunpack.c.h.b16 %v115
    %v372 = vunpack.c.l.b16 %v116
    %v373 = vpack.c.b16 %v366, %v366
    %v374 = vpack.c.b16 %v367, %v367
    %v375 = vpack.c.b16 %v368, %v368
    %v376 = vpack.c.b16 %v369, %v369
    %v377 = vpack.c.b16 %v370, %v370
    %v378 = vpack.c.b16 %v371, %v371
    %v379 = vpack.c.b16 %v372, %v372
    %v611 = vunpack.c.l.b16 %v117
    %v612 = vunpack.c.h.b16 %v117
    %v613 = vunpack.c.l.b16 %v118
    %v614 = vunpack.c.h.b16 %v118
    %v615 = vunpack.c.l.b16 %v119
    %v616 = vunpack.c.h.b16 %v119
    %v617 = vunpack.c.l.b16 %v120
    %v618 = vunpack.c.h.b16 %v120
    %v619 = vunpack.c.l.b16 %v121
    %v620 = vunpack.c.h.b16 %v121
    %v621 = vunpack.c.l.b16 %v122
    %v622 = vunpack.c.h.b16 %v122
    %v623 = vunpack.c.l.b16 %v123
    %v624 = vunpack.c.h.b16 %v123
    %v625 = vunpack.c.l.b16 %v124
    %v626 = vunpack.c.h.b16 %v124
    %v627 = vunpack.c.l.b16 %v125
    %v628 = vunpack.c.h.b16 %v125
    %v629 = vunpack.c.l.b16 %v126
    %v630 = vunpack.c.h.b16 %v126
    %v631 = vunpack.c.l.b16 %v127
    %v632 = vunpack.c.h.b16 %v127
    %v633 = vunpack.c.l.b16 %v128
    %v634 = vunpack.c.h.b16 %v128
    %v635 = vunpack.c.l.b16 %v129
    %v636 = vunpack.c.h.b16 %v129
    %v637 = vunpack.c.l.b16 %v130
    %v638 = vunpack.c.h.b16 %v130
    %v639 = vunpack.c.l.b16 %v131
    %v640 = vunpack.c.h.b16 %v131
    %v641 = vunpack.c.l.b16 %v132
    %v642 = vunpack.c.h.b16 %v132
    %v643 = vunpack.c.l.b16 %v133
    %v644 = vunpack.c.h.b16 %v133
    %v645 = vunpack.c.l.b16 %v134
    %v646 = vunpack.c.h.b16 %v134
    %v647 = vunpack.c.l.b16 %v135
    %v648 = vunpack.c.h.b16 %v135
    %v649 = vunpack.c.l.b16 %v136
    %v650 = vunpack.c.h.b16 %v136
    %v651 = vunpack.c.l.b16 %v137
    %v652 = vunpack.c.h.b16 %v137
    %v653 = vunpack.c.l.b16 %v138
    %v654 = vunpack.c.h.b16 %v138
    %v655 = vunpack.c.l.b16 %v139
    %v656 = vunpack.c.h.b16 %v139
    %v657 = vunpack.c.l.b16 %v140
    %v658 = vunpack.c.h.b16 %v140
    %v659 = vunpack.c.l.b16 %v141
    %v660 = vunpack.c.h.b16 %v141
    %v661 = vunpack.c.l.b16 %v142
    %v662 = vunpack.c.h.b16 %v142
    %v663 = vunpack.c.l.b16 %v143
    %v664 = vunpack.c.h.b16 %v143
    %v665 = vunpack.c.l.b16 %v144
    %v666 = vunpack.c.h.b16 %v144
    %v667 = vunpack.c.l.b16 %v145
    %v668 = vunpack.c.h.b16 %v145
    %v669 = vunpack.c.l.b16 %v146
    %v670 = vunpack.c.h.b16 %v146
    %v671 = vunpack.c.l.b16 %v147
    %v672 = vunpack.c.h.b16 %v147
    %v673 = vunpack.c.l.b16 %v148
    %v674 = vunpack.c.h.b16 %v148
    %v675 = vunpack.c.l.b16 %v149
    %v676 = vunpack.c.h.b16 %v149
    %v677 = vunpack.c.l.b16 %v150
    %v678 = vunpack.c.h.b16 %v150
    %v679 = vunpack.c.l.b16 %v151
    %v680 = vunpack.c.h.b16 %v151
    %v681 = vunpack.c.l.b16 %v152
    %v682 = vunpack.c.h.b16 %v152
    %v683 = vunpack.c.l.b16 %v153
    %v684 = vunpack.c.h.b16 %v153
    %v685 = vunpack.c.l.b16 %v154
    %v686 = vunpack.c.h.b16 %v154
    %v687 = vunpack.c.l.b16 %v155
    %v688 = vunpack.c.h.b16 %v155
    %v689 = vunpack.c.l.b16 %v156
    %v690 = vunpack.c.h.b16 %v156
    %v691 = vunpack.c.l.b16 %v157
    %v692 = vunpack.c.h.b16 %v157
    %v693 = vunpack.c.l.b16 %v158
    %v694 = vunpack.c.h.b16 %v158
    %v695 = vunpack.c.l.b16 %v159
    %v696 = vunpack.c.h.b16 %v159
    %v697 = vunpack.c.l.b16 %v160
    %v698 = vunpack.c.h.b16 %v160
    %v699 = vunpack.c.l.b16 %v161
    %v700 = vunpack.c.h.b16 %v161
    %v701 = vunpack.c.l.b16 %v162
    %v702 = vunpack.c.h.b16 %v162
    %v703 = vunpack.c.l.b16 %v163
    %v704 = vunpack.c.h.b16 %v163
    %v705 = vunpack.c.l.b16 %v164
    %v706 = vunpack.c.h.b16 %v164
    %v707 = vunpack.c.l.b16 %v165
    %v708 = vunpack.c.h.b16 %v165
    %v709 = vunpack.c.l.b16 %v166
    %v710 = vunpack.c.h.b16 %v166
    %v711 = vunpack.c.l.b16 %v167
    %v712 = vunpack.c.h.b16 %v167
    %v713 = vunpack.c.l.b16 %v168
    %v714 = vunpack.c.h.b16 %v168
    %v715 = vunpack.c.l.b16 %v169
    %v716 = vunpack.c.h.b16 %v169
    %v717 = vunpack.c.l.b16 %v170
    %v718 = vunpack.c.h.b16 %v170
    %v719 = vunpack.c.l.b16 %v171
    %v720 = vunpack.c.h.b16 %v171
    %v721 = vunpack.c.l.b16 %v172
    %v722 = vunpack.c.h.b16 %v172
    %v723 = vunpack.c.l.b16 %v173
    %v724 = vunpack.c.h.b16 %v173
    %v725 = vunpack.c.l.b16 %v174
    %v726 = vunpack.c.h.b16 %v174
    %v727 = vunpack.c.l.b16 %v175
    %v728 = vunpack.c.h.b16 %v175
    %v729 = vunpack.c.l.b16 %v176
    %v730 = vunpack.c.h.b16 %v176
    %v731 = vunpack.c.l.b16 %v177
    %v732 = vunpack.c.h.b16 %v177
    %v733 = vunpack.c.l.b16 %v178
    %v734 = vunpack.c.h.b16 %v178
    %v735 = vunpack.c.l.b16 %v179
    %v736 = vunpack.c.h.b16 %v179
    %v737 = vunpack.c.l.b16 %v180
    %v738 = vunpack.c.h.b16 %v180
    %v739 = vunpack.c.l.b16 %v181
    %v740 = vunpack.c.h.b16 %v181
    %v741 = vunpack.c.l.b16 %v182
    %v742 = vunpack.c.h.b16 %v182
    %v743 = vunpack.c.l.b16 %v183
    %v744 = vunpack.c.h.b16 %v183
    %v745 = vunpack.c.l.b16 %v184
    %v746 = vunpack.c.h.b16 %v184
    %v747 = vunpack.c.l.b16 %v185
    %v748 = vunpack.c.h.b16 %v185
    %v749 = vunpack.c.l.b16 %v186
    %v750 = vunpack.c.h.b16 %v186
    %v751 = vunpack.c.l.b16 %v187
    %v752 = vunpack.c.h.b16 %v187
    %v753 = vunpack.c.l.b16 %v188
    %v754 = vunpack.c.h.b16 %v188
    %v755 = vunpack.c.l.b16 %v189
    %v756 = vunpack.c.h.b16 %v189
    %v757 = vunpack.c.l.b16 %v190
    %v758 = vunpack.c.h.b16 %v190
    %v759 = vunpack.c.l.b16 %v191
    %v760 = vunpack.c.h.b16 %v191
    %v761 = vunpack.c.l.b16 %v192
    %v762 = vunpack.c.h.b16 %v192
    %v763 = vunpack.c.l.b16 %v193
    %v764 = vunpack.c.h.b16 %v193
    %v765 = vunpack.c.l.b16 %v194
    %v766 = vunpack.c.h.b16 %v194
    %v767 = vunpack.c.l.b16 %v195
    %v768 = vunpack.c.h.b16 %v195
    %v769 = vunpack.c.l.b16 %v196
    %v770 = vunpack.c.h.b16 %v196
    %v771 = vunpack.c.l.b16 %v197
    %v772 = vunpack.c.h.b16 %v197
    %v773 = vunpack.c.l.b16 %v198
    %v774 = vunpack.c.h.b16 %v198
    %v775 = vunpack.c.l.b16 %v199
    %v776 = vunpack.c.h.b16 %v199
    %v777 = vunpack.c.l.b16 %v200
    %v778 = vunpack.c.h.b16 %v200
    %v779 = vunpack.c.l.b16 %v201
    %v780 = vunpack.c.h.b16 %v201
    %v781 = vunpack.c.l.b16 %v202
    %v782 = vunpack.c.h.b16 %v202
    %v783 = vunpack.c.l.b16 %v203
    %v784 = vunpack.c.h.b16 %v203
    %v785 = vunpack.c.l.b16 %v204
    %v786 = vunpack.c.h.b16 %v204
    %v787 = vunpack.c.l.b16 %v205
    %v788 = vunpack.c.h.b16 %v205
    %v789 = vunpack.c.l.b16 %v206
    %v790 = vunpack.c.h.b16 %v206
    %v791 = vunpack.c.l.b16 %v207
    %v792 = vunpack.c.h.b16 %v207
    %v793 = vunpack.c.l.b16 %v208
    %v794 = vunpack.c.h.b16 %v208
    %v795 = vunpack.c.l.b16 %v209
    %v796 = vunpack.c.h.b16 %v209
    %v797 = vunpack.c.l.b16 %v210
    %v798 = vunpack.c.h.b16 %v210
    %v799 = vunpack.c.l.b16 %v211
    %v800 = vunpack.c.h.b16 %v211
    %v801 = vunpack.c.l.b16 %v212
    %v802 = vunpack.c.h.b16 %v212
    %v803 = vunpack.c.l.b16 %v213
    %v804 = vunpack.c.h.b16 %v213
    %v805 = vunpack.c.l.b16 %v214
    %v806 = vunpack.c.h.b16 %v214
    %v807 = vunpack.c.l.b16 %v215
    %v808 = vunpack.c.h.b16 %v215
    %v809 = vunpack.c.l.b16 %v216
    %v810 = vunpack.c.h.b16 %v216
    %v811 = vunpack.c.l.b16 %v217
    %v812 = vunpack.c.h.b16 %v217
    %v813 = vunpack.c.l.b16 %v218
    %v814 = vunpack.c.h.b16 %v218
    %v815 = vunpack.c.l.b16 %v219
    %v816 = vunpack.c.h.b16 %v219
    %v817 = vunpack.c.l.b16 %v220
    %v818 = vunpack.c.h.b16 %v220
    %v819 = vunpack.c.l.b16 %v221
    %v820 = vunpack.c.h.b16 %v221
    %v821 = vunpack.c.l.b16 %v222
    %v822 = vunpack.c.h.b16 %v222
    %v823 = vunpack.c.l.b16 %v223
    %v824 = vunpack.c.h.b16 %v223
    %v825 = vunpack.c.l.b16 %v224
    %v826 = vunpack.c.h.b16 %v224
    %v827 = vunpack.c.l.b16 %v225
    %v828 = vunpack.c.h.b16 %v225
    %v829 = vunpack.c.l.b16 %v226
    %v830 = vunpack.c.h.b16 %v226
    %v831 = vunpack.c.l.b16 %v227
    %v832 = vunpack.c.h.b16 %v227
    %v833 = vunpack.c.l.b16 %v228
    %v834 = vunpack.c.h.b16 %v228
    %v835 = vunpack.c.l.b16 %v229
    %v836 = vunpack.c.h.b16 %v229
    %v837 = vunpack.c.l.b16 %v230
    %v838 = vunpack.c.h.b16 %v230
    %v839 = vunpack.c.l.b16 %v231
    %v840 = vunpack.c.h.b16 %v231
    %v841 = vunpack.c.l.b16 %v232
    %v842 = vunpack.c.h.b16 %v232
    %v843 = vunpack.c.l.b16 %v233
    %v844 = vunpack.c.h.b16 %v233
    %v845 = vunpack.c.l.b16 %v234
    %v846 = vunpack.c.h.b16 %v234
    %v847 = vunpack.c.l.b16 %v235
    %v848 = vunpack.c.h.b16 %v235
    %v849 = vunpack.c.l.b16 %v236
    %v850 = vunpack.c.h.b16 %v236
    %v851 = vunpack.c.l.b16 %v237
    %v852 = vunpack.c.h.b16 %v237
    %v853 = vunpack.c.l.b16 %v238
    %v854 = vunpack.c.h.b16 %v238
    %v855 = vunpack.c.l.b16 %v239
    %v856 = vunpack.c.h.b16 %v239
    %v857 = vunpack.c.l.b16 %v240
    %v858 = vunpack.c.h.b16 %v240
    %v859 = vunpack.c.l.b16 %v241
    %v860 = vunpack.c.h.b16 %v241
    %v861 = vunpack.c.l.b16 %v242
    %v862 = vunpack.c.h.b16 %v242
    %v863 = vunpack.c.l.b16 %v243
    %v864 = vunpack.c.h.b16 %v243
    %v865 = vunpack.c.l.b16 %v244
    %v866 = vunpack.c.h.b16 %v244
    %v867 = vunpack.c.l.b16 %v245
    %v868 = vunpack.c.h.b16 %v245
    %v869 = vunpack.c.l.b16 %v246
    %v870 = vunpack.c.h.b16 %v246
    %v871 = vunpack.c.l.b16 %v247
    %v872 = vunpack.c.h.b16 %v247
    %v873 = vunpack.c.l.b16 %v248
    %v874 = vunpack.c.h.b16 %v248
    %v875 = vunpack.c.l.b16 %v249
    %v876 = vunpack.c.h.b16 %v249
    %v877 = vunpack.c.l.b16 %v250
    %v878 = vunpack.c.h.b16 %v250
    %v879 = vunpack.c.l.b16 %v251
    %v880 = vunpack.c.h.b16 %v251
    %v881 = vunpack.c.l.b16 %v252
    %v882 = vunpack.c.h.b16 %v252
    %v883 = vunpack.c.l.b16 %v253
    %v884 = vunpack.c.h.b16 %v253
    %v885 = vunpack.c.l.b16 %v254
    %v886 = vunpack.c.h.b16 %v254
    %v887 = vunpack.c.l.b16 %v255
    %v888 = vunpack.c.h.b16 %v255
    %v889 = vunpack.c.l.b16 %v256
    %v890 = vunpack.c.h.b16 %v256
    %v891 = vunpack.c.l.b16 %v257
    %v892 = vunpack.c.h.b16 %v257
    %v893 = vunpack.c.l.b16 %v258
    %v894 = vunpack.c.h.b16 %v258
    %v895 = vunpack.c.l.b16 %v259
    %v896 = vunpack.c.h.b16 %v259
    %v897 = vunpack.c.l.b16 %v260
    %v898 = vunpack.c.h.b16 %v260
    %v899 = vunpack.c.l.b16 %v261
    %v900 = vunpack.c.h.b16 %v261
    %v901 = vunpack.c.l.b16 %v262
    %v902 = vunpack.c.h.b16 %v262
    %v903 = vunpack.c.l.b16 %v263
    %v904 = vunpack.c.h.b16 %v263
    %v905 = vunpack.c.l.b16 %v264
    %v906 = vunpack.c.h.b16 %v264
    %v907 = vunpack.c.l.b16 %v265
    %v908 = vunpack.c.h.b16 %v265
    %v909 = vunpack.c.l.b16 %v266
    %v910 = vunpack.c.h.b16 %v266
    %v911 = vunpack.c.l.b16 %v267
    %v912 = vunpack.c.h.b16 %v267
    %v913 = vunpack.c.l.b16 %v268
    %v914 = vunpack.c.h.b16 %v268
    %v915 = vunpack.c.l.b16 %v269
    %v916 = vunpack.c.h.b16 %v269
    %v917 = vunpack.c.l.b16 %v270
    %v918 = vunpack.c.h.b16 %v270
    %v919 = vunpack.c.l.b16 %v271
    %v920 = vunpack.c.h.b16 %v271
    %v921 = vunpack.c.l.b16 %v272
    %v922 = vunpack.c.h.b16 %v272
    %v923 = vunpack.c.l.b16 %v273
    %v924 = vunpack.c.h.b16 %v273
    %v925 = vunpack.c.l.b16 %v274
    %v926 = vunpack.c.h.b16 %v274
    %v927 = vunpack.c.l.b16 %v275
    %v928 = vunpack.c.h.b16 %v275
    %v929 = vunpack.c.l.b16 %v276
    %v930 = vunpack.c.h.b16 %v276
    %v931 = vunpack.c.l.b16 %v277
    %v932 = vunpack.c.h.b16 %v277
    %v933 = vunpack.c.l.b16 %v278
    %v934 = vunpack.c.h.b16 %v278
    %v935 = vunpack.c.l.b16 %v279
    %v936 = vunpack.c.h.b16 %v279
    %v937 = vunpack.c.l.b16 %v280
    %v938 = vunpack.c.h.b16 %v280
    %v939 = vunpack.c.l.b16 %v281
    %v940 = vunpack.c.h.b16 %v281
    %v941 = vunpack.c.l.b16 %v282
    %v942 = vunpack.c.h.b16 %v282
    %v943 = vunpack.c.l.b16 %v283
    %v944 = vunpack.c.h.b16 %v283
    %v945 = vunpack.c.l.b16 %v284
    %v946 = vunpack.c.h.b16 %v284
    %v947 = vunpack.c.l.b16 %v285
    %v948 = vunpack.c.h.b16 %v285
    %v949 = vunpack.c.l.b16 %v286
    %v950 = vunpack.c.h.b16 %v286
    %v951 = vunpack.c.l.b16 %v287
    %v952 = vunpack.c.h.b16 %v287
    %v953 = vunpack.c.l.b16 %v288
    %v954 = vunpack.c.h.b16 %v288
    %v955 = vunpack.c.l.b16 %v289
    %v956 = vunpack.c.h.b16 %v289
    %v957 = vunpack.c.l.b16 %v290
    %v958 = vunpack.c.h.b16 %v290
    %v959 = vunpack.c.l.b16 %v291
    %v960 = vunpack.c.h.b16 %v291
    %v961 = vunpack.c.l.b16 %v292
    %v962 = vunpack.c.h.b16 %v292
    %v963 = vunpack.c.l.b16 %v293
    %v964 = vunpack.c.h.b16 %v293
    %v965 = vunpack.c.l.b16 %v294
    %v966 = vunpack.c.h.b16 %v294
    %v967 = vunpack.c.l.b16 %v295
    %v968 = vunpack.c.h.b16 %v295
    %v969 = vunpack.c.l.b16 %v296
    %v970 = vunpack.c.h.b16 %v296
    %v971 = vunpack.c.l.b16 %v297
    %v972 = vunpack.c.h.b16 %v297
    %v973 = vunpack.c.l.b16 %v298
    %v974 = vunpack.c.h.b16 %v298
    %v975 = vunpack.c.l.b16 %v299
    %v976 = vunpack.c.h.b16 %v299
    %v977 = vunpack.c.l.b16 %v300
    %v978 = vunpack.c.h.b16 %v300
    %v979 = vunpack.c.l.b16 %v301
    %v980 = vunpack.c.h.b16 %v301
    %v981 = vunpack.c.l.b16 %v302
    %v982 = vunpack.c.h.b16 %v302
    %v983 = vunpack.c.l.b16 %v303
    %v984 = vunpack.c.h.b16 %v303
    %v985 = vunpack.c.l.b16 %v304
    %v986 = vunpack.c.h.b16 %v304
    %v987 = vunpack.c.l.b16 %v305
    %v988 = vunpack.c.h.b16 %v305
    %v989 = vunpack.c.l.b16 %v306
    %v990 = vunpack.c.h.b16 %v306
    %v991 = vunpack.c.l.b16 %v307
    %v992 = vunpack.c.h.b16 %v307
    %v993 = vunpack.c.l.b16 %v308
    %v994 = vunpack.c.h.b16 %v308
    %v995 = vunpack.c.l.b16 %v309
    %v996 = vunpack.c.h.b16 %v309
    %v997 = vunpack.c.l.b16 %v310
    %v998 = vunpack.c.h.b16 %v310
    %v999 = vunpack.c.l.b16 %v311
    %v1000 = vunpack.c.h.b16 %v311
    %v1001 = vunpack.c.l.b16 %v312
    %v1002 = vunpack.c.h.b16 %v312
    %v1003 = vunpack.c.l.b16 %v313
    %v1004 = vunpack.c.h.b16 %v313
    %v1005 = vunpack.c.l.b16 %v314
    %v1006 = vunpack.c.h.b16 %v314
    %v1007 = vunpack.c.l.b16 %v315
    %v1008 = vunpack.c.h.b16 %v315
    %v1009 = vunpack.c.l.b16 %v316
    %v1010 = vunpack.c.h.b16 %v316
    %v1011 = vunpack.c.l.b16 %v317
    %v1012 = vunpack.c.h.b16 %v317
    %v1013 = vunpack.c.l.b16 %v318
    %v1014 = vunpack.c.h.b16 %v318
    %v1015 = vunpack.c.l.b16 %v319
    %v1016 = vunpack.c.h.b16 %v319
    %v1017 = vunpack.c.l.b16 %v320
    %v1018 = vunpack.c.h.b16 %v320
    %v1019 = vunpack.c.l.b16 %v321
    %v1020 = vunpack.c.h.b16 %v321
    %v1021 = vunpack.c.l.b16 %v322
    %v1022 = vunpack.c.h.b16 %v322
    %v1023 = vunpack.c.l.b16 %v323
    %v1024 = vunpack.c.h.b16 %v323
    %v1025 = vunpack.c.l.b16 %v324
    %v1026 = vunpack.c.h.b16 %v324
    %v1027 = vunpack.c.l.b16 %v325
    %v1028 = vunpack.c.h.b16 %v325
    %v1029 = vunpack.c.l.b16 %v326
    %v1030 = vunpack.c.h.b16 %v326
    %v1031 = vunpack.c.l.b16 %v327
    %v1032 = vunpack.c.h.b16 %v327
    %v1033 = vunpack.c.l.b16 %v328
    %v1034 = vunpack.c.h.b16 %v328
    %v1035 = vunpack.c.l.b16 %v329
    %v1036 = vunpack.c.h.b16 %v329
    %v1037 = vunpack.c.l.b16 %v330
    %v1038 = vunpack.c.h.b16 %v330
    %v1039 = vunpack.c.l.b16 %v331
    %v1040 = vunpack.c.h.b16 %v331
    %v1041 = vunpack.c.l.b16 %v332
    %v1042 = vunpack.c.h.b16 %v332
    %v1043 = vunpack.c.l.b16 %v333
    %v1044 = vunpack.c.h.b16 %v333
    %v1045 = vunpack.c.l.b16 %v334
    %v1046 = vunpack.c.h.b16 %v334
    %v1047 = vunpack.c.l.b16 %v335
    %v1048 = vunpack.c.h.b16 %v335
    %v1049 = vunpack.c.l.b16 %v336
    %v1050 = vunpack.c.h.b16 %v336
    %v1051 = vunpack.c.l.b16 %v337
    %v1052 = vunpack.c.h.b16 %v337
    %v1053 = vunpack.c.l.b16 %v338
    %v1054 = vunpack.c.h.b16 %v338
    %v1055 = vunpack.c.l.b16 %v339
    %v1056 = vunpack.c.h.b16 %v339
    %v1057 = vunpack.c.l.b16 %v340
    %v1058 = vunpack.c.h.b16 %v340
    %v1059 = vpack.c.b16 %v615, %v611
    %v1060 = vpack.c.b16 %v616, %v612
    %v1061 = vpack.c.b16 %v617, %v613
    %v1062 = vpack.c.b16 %v618, %v614
    %v1063 = vpack.c.b16 %v623, %v619
    %v1064 = vpack.c.b16 %v624, %v620
    %v1065 = vpack.c.b16 %v625, %v621
    %v1066 = vpack.c.b16 %v626, %v622
    %v1067 = vpack.c.b16 %v631, %v627
    %v1068 = vpack.c.b16 %v632, %v628
    %v1069 = vpack.c.b16 %v633, %v629
    %v1070 = vpack.c.b16 %v634, %v630
    %v1071 = vpack.c.b16 %v639, %v635
    %v1072 = vpack.c.b16 %v640, %v636
    %v1073 = vpack.c.b16 %v641, %v637
    %v1074 = vpack.c.b16 %v642, %v638
    %v1075 = vpack.c.b16 %v647, %v643
    %v1076 = vpack.c.b16 %v648, %v644
    %v1077 = vpack.c.b16 %v649, %v645
    %v1078 = vpack.c.b16 %v650, %v646
    %v1079 = vpack.c.b16 %v655, %v651
    %v1080 = vpack.c.b16 %v656, %v652
    %v1081 = vpack.c.b16 %v657, %v653
    %v1082 = vpack.c.b16 %v658, %v654
    %v1083 = vpack.c.b16 %v663, %v659
    %v1084 = vpack.c.b16 %v664, %v660
    %v1085 = vpack.c.b16 %v665, %v661
    %v1086 = vpack.c.b16 %v666, %v662
    %v1087 = vpack.c.b16 %v671, %v667
    %v1088 = vpack.c.b16 %v672, %v668
    %v1089 = vpack.c.b16 %v673, %v669
    %v1090 = vpack.c.b16 %v674, %v670
    %v1091 = vpack.c.b16 %v679, %v675
    %v1092 = vpack.c.b16 %v680, %v676
    %v1093 = vpack.c.b16 %v681, %v677
    %v1094 = vpack.c.b16 %v682, %v678
    %v1095 = vpack.c.b16 %v687, %v683
    %v1096 = vpack.c.b16 %v688, %v684
    %v1097 = vpack.c.b16 %v689, %v685
    %v1098 = vpack.c.b16 %v690, %v686
    %v1099 = vpack.c.b16 %v695, %v691
    %v1100 = vpack.c.b16 %v696, %v692
    %v1101 = vpack.c.b16 %v697, %v693
    %v1102 = vpack.c.b16 %v698, %v694
    %v1103 = vpack.c.b16 %v703, %v699
    %v1104 = vpack.c.b16 %v704, %v700
    %v1105 = vpack.c.b16 %v705, %v701
    %v1106 = vpack.c.b16 %v706, %v702
    %v1107 = vpack.c.b16 %v711, %v707
    %v1108 = vpack.c.b16 %v712, %v708
    %v1109 = vpack.c.b16 %v713, %v709
    %v1110 = vpack.c.b16 %v714, %v710
    %v1111 = vpack.c.b16 %v719, %v715
    %v1112 = vpack.c.b16 %v720, %v716
    %v1113 = vpack.c.b16 %v721, %v717
    %v1114 = vpack.c.b16 %v722, %v718
    %v1115 = vpack.c.b16 %v727, %v723
    %v1116 = vpack.c.b16 %v728, %v724
    %v1117 = vpack.c.b16 %v729, %v725
    %v1118 = vpack.c.b16 %v730, %v726
    %v1119 = vpack.c.b16 %v735, %v731
    %v1120 = vpack.c.b16 %v736, %v732
    %v1121 = vpack.c.b16 %v737, %v733
    %v1122 = vpack.c.b16 %v738, %v734
    %v1123 = vpack.c.b16 %v743, %v739
    %v1124 = vpack.c.b16 %v744, %v740
    %v1125 = vpack.c.b16 %v745, %v741
    %v1126 = vpack.c.b16 %v746, %v742
    %v1127 = vpack.c.b16 %v751, %v747
    %v1128 = vpack.c.b16 %v752, %v748
    %v1129 = vpack.c.b16 %v753, %v749
    %v1130 = vpack.c.b16 %v754, %v750
    %v1131 = vpack.c.b16 %v759, %v755
    %v1132 = vpack.c.b16 %v760, %v756
    %v1133 = vpack.c.b16 %v761, %v757
    %v1134 = vpack.c.b16 %v762, %v758
    %v1135 = vpack.c.b16 %v767, %v763
    %v1136 = vpack.c.b16 %v768, %v764
    %v1137 = vpack.c.b16 %v769, %v765
    %v1138 = vpack.c.b16 %v770, %v766
    %v1139 = vpack.c.b16 %v775, %v771
    %v1140 = vpack.c.b16 %v776, %v772
    %v1141 = vpack.c.b16 %v777, %v773
    %v1142 = vpack.c.b16 %v778, %v774
    %v1143 = vpack.c.b16 %v783, %v779
    %v1144 = vpack.c.b16 %v784, %v780
    %v1145 = vpack.c.b16 %v785, %v781
    %v1146 = vpack.c.b16 %v786, %v782
    %v1147 = vpack.c.b16 %v791, %v787
    %v1148 = vpack.c.b16 %v792, %v788
    %v1149 = vpack.c.b16 %v793, %v789
    %v1150 = vpack.c.b16 %v794, %v790
    %v1151 = vpack.c.b16 %v799, %v795
    %v1152 = vpack.c.b16 %v800, %v796
    %v1153 = vpack.c.b16 %v801, %v797
    %v1154 = vpack.c.b16 %v802, %v798
    %v1155 = vpack.c.b16 %v807, %v803
    %v1156 = vpack.c.b16 %v808, %v804
    %v1157 = vpack.c.b16 %v809, %v805
    %v1158 = vpack.c.b16 %v810, %v806
    %v1159 = vpack.c.b16 %v815, %v811
    %v1160 = vpack.c.b16 %v816, %v812
    %v1161 = vpack.c.b16 %v817, %v813
    %v1162 = vpack.c.b16 %v818, %v814
    %v1163 = vpack.c.b16 %v823, %v819
    %v1164 = vpack.c.b16 %v824, %v820
    %v1165 = vpack.c.b16 %v825, %v821
    %v1166 = vpack.c.b16 %v826, %v822
    %v1167 = vpack.c.b16 %v831, %v827
    %v1168 = vpack.c.b16 %v832, %v828
    %v1169 = vpack.c.b16 %v833, %v829
    %v1170 = vpack.c.b16 %v834, %v830
    %v1171 = vpack.c.b16 %v839, %v835
    %v1172 = vpack.c.b16 %v840, %v836
    %v1173 = vpack.c.b16 %v841, %v837
    %v1174 = vpack.c.b16 %v842, %v838
    %v1175 = vpack.c.b16 %v847, %v843
    %v1176 = vpack.c.b16 %v848, %v844
    %v1177 = vpack.c.b16 %v849, %v845
    %v1178 = vpack.c.b16 %v850, %v846
    %v1179 = vpack.c.b16 %v855, %v851
    %v1180 = vpack.c.b16 %v856, %v852
    %v1181 = vpack.c.b16 %v857, %v853
    %v1182 = vpack.c.b16 %v858, %v854
    %v1183 = vpack.c.b16 %v863, %v859
    %v1184 = vpack.c.b16 %v864, %v860
    %v1185 = vpack.c.b16 %v865, %v861
    %v1186 = vpack.c.b16 %v866, %v862
    %v1187 = vpack.c.b16 %v871, %v867
    %v1188 = vpack.c.b16 %v872, %v868
    %v1189 = vpack.c.b16 %v873, %v869
    %v1190 = vpack.c.b16 %v874, %v870
    %v1191 = vpack.c.b16 %v879, %v875
    %v1192 = vpack.c.b16 %v880, %v876
    %v1193 = vpack.c.b16 %v881, %v877
    %v1194 = vpack.c.b16 %v882, %v878
    %v1195 = vpack.c.b16 %v887, %v883
    %v1196 = vpack.c.b16 %v888, %v884
    %v1197 = vpack.c.b16 %v889, %v885
    %v1198 = vpack.c.b16 %v890, %v886
    %v1199 = vpack.c.b16 %v895, %v891
    %v1200 = vpack.c.b16 %v896, %v892
    %v1201 = vpack.c.b16 %v897, %v893
    %v1202 = vpack.c.b16 %v898, %v894
    %v1203 = vpack.c.b16 %v903, %v899
    %v1204 = vpack.c.b16 %v904, %v900
    %v1205 = vpack.c.b16 %v905, %v901
    %v1206 = vpack.c.b16 %v906, %v902
    %v1207 = vpack.c.b16 %v911, %v907
    %v1208 = vpack.c.b16 %v912, %v908
    %v1209 = vpack.c.b16 %v913, %v909
    %v1210 = vpack.c.b16 %v914, %v910
    %v1211 = vpack.c.b16 %v919, %v915
    %v1212 = vpack.c.b16 %v920, %v916
    %v1213 = vpack.c.b16 %v921, %v917
    %v1214 = vpack.c.b16 %v922, %v918
    %v1215 = vpack.c.b16 %v927, %v923
    %v1216 = vpack.c.b16 %v928, %v924
    %v1217 = vpack.c.b16 %v929, %v925
    %v1218 = vpack.c.b16 %v930, %v926
    %v1219 = vpack.c.b16 %v935, %v931
    %v1220 = vpack.c.b16 %v936, %v932
    %v1221 = vpack.c.b16 %v937, %v933
    %v1222 = vpack.c.b16 %v938, %v934
    %v1223 = vpack.c.b16 %v943, %v939
    %v1224 = vpack.c.b16 %v944, %v940
    %v1225 = vpack.c.b16 %v945, %v941
    %v1226 = vpack.c.b16 %v946, %v942
    %v1227 = vpack.c.b16 %v951, %v947
    %v1228 = vpack.c.b16 %v952, %v948
    %v1229 = vpack.c.b16 %v953, %v949
    %v1230 = vpack.c.b16 %v954, %v950
    %v1231 = vpack.c.b16 %v959, %v955
    %v1232 = vpack.c.b16 %v960, %v956
    %v1233 = vpack.c.b16 %v961, %v957
    %v1234 = vpack.c.b16 %v962, %v958
    %v1235 = vpack.c.b16 %v967, %v963
    %v1236 = vpack.c.b16 %v968, %v964
    %v1237 = vpack.c.b16 %v969, %v965
    %v1238 = vpack.c.b16 %v970, %v966
    %v1239 = vpack.c.b16 %v975, %v971
    %v1240 = vpack.c.b16 %v976, %v972
    %v1241 = vpack.c.b16 %v977, %v973
    %v1242 = vpack.c.b16 %v978, %v974
    %v1243 = vpack.c.b16 %v983, %v979
    %v1244 = vpack.c.b16 %v984, %v980
    %v1245 = vpack.c.b16 %v985, %v981
    %v1246 = vpack.c.b16 %v986, %v982
    %v1247 = vpack.c.b16 %v991, %v987
    %v1248 = vpack.c.b16 %v992, %v988
    %v1249 = vpack.c.b16 %v993, %v989
    %v1250 = vpack.c.b16 %v994, %v990
    %v1251 = vpack.c.b16 %v999, %v995
    %v1252 = vpack.c.b16 %v1000, %v996
    %v1253 = vpack.c.b16 %v1001, %v997
    %v1254 = vpack.c.b16 %v1002, %v998
    %v1255 = vpack.c.b16 %v1007, %v1003
    %v1256 = vpack.c.b16 %v1008, %v1004
    %v1257 = vpack.c.b16 %v1009, %v1005
    %v1258 = vpack.c.b16 %v1010, %v1006
    %v1259 = vpack.c.b16 %v1015, %v1011
    %v1260 = vpack.c.b16 %v1016, %v1012
    %v1261 = vpack.c.b16 %v1017, %v1013
    %v1262 = vpack.c.b16 %v1018, %v1014
    %v1263 = vpack.c.b16 %v1023, %v1019
    %v1264 = vpack.c.b16 %v1024, %v1020
    %v1265 = vpack.c.b16 %v1025, %v1021
    %v1266 = vpack.c.b16 %v1026, %v1022
    %v1267 = vpack.c.b16 %v1031, %v1027
    %v1268 = vpack.c.b16 %v1032, %v1028
    %v1269 = vpack.c.b16 %v1033, %v1029
    %v1270 = vpack.c.b16 %v1034, %v1030
    %v1271 = vpack.c.b16 %v1039, %v1035
    %v1272 = vpack.c.b16 %v1040, %v1036
    %v1273 = vpack.c.b16 %v1041, %v1037
    %v1274 = vpack.c.b16 %v1042, %v1038
    %v1275 = vpack.c.b16 %v1047, %v1043
    %v1276 = vpack.c.b16 %v1048, %v1044
    %v1277 = vpack.c.b16 %v1049, %v1045
    %v1278 = vpack.c.b16 %v1050, %v1046
    %v1279 = vpack.c.b16 %v1055, %v1051
    %v1280 = vpack.c.b16 %v1056, %v1052
    %v1281 = vpack.c.b16 %v1057, %v1053
    %v1282 = vpack.c.b16 %v1058, %v1054
    %1507 = vmatprep.subr.bf16.mxu0 %v1060
    %1508 = vmatpush1.bf16.msra.mxu0 %v1059
    %1509 = vmatprep.subr.bf16.mxu0 %v1064
    %1510 = vmatpush1.bf16.msra.mxu0 %v1063
    %1511 = vmatprep.subr.bf16.mxu0 %v1068
    %1512 = vmatpush1.bf16.msra.mxu0 %v1067
    %1513 = vmatprep.subr.bf16.mxu0 %v1072
    %1514 = vmatpush1.bf16.msra.mxu0 %v1071
    %1515 = vmatprep.subr.bf16.mxu0 %v1076
    %1516 = vmatpush1.bf16.msra.mxu0 %v1075
    %1517 = vmatprep.subr.bf16.mxu0 %v1080
    %1518 = vmatpush1.bf16.msra.mxu0 %v1079
    %1519 = vmatprep.subr.bf16.mxu0 %v1084
    %1520 = vmatpush1.bf16.msra.mxu0 %v1083
    %1521 = vmatprep.subr.bf16.mxu0 %v1088
    %1522 = vmatpush1.bf16.msra.mxu0 %v1087
    %1523 = vmatprep.subr.bf16.mxu0 %v1092
    %1524 = vmatpush1.bf16.msra.mxu0 %v1091
    %1525 = vmatprep.subr.bf16.mxu0 %v1096
    %1526 = vmatpush1.bf16.msra.mxu0 %v1095
    %1527 = vmatprep.subr.bf16.mxu0 %v1100
    %1528 = vmatpush1.bf16.msra.mxu0 %v1099
    %1529 = vmatprep.subr.bf16.mxu0 %v1104
    %1530 = vmatpush1.bf16.msra.mxu0 %v1103
    %1531 = vmatprep.subr.bf16.mxu0 %v1108
    %1532 = vmatpush1.bf16.msra.mxu0 %v1107
    %1533 = vmatprep.subr.bf16.mxu0 %v1112
    %1534 = vmatpush1.bf16.msra.mxu0 %v1111
    %1535 = vmatprep.subr.bf16.mxu0 %v1116
    %1536 = vmatpush1.bf16.msra.mxu0 %v1115
    %1537 = vmatprep.subr.bf16.mxu0 %v1120
    %1538 = vmatpush1.bf16.msra.mxu0 %v1119
    %1539 = vmatprep.mubr.bf16.mxu0 %v374
    %1540 = vmatmul.mubr.bf16.gmra.mrb[0].mxu0 %v373
    %v1541 = vpop.f32.mrb[0].mxu0
    %v1542 = vadd.f32 %v345, %v1541
    %v1543 = vpop.f32.mrb[0].mxu0
    %v1544 = vadd.f32 %v349, %v1543
    %v1545 = vpop.f32.mrb[0].mxu0
    %v1546 = vpop.f32.mrb[0].mxu0
    %1547 = vdwg.mxu0
    %1548 = vmatprep.subr.bf16.mxu0 %v1124
    %1549 = vmatpush1.bf16.msra.mxu0 %v1123
    %1550 = vmatprep.subr.bf16.mxu0 %v1128
    %1551 = vmatpush1.bf16.msra.mxu0 %v1127
    %1552 = vmatprep.subr.bf16.mxu0 %v1132
    %1553 = vmatpush1.bf16.msra.mxu0 %v1131
    %1554 = vmatprep.subr.bf16.mxu0 %v1136
    %1555 = vmatpush1.bf16.msra.mxu0 %v1135
    %1556 = vmatprep.subr.bf16.mxu0 %v1140
    %1557 = vmatpush1.bf16.msra.mxu0 %v1139
    %1558 = vmatprep.subr.bf16.mxu0 %v1144
    %1559 = vmatpush1.bf16.msra.mxu0 %v1143
    %1560 = vmatprep.subr.bf16.mxu0 %v1148
    %1561 = vmatpush1.bf16.msra.mxu0 %v1147
    %1562 = vmatprep.subr.bf16.mxu0 %v1152
    %1563 = vmatpush1.bf16.msra.mxu0 %v1151
    %1564 = vmatprep.subr.bf16.mxu0 %v1156
    %1565 = vmatpush1.bf16.msra.mxu0 %v1155
    %1566 = vmatprep.subr.bf16.mxu0 %v1160
    %1567 = vmatpush1.bf16.msra.mxu0 %v1159
    %1568 = vmatprep.subr.bf16.mxu0 %v1164
    %1569 = vmatpush1.bf16.msra.mxu0 %v1163
    %1570 = vmatprep.subr.bf16.mxu0 %v1168
    %1571 = vmatpush1.bf16.msra.mxu0 %v1167
    %1572 = vmatprep.subr.bf16.mxu0 %v1172
    %1573 = vmatpush1.bf16.msra.mxu0 %v1171
    %1574 = vmatprep.subr.bf16.mxu0 %v1176
    %1575 = vmatpush1.bf16.msra.mxu0 %v1175
    %1576 = vmatprep.subr.bf16.mxu0 %v1180
    %1577 = vmatpush1.bf16.msra.mxu0 %v1179
    %1578 = vmatprep.subr.bf16.mxu0 %v1184
    %1579 = vmatpush1.bf16.msra.mxu0 %v1183
    %1580 = vmatprep.mubr.bf16.mxu0 %v376
    %1581 = vmatmul.mubr.bf16.gmra.mrb[0].mxu0 %v375
    %v1582 = vpop.f32.mrb[0].mxu0
    %v1583 = vadd.f32 %v1542, %v1582
    %v1584 = vpop.f32.mrb[0].mxu0
    %v1585 = vadd.f32 %v1544, %v1584
    %v1586 = vpop.f32.mrb[0].mxu0
    %v1587 = vpop.f32.mrb[0].mxu0
    %1588 = vdwg.mxu0
    %1589 = vmatprep.subr.bf16.mxu0 %v1188
    %1590 = vmatpush1.bf16.msra.mxu0 %v1187
    %1591 = vmatprep.subr.bf16.mxu0 %v1192
    %1592 = vmatpush1.bf16.msra.mxu0 %v1191
    %1593 = vmatprep.subr.bf16.mxu0 %v1196
    %1594 = vmatpush1.bf16.msra.mxu0 %v1195
    %1595 = vmatprep.subr.bf16.mxu0 %v1200
    %1596 = vmatpush1.bf16.msra.mxu0 %v1199
    %1597 = vmatprep.subr.bf16.mxu0 %v1204
    %1598 = vmatpush1.bf16.msra.mxu0 %v1203
    %1599 = vmatprep.subr.bf16.mxu0 %v1208
    %1600 = vmatpush1.bf16.msra.mxu0 %v1207
    %1601 = vmatprep.subr.bf16.mxu0 %v1212
    %1602 = vmatpush1.bf16.msra.mxu0 %v1211
    %1603 = vmatprep.subr.bf16.mxu0 %v1216
    %1604 = vmatpush1.bf16.msra.mxu0 %v1215
    %1605 = vmatprep.subr.bf16.mxu0 %v1220
    %1606 = vmatpush1.bf16.msra.mxu0 %v1219
    %1607 = vmatprep.subr.bf16.mxu0 %v1224
    %1608 = vmatpush1.bf16.msra.mxu0 %v1223
    %1609 = vmatprep.subr.bf16.mxu0 %v1228
    %1610 = vmatpush1.bf16.msra.mxu0 %v1227
    %1611 = vmatprep.subr.bf16.mxu0 %v1232
    %1612 = vmatpush1.bf16.msra.mxu0 %v1231
    %1613 = vmatprep.subr.bf16.mxu0 %v1236
    %1614 = vmatpush1.bf16.msra.mxu0 %v1235
    %1615 = vmatprep.subr.bf16.mxu0 %v1240
    %1616 = vmatpush1.bf16.msra.mxu0 %v1239
    %1617 = vmatprep.subr.bf16.mxu0 %v1244
    %1618 = vmatpush1.bf16.msra.mxu0 %v1243
    %1619 = vmatprep.subr.bf16.mxu0 %v1248
    %1620 = vmatpush1.bf16.msra.mxu0 %v1247
    %1621 = vmatprep.mubr.bf16.mxu0 %v378
    %1622 = vmatmul.mubr.bf16.gmra.mrb[0].mxu0 %v377
    %v1623 = vpop.f32.mrb[0].mxu0
    %v1624 = vadd.f32 %v1583, %v1623
    %v1625 = vpop.f32.mrb[0].mxu0
    %v1626 = vadd.f32 %v1585, %v1625
    %v1627 = vpop.f32.mrb[0].mxu0
    %v1628 = vpop.f32.mrb[0].mxu0
    %1629 = vdwg.mxu0
    %1630 = vmatprep.subr.bf16.mxu0 %v1252
    %1631 = vmatpush1.bf16.msra.mxu0 %v1251
    %1632 = vmatprep.subr.bf16.mxu0 %v1256
    %1633 = vmatpush1.bf16.msra.mxu0 %v1255
    %1634 = vmatprep.subr.bf16.mxu0 %v1260
    %1635 = vmatpush1.bf16.msra.mxu0 %v1259
    %1636 = vmatprep.subr.bf16.mxu0 %v1264
    %1637 = vmatpush1.bf16.msra.mxu0 %v1263
    %1638 = vmatprep.subr.bf16.mxu0 %v1268
    %1639 = vmatpush1.bf16.msra.mxu0 %v1267
    %1640 = vmatprep.subr.bf16.mxu0 %v1272
    %1641 = vmatpush1.bf16.msra.mxu0 %v1271
    %1642 = vmatprep.subr.bf16.mxu0 %v1276
    %1643 = vmatpush1.bf16.msra.mxu0 %v1275
    %1644 = vmatprep.subr.bf16.mxu0 %v1280
    %1645 = vmatpush1.bf16.msra.mxu0 %v1279
    %1646 = vmatprep.subr.bf16.mxu0 0
    %1647 = vmatpush1.bf16.msra.mxu0 0
    %1648 = vmatprep.subr.bf16.mxu0 0
    %1649 = vmatpush1.bf16.msra.mxu0 0
    %1650 = vmatprep.subr.bf16.mxu0 0
    %1651 = vmatpush1.bf16.msra.mxu0 0
    %1652 = vmatprep.subr.bf16.mxu0 0
    %1653 = vmatpush1.bf16.msra.mxu0 0
    %1654 = vmatprep.subr.bf16.mxu0 0
    %1655 = vmatpush1.bf16.msra.mxu0 0
    %1656 = vmatprep.subr.bf16.mxu0 0
    %1657 = vmatpush1.bf16.msra.mxu0 0
    %1658 = vmatprep.subr.bf16.mxu0 0
    %1659 = vmatpush1.bf16.msra.mxu0 0
    %1660 = vmatprep.subr.bf16.mxu0 0
    %1661 = vmatpush1.bf16.msra.mxu0 0
    %1662 = vmatprep.mubr.bf16.mxu0 0
    %1663 = vmatmul.mubr.bf16.gmra.mrb[0].mxu0 %v379
    %v1664 = vpop.f32.mrb[0].mxu0
    %v1665 = vadd.f32 %v1624, %v1664
    %v1666 = vpop.f32.mrb[0].mxu0
    %v1667 = vadd.f32 %v1626, %v1666
    %v1668 = vpop.f32.mrb[0].mxu0
    %v1669 = vpop.f32.mrb[0].mxu0
    %1670 = vdwg.mxu0
    %1671 = vmatprep.subr.bf16.mxu0 %v1062
    %1672 = vmatpush1.bf16.msra.mxu0 %v1061
    %1673 = vmatprep.subr.bf16.mxu0 %v1066
    %1674 = vmatpush1.bf16.msra.mxu0 %v1065
    %1675 = vmatprep.subr.bf16.mxu0 %v1070
    %1676 = vmatpush1.bf16.msra.mxu0 %v1069
    %1677 = vmatprep.subr.bf16.mxu0 %v1074
    %1678 = vmatpush1.bf16.msra.mxu0 %v1073
    %1679 = vmatprep.subr.bf16.mxu0 %v1078
    %1680 = vmatpush1.bf16.msra.mxu0 %v1077
    %1681 = vmatprep.subr.bf16.mxu0 %v1082
    %1682 = vmatpush1.bf16.msra.mxu0 %v1081
    %1683 = vmatprep.subr.bf16.mxu0 %v1086
    %1684 = vmatpush1.bf16.msra.mxu0 %v1085
    %1685 = vmatprep.subr.bf16.mxu0 %v1090
    %1686 = vmatpush1.bf16.msra.mxu0 %v1089
    %1687 = vmatprep.subr.bf16.mxu0 %v1094
    %1688 = vmatpush1.bf16.msra.mxu0 %v1093
    %1689 = vmatprep.subr.bf16.mxu0 %v1098
    %1690 = vmatpush1.bf16.msra.mxu0 %v1097
    %1691 = vmatprep.subr.bf16.mxu0 %v1102
    %1692 = vmatpush1.bf16.msra.mxu0 %v1101
    %1693 = vmatprep.subr.bf16.mxu0 %v1106
    %1694 = vmatpush1.bf16.msra.mxu0 %v1105
    %1695 = vmatprep.subr.bf16.mxu0 %v1110
    %1696 = vmatpush1.bf16.msra.mxu0 %v1109
    %1697 = vmatprep.subr.bf16.mxu0 %v1114
    %1698 = vmatpush1.bf16.msra.mxu0 %v1113
    %1699 = vmatprep.subr.bf16.mxu0 %v1118
    %1700 = vmatpush1.bf16.msra.mxu0 %v1117
    %1701 = vmatprep.subr.bf16.mxu0 %v1122
    %1702 = vmatpush1.bf16.msra.mxu0 %v1121
    %1703 = vmatprep.mubr.bf16.mxu0 %v374
    %1704 = vmatmul.mubr.bf16.gmra.mrb[0].mxu0 %v373
    %v1705 = vpop.f32.mrb[0].mxu0
    %v1706 = vadd.f32 %v353, %v1705
    %v1707 = vpop.f32.mrb[0].mxu0
    %v1708 = vadd.f32 %v357, %v1707
    %v1709 = vpop.f32.mrb[0].mxu0
    %v1710 = vpop.f32.mrb[0].mxu0
    %1711 = vdwg.mxu0
    %1712 = vmatprep.subr.bf16.mxu0 %v1126
    %1713 = vmatpush1.bf16.msra.mxu0 %v1125
    %1714 = vmatprep.subr.bf16.mxu0 %v1130
    %1715 = vmatpush1.bf16.msra.mxu0 %v1129
    %1716 = vmatprep.subr.bf16.mxu0 %v1134
    %1717 = vmatpush1.bf16.msra.mxu0 %v1133
    %1718 = vmatprep.subr.bf16.mxu0 %v1138
    %1719 = vmatpush1.bf16.msra.mxu0 %v1137
    %1720 = vmatprep.subr.bf16.mxu0 %v1142
    %1721 = vmatpush1.bf16.msra.mxu0 %v1141
    %1722 = vmatprep.subr.bf16.mxu0 %v1146
    %1723 = vmatpush1.bf16.msra.mxu0 %v1145
    %1724 = vmatprep.subr.bf16.mxu0 %v1150
    %1725 = vmatpush1.bf16.msra.mxu0 %v1149
    %1726 = vmatprep.subr.bf16.mxu0 %v1154
    %1727 = vmatpush1.bf16.msra.mxu0 %v1153
    %1728 = vmatprep.subr.bf16.mxu0 %v1158
    %1729 = vmatpush1.bf16.msra.mxu0 %v1157
    %1730 = vmatprep.subr.bf16.mxu0 %v1162
    %1731 = vmatpush1.bf16.msra.mxu0 %v1161
    %1732 = vmatprep.subr.bf16.mxu0 %v1166
    %1733 = vmatpush1.bf16.msra.mxu0 %v1165
    %1734 = vmatprep.subr.bf16.mxu0 %v1170
    %1735 = vmatpush1.bf16.msra.mxu0 %v1169
    %1736 = vmatprep.subr.bf16.mxu0 %v1174
    %1737 = vmatpush1.bf16.msra.mxu0 %v1173
    %1738 = vmatprep.subr.bf16.mxu0 %v1178
    %1739 = vmatpush1.bf16.msra.mxu0 %v1177
    %1740 = vmatprep.subr.bf16.mxu0 %v1182
    %1741 = vmatpush1.bf16.msra.mxu0 %v1181
    %1742 = vmatprep.subr.bf16.mxu0 %v1186
    %1743 = vmatpush1.bf16.msra.mxu0 %v1185
    %1744 = vmatprep.mubr.bf16.mxu0 %v376
    %1745 = vmatmul.mubr.bf16.gmra.mrb[0].mxu0 %v375
    %v1746 = vpop.f32.mrb[0].mxu0
    %v1747 = vadd.f32 %v1706, %v1746
    %v1748 = vpop.f32.mrb[0].mxu0
    %v1749 = vadd.f32 %v1708, %v1748
    %v1750 = vpop.f32.mrb[0].mxu0
    %v1751 = vpop.f32.mrb[0].mxu0
    %1752 = vdwg.mxu0
    %1753 = vmatprep.subr.bf16.mxu0 %v1190
    %1754 = vmatpush1.bf16.msra.mxu0 %v1189
    %1755 = vmatprep.subr.bf16.mxu0 %v1194
    %1756 = vmatpush1.bf16.msra.mxu0 %v1193
    %1757 = vmatprep.subr.bf16.mxu0 %v1198
    %1758 = vmatpush1.bf16.msra.mxu0 %v1197
    %1759 = vmatprep.subr.bf16.mxu0 %v1202
    %1760 = vmatpush1.bf16.msra.mxu0 %v1201
    %1761 = vmatprep.subr.bf16.mxu0 %v1206
    %1762 = vmatpush1.bf16.msra.mxu0 %v1205
    %1763 = vmatprep.subr.bf16.mxu0 %v1210
    %1764 = vmatpush1.bf16.msra.mxu0 %v1209
    %1765 = vmatprep.subr.bf16.mxu0 %v1214
    %1766 = vmatpush1.bf16.msra.mxu0 %v1213
    %1767 = vmatprep.subr.bf16.mxu0 %v1218
    %1768 = vmatpush1.bf16.msra.mxu0 %v1217
    %1769 = vmatprep.subr.bf16.mxu0 %v1222
    %1770 = vmatpush1.bf16.msra.mxu0 %v1221
    %1771 = vmatprep.subr.bf16.mxu0 %v1226
    %1772 = vmatpush1.bf16.msra.mxu0 %v1225
    %1773 = vmatprep.subr.bf16.mxu0 %v1230
    %1774 = vmatpush1.bf16.msra.mxu0 %v1229
    %1775 = vmatprep.subr.bf16.mxu0 %v1234
    %1776 = vmatpush1.bf16.msra.mxu0 %v1233
    %1777 = vmatprep.subr.bf16.mxu0 %v1238
    %1778 = vmatpush1.bf16.msra.mxu0 %v1237
    %1779 = vmatprep.subr.bf16.mxu0 %v1242
    %1780 = vmatpush1.bf16.msra.mxu0 %v1241
    %1781 = vmatprep.subr.bf16.mxu0 %v1246
    %1782 = vmatpush1.bf16.msra.mxu0 %v1245
    %1783 = vmatprep.subr.bf16.mxu0 %v1250
    %1784 = vmatpush1.bf16.msra.mxu0 %v1249
    %1785 = vmatprep.mubr.bf16.mxu0 %v378
    %1786 = vmatmul.mubr.bf16.gmra.mrb[0].mxu0 %v377
    %v1787 = vpop.f32.mrb[0].mxu0
    %v1788 = vadd.f32 %v1747, %v1787
    %v1789 = vpop.f32.mrb[0].mxu0
    %v1790 = vadd.f32 %v1749, %v1789
    %v1791 = vpop.f32.mrb[0].mxu0
    %v1792 = vpop.f32.mrb[0].mxu0
    %1793 = vdwg.mxu0
    %1794 = vmatprep.subr.bf16.mxu0 %v1254
    %1795 = vmatpush1.bf16.msra.mxu0 %v1253
    %1796 = vmatprep.subr.bf16.mxu0 %v1258
    %1797 = vmatpush1.bf16.msra.mxu0 %v1257
    %1798 = vmatprep.subr.bf16.mxu0 %v1262
    %1799 = vmatpush1.bf16.msra.mxu0 %v1261
    %1800 = vmatprep.subr.bf16.mxu0 %v1266
    %1801 = vmatpush1.bf16.msra.mxu0 %v1265
    %1802 = vmatprep.subr.bf16.mxu0 %v1270
    %1803 = vmatpush1.bf16.msra.mxu0 %v1269
    %1804 = vmatprep.subr.bf16.mxu0 %v1274
    %1805 = vmatpush1.bf16.msra.mxu0 %v1273
    %1806 = vmatprep.subr.bf16.mxu0 %v1278
    %1807 = vmatpush1.bf16.msra.mxu0 %v1277
    %1808 = vmatprep.subr.bf16.mxu0 %v1282
    %1809 = vmatpush1.bf16.msra.mxu0 %v1281
    %1810 = vmatprep.subr.bf16.mxu0 0
    %1811 = vmatpush1.bf16.msra.mxu0 0
    %1812 = vmatprep.subr.bf16.mxu0 0
    %1813 = vmatpush1.bf16.msra.mxu0 0
    %1814 = vmatprep.subr.bf16.mxu0 0
    %1815 = vmatpush1.bf16.msra.mxu0 0
    %1816 = vmatprep.subr.bf16.mxu0 0
    %1817 = vmatpush1.bf16.msra.mxu0 0
    %1818 = vmatprep.subr.bf16.mxu0 0
    %1819 = vmatpush1.bf16.msra.mxu0 0
    %1820 = vmatprep.subr.bf16.mxu0 0
    %1821 = vmatpush1.bf16.msra.mxu0 0
    %1822 = vmatprep.subr.bf16.mxu0 0
    %1823 = vmatpush1.bf16.msra.mxu0 0
    %1824 = vmatprep.subr.bf16.mxu0 0
    %1825 = vmatpush1.bf16.msra.mxu0 0
    %1826 = vmatprep.mubr.bf16.mxu0 0
    %1827 = vmatmul.mubr.bf16.gmra.mrb[0].mxu0 %v379
    %v1828 = vpop.f32.mrb[0].mxu0
    %v1829 = vadd.f32 %v1788, %v1828
    %v1830 = vpop.f32.mrb[0].mxu0
    %v1831 = vadd.f32 %v1790, %v1830
    %v1832 = vpop.f32.mrb[0].mxu0
    %v1833 = vpop.f32.mrb[0].mxu0
    %1834 = vdwg.mxu0
    %v1835 = vmax.f32 %v1665, 0.0
    %v1836 = vmax.f32 %v1667, 0.0
    %v1837 = vmax.f32 %v1829, 0.0
    %v1838 = vmax.f32 %v1831, 0.0
    %v1839 = vld [vmem:[#allocation8] sm:$0xff]
    %v1840 = vld [vmem:[#allocation8 + $0x8] sm:$0xff]
    %v1841 = vld [vmem:[#allocation8 + $0x10] sm:$0xff]
    %v1842 = vld [vmem:[#allocation8 + $0x18] sm:$0xff]
    %v1843 = vld [vmem:[#allocation8 + $0x20] sm:$0xff]
    %v1844 = vld [vmem:[#allocation8 + $0x28] sm:$0xff]
    %v1845 = vld [vmem:[#allocation8 + $0x30] sm:$0xff]
    %v1846 = vld [vmem:[#allocation8 + $0x38] sm:$0xff]
    %v1847 = vld [vmem:[#allocation8 + $0x40] sm:$0xff]
    %v1848 = vld [vmem:[#allocation8 + $0x48] sm:$0xff]
    %v1849 = vld [vmem:[#allocation8 + $0x50] sm:$0xff]
    %v1850 = vld [vmem:[#allocation8 + $0x58] sm:$0xff]
    %v1851 = vld [vmem:[#allocation8 + $0x60] sm:$0xff]
    %v1852 = vld [vmem:[#allocation8 + $0x68] sm:$0xff]
    %v1853 = vld [vmem:[#allocation8 + $0x70] sm:$0xff]
    %v1854 = vld [vmem:[#allocation8 + $0x78] sm:$0xff]
    %v1855 = vld [vmem:[#allocation8 + $0x80] sm:$0xff]
    %v1856 = vld [vmem:[#allocation8 + $0x88] sm:$0xff]
    %v1857 = vld [vmem:[#allocation8 + $0x90] sm:$0xff]
    %v1858 = vld [vmem:[#allocation8 + $0x98] sm:$0xff]
    %v1859 = vld [vmem:[#allocation8 + $0xa0] sm:$0xff]
    %v1860 = vld [vmem:[#allocation8 + $0xa8] sm:$0xff]
    %v1861 = vld [vmem:[#allocation8 + $0xb0] sm:$0xff]
    %v1862 = vld [vmem:[#allocation8 + $0xb8] sm:$0xff]
    %v1863 = vld [vmem:[#allocation8 + $0xc0] sm:$0xff]
    %v1864 = vld [vmem:[#allocation8 + $0xc8] sm:$0xff]
    %v1865 = vld [vmem:[#allocation8 + $0xd0] sm:$0xff]
    %v1866 = vld [vmem:[#allocation8 + $0xd8] sm:$0xff]
    %v1867 = vld [vmem:[#allocation8 + $0xe0] sm:$0xff]
    %v1868 = vld [vmem:[#allocation8 + $0xe8] sm:$0xff]
    %v1869 = vld [vmem:[#allocation8 + $0xf0] sm:$0xff]
    %v1870 = vld [vmem:[#allocation8 + $0xf8] sm:$0xff]
    %v1871 = vld [vmem:[#allocation8 + $0x100] sm:$0xff]
    %v1872 = vld [vmem:[#allocation8 + $0x108] sm:$0xff]
    %v1873 = vld [vmem:[#allocation8 + $0x110] sm:$0xff]
    %v1874 = vld [vmem:[#allocation8 + $0x118] sm:$0xff]
    %v1875 = vld [vmem:[#allocation8 + $0x120] sm:$0xff]
    %v1876 = vld [vmem:[#allocation8 + $0x128] sm:$0xff]
    %v1877 = vld [vmem:[#allocation8 + $0x130] sm:$0xff]
    %v1878 = vld [vmem:[#allocation8 + $0x138] sm:$0xff]
    %v1879 = vld [vmem:[#allocation8 + $0x140] sm:$0xff]
    %v1880 = vld [vmem:[#allocation8 + $0x148] sm:$0xff]
    %v1881 = vld [vmem:[#allocation8 + $0x150] sm:$0xff]
    %v1882 = vld [vmem:[#allocation8 + $0x158] sm:$0xff]
    %v1883 = vld [vmem:[#allocation8 + $0x160] sm:$0xff]
    %v1884 = vld [vmem:[#allocation8 + $0x168] sm:$0xff]
    %v1885 = vld [vmem:[#allocation8 + $0x170] sm:$0xff]
    %v1886 = vld [vmem:[#allocation8 + $0x178] sm:$0xff]
    %v1887 = vld [vmem:[#allocation8 + $0x180] sm:$0xff]
    %v1888 = vld [vmem:[#allocation8 + $0x188] sm:$0xff]
    %v1889 = vld [vmem:[#allocation8 + $0x190] sm:$0xff]
    %v1890 = vld [vmem:[#allocation8 + $0x198] sm:$0xff]
    %v1891 = vld [vmem:[#allocation8 + $0x1a0] sm:$0xff]
    %v1892 = vld [vmem:[#allocation8 + $0x1a8] sm:$0xff]
    %v1893 = vld [vmem:[#allocation8 + $0x1b0] sm:$0xff]
    %v1894 = vld [vmem:[#allocation8 + $0x1b8] sm:$0xff]
    %v1895 = vld [vmem:[#allocation8 + $0x1c0] sm:$0xff]
    %v1896 = vld [vmem:[#allocation8 + $0x1c8] sm:$0xff]
    %v1897 = vld [vmem:[#allocation8 + $0x1d0] sm:$0xff]
    %v1898 = vld [vmem:[#allocation8 + $0x1d8] sm:$0xff]
    %v1899 = vld [vmem:[#allocation8 + $0x1e0] sm:$0xff]
    %v1900 = vld [vmem:[#allocation8 + $0x1e8] sm:$0xff]
    %v1901 = vld [vmem:[#allocation8 + $0x1f0] sm:$0xff]
    %v1902 = vld [vmem:[#allocation8 + $0x1f8] sm:$0xff]
    %v1903 = vld [vmem:[#allocation8 + $0x200] sm:$0xff]
    %v1904 = vld [vmem:[#allocation8 + $0x208] sm:$0xff]
    %v1905 = vld [vmem:[#allocation8 + $0x210] sm:$0xff]
    %v1906 = vld [vmem:[#allocation8 + $0x218] sm:$0xff]
    %v1907 = vld [vmem:[#allocation8 + $0x220] sm:$0xff]
    %v1908 = vld [vmem:[#allocation8 + $0x228] sm:$0xff]
    %v1909 = vld [vmem:[#allocation8 + $0x230] sm:$0xff]
    %v1910 = vld [vmem:[#allocation8 + $0x238] sm:$0xff]
    %v1911 = vld [vmem:[#allocation8 + $0x240] sm:$0xff]
    %v1912 = vld [vmem:[#allocation8 + $0x248] sm:$0xff]
    %v1913 = vld [vmem:[#allocation8 + $0x250] sm:$0xff]
    %v1914 = vld [vmem:[#allocation8 + $0x258] sm:$0xff]
    %v1915 = vld [vmem:[#allocation8 + $0x260] sm:$0xff]
    %v1916 = vld [vmem:[#allocation8 + $0x268] sm:$0xff]
    %v1917 = vld [vmem:[#allocation8 + $0x270] sm:$0xff]
    %v1918 = vld [vmem:[#allocation8 + $0x278] sm:$0xff]
    %v1919 = vld [vmem:[#allocation8 + $0x280] sm:$0xff]
    %v1920 = vld [vmem:[#allocation8 + $0x288] sm:$0xff]
    %v1921 = vld [vmem:[#allocation8 + $0x290] sm:$0xff]
    %v1922 = vld [vmem:[#allocation8 + $0x298] sm:$0xff]
    %v1923 = vld [vmem:[#allocation8 + $0x2a0] sm:$0xff]
    %v1924 = vld [vmem:[#allocation8 + $0x2a8] sm:$0xff]
    %v1925 = vld [vmem:[#allocation8 + $0x2b0] sm:$0xff]
    %v1926 = vld [vmem:[#allocation8 + $0x2b8] sm:$0xff]
    %v1927 = vld [vmem:[#allocation8 + $0x2c0] sm:$0xff]
    %v1928 = vld [vmem:[#allocation8 + $0x2c8] sm:$0xff]
    %v1929 = vld [vmem:[#allocation8 + $0x2d0] sm:$0xff]
    %v1930 = vld [vmem:[#allocation8 + $0x2d8] sm:$0xff]
    %v1931 = vld [vmem:[#allocation8 + $0x2e0] sm:$0xff]
    %v1932 = vld [vmem:[#allocation8 + $0x2e8] sm:$0xff]
    %v1933 = vld [vmem:[#allocation8 + $0x2f0] sm:$0xff]
    %v1934 = vld [vmem:[#allocation8 + $0x2f8] sm:$0xff]
    %v1935 = vld [vmem:[#allocation8 + $0x300] sm:$0xff]
    %v1936 = vld [vmem:[#allocation8 + $0x308] sm:$0xff]
    %v1937 = vld [vmem:[#allocation8 + $0x310] sm:$0xff]
    %v1938 = vld [vmem:[#allocation8 + $0x318] sm:$0xff]
    %v1939 = vld [vmem:[#allocation8 + $0x320] sm:$0xff]
    %v1940 = vld [vmem:[#allocation8 + $0x328] sm:$0xff]
    %v1941 = vld [vmem:[#allocation8 + $0x330] sm:$0xff]
    %v1942 = vld [vmem:[#allocation8 + $0x338] sm:$0xff]
    %v1943 = vld [vmem:[#allocation8 + $0x340] sm:$0xff]
    %v1944 = vld [vmem:[#allocation8 + $0x348] sm:$0xff]
    %v1945 = vld [vmem:[#allocation8 + $0x350] sm:$0xff]
    %v1946 = vld [vmem:[#allocation8 + $0x358] sm:$0xff]
    %v1947 = vld [vmem:[#allocation8 + $0x360] sm:$0xff]
    %v1948 = vld [vmem:[#allocation8 + $0x368] sm:$0xff]
    %v1949 = vld [vmem:[#allocation8 + $0x370] sm:$0xff]
    %v1950 = vld [vmem:[#allocation8 + $0x378] sm:$0xff]
    %v1951 = vld [vmem:[#allocation8 + $0x380] sm:$0xff]
    %v1952 = vld [vmem:[#allocation8 + $0x388] sm:$0xff]
    %v1953 = vld [vmem:[#allocation8 + $0x390] sm:$0xff]
    %v1954 = vld [vmem:[#allocation8 + $0x398] sm:$0xff]
    %v1955 = vld [vmem:[#allocation8 + $0x3a0] sm:$0xff]
    %v1956 = vld [vmem:[#allocation8 + $0x3a8] sm:$0xff]
    %v1957 = vld [vmem:[#allocation8 + $0x3b0] sm:$0xff]
    %v1958 = vld [vmem:[#allocation8 + $0x3b8] sm:$0xff]
    %v1959 = vld [vmem:[#allocation8 + $0x3c0] sm:$0xff]
    %v1960 = vld [vmem:[#allocation8 + $0x3c8] sm:$0xff]
    %v1961 = vld [vmem:[#allocation8 + $0x3d0] sm:$0xff]
    %v1962 = vld [vmem:[#allocation8 + $0x3d8] sm:$0xff]
    %v1963 = vld [vmem:[#allocation8 + $0x3e0] sm:$0xff]
    %v1964 = vld [vmem:[#allocation8 + $0x3e8] sm:$0xff]
    %v1965 = vld [vmem:[#allocation8 + $0x3f0] sm:$0xff]
    %v1966 = vld [vmem:[#allocation8 + $0x3f8] sm:$0xff]
    %v1968 = vlaneseq
    %v1969 = vshrl.u32 %v1968, 7
    %v1970 = vsub.s32 0, %v1969
    %v1971 = vrot.slane %v110, %v1970
    %v1972 = vlaneseq
    %v1973 = vshrl.u32 %v1972, 7
    %v1974 = vsub.s32 1, %v1973
    %v1975 = vrot.slane %v110, %v1974
    %1978 = vmatprep.subr.mxu0 %v1840
    %1979 = vmatpush1.msra.mxu0 %v1839
    %1980 = vmatprep.subr.mxu0 %v1842
    %1981 = vmatpush1.msra.mxu0 %v1841
    %1982 = vmatprep.subr.mxu0 %v1844
    %1983 = vmatpush1.msra.mxu0 %v1843
    %1984 = vmatprep.subr.mxu0 %v1846
    %1985 = vmatpush1.msra.mxu0 %v1845
    %1986 = vmatprep.subr.mxu0 %v1848
    %1987 = vmatpush1.msra.mxu0 %v1847
    %1988 = vmatprep.subr.mxu0 %v1850
    %1989 = vmatpush1.msra.mxu0 %v1849
    %1990 = vmatprep.subr.mxu0 %v1852
    %1991 = vmatpush1.msra.mxu0 %v1851
    %1992 = vmatprep.subr.mxu0 %v1854
    %1993 = vmatpush1.msra.mxu0 %v1853
    %1994 = vmatprep.subr.mxu0 %v1856
    %1995 = vmatpush1.msra.mxu0 %v1855
    %1996 = vmatprep.subr.mxu0 %v1858
    %1997 = vmatpush1.msra.mxu0 %v1857
    %1998 = vmatprep.subr.mxu0 %v1860
    %1999 = vmatpush1.msra.mxu0 %v1859
    %2000 = vmatprep.subr.mxu0 %v1862
    %2001 = vmatpush1.msra.mxu0 %v1861
    %2002 = vmatprep.subr.mxu0 %v1864
    %2003 = vmatpush1.msra.mxu0 %v1863
    %2004 = vmatprep.subr.mxu0 %v1866
    %2005 = vmatpush1.msra.mxu0 %v1865
    %2006 = vmatprep.subr.mxu0 %v1868
    %2007 = vmatpush1.msra.mxu0 %v1867
    %2008 = vmatprep.subr.mxu0 %v1870
    %2009 = vmatpush1.msra.mxu0 %v1869
    %2010 = vmatprep.subr.mxu0 %v1872
    %2011 = vmatpush1.msra.mxu0 %v1871
    %2012 = vmatprep.subr.mxu0 %v1874
    %2013 = vmatpush1.msra.mxu0 %v1873
    %2014 = vmatprep.subr.mxu0 %v1876
    %2015 = vmatpush1.msra.mxu0 %v1875
    %2016 = vmatprep.subr.mxu0 %v1878
    %2017 = vmatpush1.msra.mxu0 %v1877
    %2018 = vmatprep.subr.mxu0 %v1880
    %2019 = vmatpush1.msra.mxu0 %v1879
    %2020 = vmatprep.subr.mxu0 %v1882
    %2021 = vmatpush1.msra.mxu0 %v1881
    %2022 = vmatprep.subr.mxu0 %v1884
    %2023 = vmatpush1.msra.mxu0 %v1883
    %2024 = vmatprep.subr.mxu0 %v1886
    %2025 = vmatpush1.msra.mxu0 %v1885
    %2026 = vmatprep.subr.mxu0 %v1888
    %2027 = vmatpush1.msra.mxu0 %v1887
    %2028 = vmatprep.subr.mxu0 %v1890
    %2029 = vmatpush1.msra.mxu0 %v1889
    %2030 = vmatprep.subr.mxu0 %v1892
    %2031 = vmatpush1.msra.mxu0 %v1891
    %2032 = vmatprep.subr.mxu0 %v1894
    %2033 = vmatpush1.msra.mxu0 %v1893
    %2034 = vmatprep.subr.mxu0 %v1896
    %2035 = vmatpush1.msra.mxu0 %v1895
    %2036 = vmatprep.subr.mxu0 %v1898
    %2037 = vmatpush1.msra.mxu0 %v1897
    %2038 = vmatprep.subr.mxu0 %v1900
    %2039 = vmatpush1.msra.mxu0 %v1899
    %2040 = vmatprep.subr.mxu0 %v1902
    %2041 = vmatpush1.msra.mxu0 %v1901
    %2042 = vmatprep.mubr.f32.mxu0 %v1836
    %2043 = vmatmul.mubr.f32.gmra.mrb[0].mxu0 %v1835
    %v2044 = vpop.f32.mrb[0].mxu0
    %v2045 = vadd.f32 %v1971, %v2044
    %v2046 = vpop.f32.mrb[0].mxu0
    %v2047 = vadd.f32 %v1975, %v2046
    %2048 = vdwg.mxu0
    %2049 = vmatprep.subr.mxu0 %v1904
    %2050 = vmatpush1.msra.mxu0 %v1903
    %2051 = vmatprep.subr.mxu0 %v1906
    %2052 = vmatpush1.msra.mxu0 %v1905
    %2053 = vmatprep.subr.mxu0 %v1908
    %2054 = vmatpush1.msra.mxu0 %v1907
    %2055 = vmatprep.subr.mxu0 %v1910
    %2056 = vmatpush1.msra.mxu0 %v1909
    %2057 = vmatprep.subr.mxu0 %v1912
    %2058 = vmatpush1.msra.mxu0 %v1911
    %2059 = vmatprep.subr.mxu0 %v1914
    %2060 = vmatpush1.msra.mxu0 %v1913
    %2061 = vmatprep.subr.mxu0 %v1916
    %2062 = vmatpush1.msra.mxu0 %v1915
    %2063 = vmatprep.subr.mxu0 %v1918
    %2064 = vmatpush1.msra.mxu0 %v1917
    %2065 = vmatprep.subr.mxu0 %v1920
    %2066 = vmatpush1.msra.mxu0 %v1919
    %2067 = vmatprep.subr.mxu0 %v1922
    %2068 = vmatpush1.msra.mxu0 %v1921
    %2069 = vmatprep.subr.mxu0 %v1924
    %2070 = vmatpush1.msra.mxu0 %v1923
    %2071 = vmatprep.subr.mxu0 %v1926
    %2072 = vmatpush1.msra.mxu0 %v1925
    %2073 = vmatprep.subr.mxu0 %v1928
    %2074 = vmatpush1.msra.mxu0 %v1927
    %2075 = vmatprep.subr.mxu0 %v1930
    %2076 = vmatpush1.msra.mxu0 %v1929
    %2077 = vmatprep.subr.mxu0 %v1932
    %2078 = vmatpush1.msra.mxu0 %v1931
    %2079 = vmatprep.subr.mxu0 %v1934
    %2080 = vmatpush1.msra.mxu0 %v1933
    %2081 = vmatprep.subr.mxu0 %v1936
    %2082 = vmatpush1.msra.mxu0 %v1935
    %2083 = vmatprep.subr.mxu0 %v1938
    %2084 = vmatpush1.msra.mxu0 %v1937
    %2085 = vmatprep.subr.mxu0 %v1940
    %2086 = vmatpush1.msra.mxu0 %v1939
    %2087 = vmatprep.subr.mxu0 %v1942
    %2088 = vmatpush1.msra.mxu0 %v1941
    %2089 = vmatprep.subr.mxu0 %v1944
    %2090 = vmatpush1.msra.mxu0 %v1943
    %2091 = vmatprep.subr.mxu0 %v1946
    %2092 = vmatpush1.msra.mxu0 %v1945
    %2093 = vmatprep.subr.mxu0 %v1948
    %2094 = vmatpush1.msra.mxu0 %v1947
    %2095 = vmatprep.subr.mxu0 %v1950
    %2096 = vmatpush1.msra.mxu0 %v1949
    %2097 = vmatprep.subr.mxu0 %v1952
    %2098 = vmatpush1.msra.mxu0 %v1951
    %2099 = vmatprep.subr.mxu0 %v1954
    %2100 = vmatpush1.msra.mxu0 %v1953
    %2101 = vmatprep.subr.mxu0 %v1956
    %2102 = vmatpush1.msra.mxu0 %v1955
    %2103 = vmatprep.subr.mxu0 %v1958
    %2104 = vmatpush1.msra.mxu0 %v1957
    %2105 = vmatprep.subr.mxu0 %v1960
    %2106 = vmatpush1.msra.mxu0 %v1959
    %2107 = vmatprep.subr.mxu0 %v1962
    %2108 = vmatpush1.msra.mxu0 %v1961
    %2109 = vmatprep.subr.mxu0 %v1964
    %2110 = vmatpush1.msra.mxu0 %v1963
    %2111 = vmatprep.subr.mxu0 %v1966
    %2112 = vmatpush1.msra.mxu0 %v1965
    %2113 = vmatprep.mubr.f32.mxu0 %v1838
    %2114 = vmatmul.mubr.f32.gmra.mrb[0].mxu0 %v1837
    %v2115 = vpop.f32.mrb[0].mxu0
    %v2116 = vadd.f32 %v2045, %v2115
    %v2117 = vpop.f32.mrb[0].mxu0
    %v2118 = vadd.f32 %v2047, %v2117
    %2119 = vdwg.mxu0
    %v2120 = vmul.f32 %v2118, 0.5
    %v2121 = vmul.f32 %v2120, 1.442695
    %v2122 = vpow.pop %v2121
    %v2123 = vld [vmem:[#allocation5] sm:$0xf]
    %v2124 = vunpack.c.l.bf16 %v2123
    %v2125 = vmul.f32 %v2124, %v2122
    %v2126 = vadd.f32 %v2125, %v2116
    %v2127 = vpack.c.bf16 %v2126, %v2126
    %v2128 = vld [vmem:[#allocation10] sm:$0xff]
    %v2129 = vld [vmem:[#allocation10 + $0x8] sm:$0xff]
    %v2130 = vld [vmem:[#allocation10 + $0x10] sm:$0xff]
    %v2131 = vld [vmem:[#allocation10 + $0x18] sm:$0xff]
    %v2132 = vld [vmem:[#allocation10 + $0x20] sm:$0xff]
    %v2133 = vld [vmem:[#allocation10 + $0x28] sm:$0xff]
    %v2134 = vld [vmem:[#allocation10 + $0x30] sm:$0xff]
    %v2135 = vld [vmem:[#allocation10 + $0x38] sm:$0xff]
    %v2136 = vld [vmem:[#allocation10 + $0x40] sm:$0xff]
    %v2137 = vld [vmem:[#allocation10 + $0x48] sm:$0xff]
    %v2138 = vld [vmem:[#allocation10 + $0x50] sm:$0xff]
    %v2139 = vld [vmem:[#allocation10 + $0x58] sm:$0xff]
    %v2140 = vld [vmem:[#allocation10 + $0x60] sm:$0xff]
    %v2141 = vld [vmem:[#allocation10 + $0x68] sm:$0xff]
    %v2142 = vld [vmem:[#allocation10 + $0x70] sm:$0xff]
    %v2143 = vld [vmem:[#allocation10 + $0x78] sm:$0xff]
    %v2144 = vld [vmem:[#allocation10 + $0x80] sm:$0xff]
    %v2145 = vld [vmem:[#allocation10 + $0x88] sm:$0xff]
    %v2146 = vld [vmem:[#allocation10 + $0x90] sm:$0xff]
    %v2147 = vld [vmem:[#allocation10 + $0x98] sm:$0xff]
    %v2148 = vld [vmem:[#allocation10 + $0xa0] sm:$0xff]
    %v2149 = vld [vmem:[#allocation10 + $0xa8] sm:$0xff]
    %v2150 = vld [vmem:[#allocation10 + $0xb0] sm:$0xff]
    %v2151 = vld [vmem:[#allocation10 + $0xb8] sm:$0xff]
    %v2152 = vld [vmem:[#allocation10 + $0xc0] sm:$0xff]
    %v2153 = vld [vmem:[#allocation10 + $0xc8] sm:$0xff]
    %v2154 = vld [vmem:[#allocation10 + $0xd0] sm:$0xff]
    %v2155 = vld [vmem:[#allocation10 + $0xd8] sm:$0xff]
    %v2156 = vld [vmem:[#allocation10 + $0xe0] sm:$0xff]
    %v2157 = vld [vmem:[#allocation10 + $0xe8] sm:$0xff]
    %v2158 = vld [vmem:[#allocation10 + $0xf0] sm:$0xff]
    %v2159 = vld [vmem:[#allocation10 + $0xf8] sm:$0xff]
    %v2161 = vlaneseq
    %v2162 = vshrl.u32 %v2161, 7
    %v2163 = vsub.s32 0, %v2162
    %v2164 = vrot.slane %v111, %v2163
    %v2165 = vlaneseq
    %v2166 = vshrl.u32 %v2165, 7
    %v2167 = vsub.s32 1, %v2166
    %v2168 = vrot.slane %v111, %v2167
    %v2169 = vlaneseq
    %v2170 = vshrl.u32 %v2169, 7
    %v2171 = vsub.s32 2, %v2170
    %v2172 = vrot.slane %v111, %v2171
    %v2173 = vlaneseq
    %v2174 = vshrl.u32 %v2173, 7
    %v2175 = vsub.s32 3, %v2174
    %v2176 = vrot.slane %v111, %v2175
    %v2213 = vunpack.c.l.b16 %v2128
    %v2214 = vunpack.c.h.b16 %v2128
    %v2215 = vunpack.c.l.b16 %v2129
    %v2216 = vunpack.c.h.b16 %v2129
    %v2217 = vunpack.c.l.b16 %v2130
    %v2218 = vunpack.c.h.b16 %v2130
    %v2219 = vunpack.c.l.b16 %v2131
    %v2220 = vunpack.c.h.b16 %v2131
    %v2221 = vunpack.c.l.b16 %v2132
    %v2222 = vunpack.c.h.b16 %v2132
    %v2223 = vunpack.c.l.b16 %v2133
    %v2224 = vunpack.c.h.b16 %v2133
    %v2225 = vunpack.c.l.b16 %v2134
    %v2226 = vunpack.c.h.b16 %v2134
    %v2227 = vunpack.c.l.b16 %v2135
    %v2228 = vunpack.c.h.b16 %v2135
    %v2229 = vunpack.c.l.b16 %v2136
    %v2230 = vunpack.c.h.b16 %v2136
    %v2231 = vunpack.c.l.b16 %v2137
    %v2232 = vunpack.c.h.b16 %v2137
    %v2233 = vunpack.c.l.b16 %v2138
    %v2234 = vunpack.c.h.b16 %v2138
    %v2235 = vunpack.c.l.b16 %v2139
    %v2236 = vunpack.c.h.b16 %v2139
    %v2237 = vunpack.c.l.b16 %v2140
    %v2238 = vunpack.c.h.b16 %v2140
    %v2239 = vunpack.c.l.b16 %v2141
    %v2240 = vunpack.c.h.b16 %v2141
    %v2241 = vunpack.c.l.b16 %v2142
    %v2242 = vunpack.c.h.b16 %v2142
    %v2243 = vunpack.c.l.b16 %v2143
    %v2244 = vunpack.c.h.b16 %v2143
    %v2245 = vunpack.c.l.b16 %v2144
    %v2246 = vunpack.c.h.b16 %v2144
    %v2247 = vunpack.c.l.b16 %v2145
    %v2248 = vunpack.c.h.b16 %v2145
    %v2249 = vunpack.c.l.b16 %v2146
    %v2250 = vunpack.c.h.b16 %v2146
    %v2251 = vunpack.c.l.b16 %v2147
    %v2252 = vunpack.c.h.b16 %v2147
    %v2253 = vunpack.c.l.b16 %v2148
    %v2254 = vunpack.c.h.b16 %v2148
    %v2255 = vunpack.c.l.b16 %v2149
    %v2256 = vunpack.c.h.b16 %v2149
    %v2257 = vunpack.c.l.b16 %v2150
    %v2258 = vunpack.c.h.b16 %v2150
    %v2259 = vunpack.c.l.b16 %v2151
    %v2260 = vunpack.c.h.b16 %v2151
    %v2261 = vunpack.c.l.b16 %v2152
    %v2262 = vunpack.c.h.b16 %v2152
    %v2263 = vunpack.c.l.b16 %v2153
    %v2264 = vunpack.c.h.b16 %v2153
    %v2265 = vunpack.c.l.b16 %v2154
    %v2266 = vunpack.c.h.b16 %v2154
    %v2267 = vunpack.c.l.b16 %v2155
    %v2268 = vunpack.c.h.b16 %v2155
    %v2269 = vunpack.c.l.b16 %v2156
    %v2270 = vunpack.c.h.b16 %v2156
    %v2271 = vunpack.c.l.b16 %v2157
    %v2272 = vunpack.c.h.b16 %v2157
    %v2273 = vunpack.c.l.b16 %v2158
    %v2274 = vunpack.c.h.b16 %v2158
    %v2275 = vunpack.c.l.b16 %v2159
    %v2276 = vunpack.c.h.b16 %v2159
    %v2277 = vpack.c.b16 %v2217, %v2213
    %v2278 = vpack.c.b16 %v2218, %v2214
    %v2279 = vpack.c.b16 %v2219, %v2215
    %v2280 = vpack.c.b16 %v2220, %v2216
    %v2281 = vpack.c.b16 %v2225, %v2221
    %v2282 = vpack.c.b16 %v2226, %v2222
    %v2283 = vpack.c.b16 %v2227, %v2223
    %v2284 = vpack.c.b16 %v2228, %v2224
    %v2285 = vpack.c.b16 %v2233, %v2229
    %v2286 = vpack.c.b16 %v2234, %v2230
    %v2287 = vpack.c.b16 %v2235, %v2231
    %v2288 = vpack.c.b16 %v2236, %v2232
    %v2289 = vpack.c.b16 %v2241, %v2237
    %v2290 = vpack.c.b16 %v2242, %v2238
    %v2291 = vpack.c.b16 %v2243, %v2239
    %v2292 = vpack.c.b16 %v2244, %v2240
    %v2293 = vpack.c.b16 %v2249, %v2245
    %v2294 = vpack.c.b16 %v2250, %v2246
    %v2295 = vpack.c.b16 %v2251, %v2247
    %v2296 = vpack.c.b16 %v2252, %v2248
    %v2297 = vpack.c.b16 %v2257, %v2253
    %v2298 = vpack.c.b16 %v2258, %v2254
    %v2299 = vpack.c.b16 %v2259, %v2255
    %v2300 = vpack.c.b16 %v2260, %v2256
    %v2301 = vpack.c.b16 %v2265, %v2261
    %v2302 = vpack.c.b16 %v2266, %v2262
    %v2303 = vpack.c.b16 %v2267, %v2263
    %v2304 = vpack.c.b16 %v2268, %v2264
    %v2305 = vpack.c.b16 %v2273, %v2269
    %v2306 = vpack.c.b16 %v2274, %v2270
    %v2307 = vpack.c.b16 %v2275, %v2271
    %v2308 = vpack.c.b16 %v2276, %v2272
    %2341 = vmatprep.subr.bf16.mxu0 %v2278
    %2342 = vmatpush1.bf16.msra.mxu0 %v2277
    %2343 = vmatprep.subr.bf16.mxu0 %v2282
    %2344 = vmatpush1.bf16.msra.mxu0 %v2281
    %2345 = vmatprep.subr.bf16.mxu0 %v2286
    %2346 = vmatpush1.bf16.msra.mxu0 %v2285
    %2347 = vmatprep.subr.bf16.mxu0 %v2290
    %2348 = vmatpush1.bf16.msra.mxu0 %v2289
    %2349 = vmatprep.subr.bf16.mxu0 %v2294
    %2350 = vmatpush1.bf16.msra.mxu0 %v2293
    %2351 = vmatprep.subr.bf16.mxu0 %v2298
    %2352 = vmatpush1.bf16.msra.mxu0 %v2297
    %2353 = vmatprep.subr.bf16.mxu0 %v2302
    %2354 = vmatpush1.bf16.msra.mxu0 %v2301
    %2355 = vmatprep.subr.bf16.mxu0 %v2306
    %2356 = vmatpush1.bf16.msra.mxu0 %v2305
    %2357 = vmatprep.subr.bf16.mxu0 0
    %2358 = vmatpush1.bf16.msra.mxu0 0
    %2359 = vmatprep.subr.bf16.mxu0 0
    %2360 = vmatpush1.bf16.msra.mxu0 0
    %2361 = vmatprep.subr.bf16.mxu0 0
    %2362 = vmatpush1.bf16.msra.mxu0 0
    %2363 = vmatprep.subr.bf16.mxu0 0
    %2364 = vmatpush1.bf16.msra.mxu0 0
    %2365 = vmatprep.subr.bf16.mxu0 0
    %2366 = vmatpush1.bf16.msra.mxu0 0
    %2367 = vmatprep.subr.bf16.mxu0 0
    %2368 = vmatpush1.bf16.msra.mxu0 0
    %2369 = vmatprep.subr.bf16.mxu0 0
    %2370 = vmatpush1.bf16.msra.mxu0 0
    %2371 = vmatprep.subr.bf16.mxu0 0
    %2372 = vmatpush1.bf16.msra.mxu0 0
    %2373 = vmatprep.mubr.bf16.mxu0 0
    %2374 = vmatmul.mubr.bf16.gmra.mrb[0].mxu0 %v2127
    %v2375 = vpop.f32.mrb[0].mxu0
    %v2376 = vadd.f32 %v2164, %v2375
    %v2377 = vpop.f32.mrb[0].mxu0
    %v2378 = vadd.f32 %v2168, %v2377
    %v2379 = vpop.f32.mrb[0].mxu0
    %v2380 = vpop.f32.mrb[0].mxu0
    %2381 = vdwg.mxu0
    %2382 = vmatprep.subr.bf16.mxu0 %v2280
    %2383 = vmatpush1.bf16.msra.mxu0 %v2279
    %2384 = vmatprep.subr.bf16.mxu0 %v2284
    %2385 = vmatpush1.bf16.msra.mxu0 %v2283
    %2386 = vmatprep.subr.bf16.mxu0 %v2288
    %2387 = vmatpush1.bf16.msra.mxu0 %v2287
    %2388 = vmatprep.subr.bf16.mxu0 %v2292
    %2389 = vmatpush1.bf16.msra.mxu0 %v2291
    %2390 = vmatprep.subr.bf16.mxu0 %v2296
    %2391 = vmatpush1.bf16.msra.mxu0 %v2295
    %2392 = vmatprep.subr.bf16.mxu0 %v2300
    %2393 = vmatpush1.bf16.msra.mxu0 %v2299
    %2394 = vmatprep.subr.bf16.mxu0 %v2304
    %2395 = vmatpush1.bf16.msra.mxu0 %v2303
    %2396 = vmatprep.subr.bf16.mxu0 %v2308
    %2397 = vmatpush1.bf16.msra.mxu0 %v2307
    %2398 = vmatprep.subr.bf16.mxu0 0
    %2399 = vmatpush1.bf16.msra.mxu0 0
    %2400 = vmatprep.subr.bf16.mxu0 0
    %2401 = vmatpush1.bf16.msra.mxu0 0
    %2402 = vmatprep.subr.bf16.mxu0 0
    %2403 = vmatpush1.bf16.msra.mxu0 0
    %2404 = vmatprep.subr.bf16.mxu0 0
    %2405 = vmatpush1.bf16.msra.mxu0 0
    %2406 = vmatprep.subr.bf16.mxu0 0
    %2407 = vmatpush1.bf16.msra.mxu0 0
    %2408 = vmatprep.subr.bf16.mxu0 0
    %2409 = vmatpush1.bf16.msra.mxu0 0
    %2410 = vmatprep.subr.bf16.mxu0 0
    %2411 = vmatpush1.bf16.msra.mxu0 0
    %2412 = vmatprep.subr.bf16.mxu0 0
    %2413 = vmatpush1.bf16.msra.mxu0 0
    %2414 = vmatprep.mubr.bf16.mxu0 0
    %2415 = vmatmul.mubr.bf16.gmra.mrb[0].mxu0 %v2127
    %v2416 = vpop.f32.mrb[0].mxu0
    %v2417 = vadd.f32 %v2172, %v2416
    %v2418 = vpop.f32.mrb[0].mxu0
    %v2419 = vadd.f32 %v2176, %v2418
    %v2420 = vpop.f32.mrb[0].mxu0
    %v2421 = vpop.f32.mrb[0].mxu0
    %2422 = vdwg.mxu0
    %v2423 = vmax.f32 %v2376, 0.0
    %v2424 = vmax.f32 %v2378, 0.0
    %v2425 = vmax.f32 %v2417, 0.0
    %v2426 = vmax.f32 %v2419, 0.0
    %v2427 = vpack.c.bf16 %v2423, %v2423
    %v2428 = vpack.c.bf16 %v2424, %v2424
    %v2429 = vpack.c.bf16 %v2425, %v2425
    %v2430 = vpack.c.bf16 %v2426, %v2426
    %v2431 = vld [vmem:[#allocation11] sm:$0xff]
    %v2432 = vld [vmem:[#allocation11 + $0x8] sm:$0xff]
    %v2433 = vld [vmem:[#allocation11 + $0x10] sm:$0xff]
    %v2434 = vld [vmem:[#allocation11 + $0x18] sm:$0xf]
    %v2435 = vld [vmem:[#allocation11 + $0x1c] sm:$0xff]
    %v2436 = vld [vmem:[#allocation11 + $0x24] sm:$0xff]
    %v2437 = vld [vmem:[#allocation11 + $0x2c] sm:$0xff]
    %v2438 = vld [vmem:[#allocation11 + $0x34] sm:$0xf]
    %v2439 = vld [vmem:[#allocation11 + $0x38] sm:$0xff]
    %v2440 = vld [vmem:[#allocation11 + $0x40] sm:$0xff]
    %v2441 = vld [vmem:[#allocation11 + $0x48] sm:$0xff]
    %v2442 = vld [vmem:[#allocation11 + $0x50] sm:$0xf]
    %v2443 = vld [vmem:[#allocation11 + $0x54] sm:$0xff]
    %v2444 = vld [vmem:[#allocation11 + $0x5c] sm:$0xff]
    %v2445 = vld [vmem:[#allocation11 + $0x64] sm:$0xff]
    %v2446 = vld [vmem:[#allocation11 + $0x6c] sm:$0xf]
    %v2447 = vld [vmem:[#allocation11 + $0x70] sm:$0xff]
    %v2448 = vld [vmem:[#allocation11 + $0x78] sm:$0xff]
    %v2449 = vld [vmem:[#allocation11 + $0x80] sm:$0xff]
    %v2450 = vld [vmem:[#allocation11 + $0x88] sm:$0xf]
    %v2451 = vld [vmem:[#allocation11 + $0x8c] sm:$0xff]
    %v2452 = vld [vmem:[#allocation11 + $0x94] sm:$0xff]
    %v2453 = vld [vmem:[#allocation11 + $0x9c] sm:$0xff]
    %v2454 = vld [vmem:[#allocation11 + $0xa4] sm:$0xf]
    %v2455 = vld [vmem:[#allocation11 + $0xa8] sm:$0xff]
    %v2456 = vld [vmem:[#allocation11 + $0xb0] sm:$0xff]
    %v2457 = vld [vmem:[#allocation11 + $0xb8] sm:$0xff]
    %v2458 = vld [vmem:[#allocation11 + $0xc0] sm:$0xf]
    %v2459 = vld [vmem:[#allocation11 + $0xc4] sm:$0xff]
    %v2460 = vld [vmem:[#allocation11 + $0xcc] sm:$0xff]
    %v2461 = vld [vmem:[#allocation11 + $0xd4] sm:$0xff]
    %v2462 = vld [vmem:[#allocation11 + $0xdc] sm:$0xf]
    %v2463 = vld [vmem:[#allocation11 + $0xe0] sm:$0xff]
    %v2464 = vld [vmem:[#allocation11 + $0xe8] sm:$0xff]
    %v2465 = vld [vmem:[#allocation11 + $0xf0] sm:$0xff]
    %v2466 = vld [vmem:[#allocation11 + $0xf8] sm:$0xf]
    %v2467 = vld [vmem:[#allocation11 + $0xfc] sm:$0xff]
    %v2468 = vld [vmem:[#allocation11 + $0x104] sm:$0xff]
    %v2469 = vld [vmem:[#allocation11 + $0x10c] sm:$0xff]
    %v2470 = vld [vmem:[#allocation11 + $0x114] sm:$0xf]
    %v2471 = vld [vmem:[#allocation11 + $0x118] sm:$0xff]
    %v2472 = vld [vmem:[#allocation11 + $0x120] sm:$0xff]
    %v2473 = vld [vmem:[#allocation11 + $0x128] sm:$0xff]
    %v2474 = vld [vmem:[#allocation11 + $0x130] sm:$0xf]
    %v2475 = vld [vmem:[#allocation11 + $0x134] sm:$0xff]
    %v2476 = vld [vmem:[#allocation11 + $0x13c] sm:$0xff]
    %v2477 = vld [vmem:[#allocation11 + $0x144] sm:$0xff]
    %v2478 = vld [vmem:[#allocation11 + $0x14c] sm:$0xf]
    %v2479 = vld [vmem:[#allocation11 + $0x150] sm:$0xff]
    %v2480 = vld [vmem:[#allocation11 + $0x158] sm:$0xff]
    %v2481 = vld [vmem:[#allocation11 + $0x160] sm:$0xff]
    %v2482 = vld [vmem:[#allocation11 + $0x168] sm:$0xf]
    %v2483 = vld [vmem:[#allocation11 + $0x16c] sm:$0xff]
    %v2484 = vld [vmem:[#allocation11 + $0x174] sm:$0xff]
    %v2485 = vld [vmem:[#allocation11 + $0x17c] sm:$0xff]
    %v2486 = vld [vmem:[#allocation11 + $0x184] sm:$0xf]
    %v2487 = vld [vmem:[#allocation11 + $0x188] sm:$0xff]
    %v2488 = vld [vmem:[#allocation11 + $0x190] sm:$0xff]
    %v2489 = vld [vmem:[#allocation11 + $0x198] sm:$0xff]
    %v2490 = vld [vmem:[#allocation11 + $0x1a0] sm:$0xf]
    %v2491 = vld [vmem:[#allocation11 + $0x1a4] sm:$0xff]
    %v2492 = vld [vmem:[#allocation11 + $0x1ac] sm:$0xff]
    %v2493 = vld [vmem:[#allocation11 + $0x1b4] sm:$0xff]
    %v2494 = vld [vmem:[#allocation11 + $0x1bc] sm:$0xf]
    %v2495 = vld [vmem:[#allocation11 + $0x1c0] sm:$0xff]
    %v2496 = vld [vmem:[#allocation11 + $0x1c8] sm:$0xff]
    %v2497 = vld [vmem:[#allocation11 + $0x1d0] sm:$0xff]
    %v2498 = vld [vmem:[#allocation11 + $0x1d8] sm:$0xf]
    %v2499 = vld [vmem:[#allocation11 + $0x1dc] sm:$0xff]
    %v2500 = vld [vmem:[#allocation11 + $0x1e4] sm:$0xff]
    %v2501 = vld [vmem:[#allocation11 + $0x1ec] sm:$0xff]
    %v2502 = vld [vmem:[#allocation11 + $0x1f4] sm:$0xf]
    %v2503 = vld [vmem:[#allocation11 + $0x1f8] sm:$0xff]
    %v2504 = vld [vmem:[#allocation11 + $0x200] sm:$0xff]
    %v2505 = vld [vmem:[#allocation11 + $0x208] sm:$0xff]
    %v2506 = vld [vmem:[#allocation11 + $0x210] sm:$0xf]
    %v2507 = vld [vmem:[#allocation11 + $0x214] sm:$0xff]
    %v2508 = vld [vmem:[#allocation11 + $0x21c] sm:$0xff]
    %v2509 = vld [vmem:[#allocation11 + $0x224] sm:$0xff]
    %v2510 = vld [vmem:[#allocation11 + $0x22c] sm:$0xf]
    %v2511 = vld [vmem:[#allocation11 + $0x230] sm:$0xff]
    %v2512 = vld [vmem:[#allocation11 + $0x238] sm:$0xff]
    %v2513 = vld [vmem:[#allocation11 + $0x240] sm:$0xff]
    %v2514 = vld [vmem:[#allocation11 + $0x248] sm:$0xf]
    %v2515 = vld [vmem:[#allocation11 + $0x24c] sm:$0xff]
    %v2516 = vld [vmem:[#allocation11 + $0x254] sm:$0xff]
    %v2517 = vld [vmem:[#allocation11 + $0x25c] sm:$0xff]
    %v2518 = vld [vmem:[#allocation11 + $0x264] sm:$0xf]
    %v2519 = vld [vmem:[#allocation11 + $0x268] sm:$0xff]
    %v2520 = vld [vmem:[#allocation11 + $0x270] sm:$0xff]
    %v2521 = vld [vmem:[#allocation11 + $0x278] sm:$0xff]
    %v2522 = vld [vmem:[#allocation11 + $0x280] sm:$0xf]
    %v2523 = vld [vmem:[#allocation11 + $0x284] sm:$0xff]
    %v2524 = vld [vmem:[#allocation11 + $0x28c] sm:$0xff]
    %v2525 = vld [vmem:[#allocation11 + $0x294] sm:$0xff]
    %v2526 = vld [vmem:[#allocation11 + $0x29c] sm:$0xf]
    %v2527 = vld [vmem:[#allocation11 + $0x2a0] sm:$0xff]
    %v2528 = vld [vmem:[#allocation11 + $0x2a8] sm:$0xff]
    %v2529 = vld [vmem:[#allocation11 + $0x2b0] sm:$0xff]
    %v2530 = vld [vmem:[#allocation11 + $0x2b8] sm:$0xf]
    %v2531 = vld [vmem:[#allocation11 + $0x2bc] sm:$0xff]
    %v2532 = vld [vmem:[#allocation11 + $0x2c4] sm:$0xff]
    %v2533 = vld [vmem:[#allocation11 + $0x2cc] sm:$0xff]
    %v2534 = vld [vmem:[#allocation11 + $0x2d4] sm:$0xf]
    %v2535 = vld [vmem:[#allocation11 + $0x2d8] sm:$0xff]
    %v2536 = vld [vmem:[#allocation11 + $0x2e0] sm:$0xff]
    %v2537 = vld [vmem:[#allocation11 + $0x2e8] sm:$0xff]
    %v2538 = vld [vmem:[#allocation11 + $0x2f0] sm:$0xf]
    %v2539 = vld [vmem:[#allocation11 + $0x2f4] sm:$0xff]
    %v2540 = vld [vmem:[#allocation11 + $0x2fc] sm:$0xff]
    %v2541 = vld [vmem:[#allocation11 + $0x304] sm:$0xff]
    %v2542 = vld [vmem:[#allocation11 + $0x30c] sm:$0xf]
    %v2543 = vld [vmem:[#allocation11 + $0x310] sm:$0xff]
    %v2544 = vld [vmem:[#allocation11 + $0x318] sm:$0xff]
    %v2545 = vld [vmem:[#allocation11 + $0x320] sm:$0xff]
    %v2546 = vld [vmem:[#allocation11 + $0x328] sm:$0xf]
    %v2547 = vld [vmem:[#allocation11 + $0x32c] sm:$0xff]
    %v2548 = vld [vmem:[#allocation11 + $0x334] sm:$0xff]
    %v2549 = vld [vmem:[#allocation11 + $0x33c] sm:$0xff]
    %v2550 = vld [vmem:[#allocation11 + $0x344] sm:$0xf]
    %v2551 = vld [vmem:[#allocation11 + $0x348] sm:$0xff]
    %v2552 = vld [vmem:[#allocation11 + $0x350] sm:$0xff]
    %v2553 = vld [vmem:[#allocation11 + $0x358] sm:$0xff]
    %v2554 = vld [vmem:[#allocation11 + $0x360] sm:$0xf]
    %v2555 = vld [vmem:[#allocation11 + $0x364] sm:$0xff]
    %v2556 = vld [vmem:[#allocation11 + $0x36c] sm:$0xff]
    %v2557 = vld [vmem:[#allocation11 + $0x374] sm:$0xff]
    %v2558 = vld [vmem:[#allocation11 + $0x37c] sm:$0xf]
    %v2559 = vld [vmem:[#allocation11 + $0x380] sm:$0xff]
    %v2560 = vld [vmem:[#allocation11 + $0x388] sm:$0xff]
    %v2561 = vld [vmem:[#allocation11 + $0x390] sm:$0xff]
    %v2562 = vld [vmem:[#allocation11 + $0x398] sm:$0xf]
    %v2563 = vld [vmem:[#allocation11 + $0x39c] sm:$0xff]
    %v2564 = vld [vmem:[#allocation11 + $0x3a4] sm:$0xff]
    %v2565 = vld [vmem:[#allocation11 + $0x3ac] sm:$0xff]
    %v2566 = vld [vmem:[#allocation11 + $0x3b4] sm:$0xf]
    %v2567 = vld [vmem:[#allocation11 + $0x3b8] sm:$0xff]
    %v2568 = vld [vmem:[#allocation11 + $0x3c0] sm:$0xff]
    %v2569 = vld [vmem:[#allocation11 + $0x3c8] sm:$0xff]
    %v2570 = vld [vmem:[#allocation11 + $0x3d0] sm:$0xf]
    %v2571 = vld [vmem:[#allocation11 + $0x3d4] sm:$0xff]
    %v2572 = vld [vmem:[#allocation11 + $0x3dc] sm:$0xff]
    %v2573 = vld [vmem:[#allocation11 + $0x3e4] sm:$0xff]
    %v2574 = vld [vmem:[#allocation11 + $0x3ec] sm:$0xf]
    %v2575 = vld [vmem:[#allocation11 + $0x3f0] sm:$0xff]
    %v2576 = vld [vmem:[#allocation11 + $0x3f8] sm:$0xff]
    %v2577 = vld [vmem:[#allocation11 + $0x400] sm:$0xff]
    %v2578 = vld [vmem:[#allocation11 + $0x408] sm:$0xf]
    %v2579 = vld [vmem:[#allocation11 + $0x40c] sm:$0xff]
    %v2580 = vld [vmem:[#allocation11 + $0x414] sm:$0xff]
    %v2581 = vld [vmem:[#allocation11 + $0x41c] sm:$0xff]
    %v2582 = vld [vmem:[#allocation11 + $0x424] sm:$0xf]
    %v2583 = vld [vmem:[#allocation11 + $0x428] sm:$0xff]
    %v2584 = vld [vmem:[#allocation11 + $0x430] sm:$0xff]
    %v2585 = vld [vmem:[#allocation11 + $0x438] sm:$0xff]
    %v2586 = vld [vmem:[#allocation11 + $0x440] sm:$0xf]
    %v2587 = vld [vmem:[#allocation11 + $0x444] sm:$0xff]
    %v2588 = vld [vmem:[#allocation11 + $0x44c] sm:$0xff]
    %v2589 = vld [vmem:[#allocation11 + $0x454] sm:$0xff]
    %v2590 = vld [vmem:[#allocation11 + $0x45c] sm:$0xf]
    %v2591 = vld [vmem:[#allocation11 + $0x460] sm:$0xff]
    %v2592 = vld [vmem:[#allocation11 + $0x468] sm:$0xff]
    %v2593 = vld [vmem:[#allocation11 + $0x470] sm:$0xff]
    %v2594 = vld [vmem:[#allocation11 + $0x478] sm:$0xf]
    %v2595 = vld [vmem:[#allocation11 + $0x47c] sm:$0xff]
    %v2596 = vld [vmem:[#allocation11 + $0x484] sm:$0xff]
    %v2597 = vld [vmem:[#allocation11 + $0x48c] sm:$0xff]
    %v2598 = vld [vmem:[#allocation11 + $0x494] sm:$0xf]
    %v2599 = vld [vmem:[#allocation11 + $0x498] sm:$0xff]
    %v2600 = vld [vmem:[#allocation11 + $0x4a0] sm:$0xff]
    %v2601 = vld [vmem:[#allocation11 + $0x4a8] sm:$0xff]
    %v2602 = vld [vmem:[#allocation11 + $0x4b0] sm:$0xf]
    %v2603 = vld [vmem:[#allocation11 + $0x4b4] sm:$0xff]
    %v2604 = vld [vmem:[#allocation11 + $0x4bc] sm:$0xff]
    %v2605 = vld [vmem:[#allocation11 + $0x4c4] sm:$0xff]
    %v2606 = vld [vmem:[#allocation11 + $0x4cc] sm:$0xf]
    %v2607 = vld [vmem:[#allocation11 + $0x4d0] sm:$0xff]
    %v2608 = vld [vmem:[#allocation11 + $0x4d8] sm:$0xff]
    %v2609 = vld [vmem:[#allocation11 + $0x4e0] sm:$0xff]
    %v2610 = vld [vmem:[#allocation11 + $0x4e8] sm:$0xf]
    %v2611 = vld [vmem:[#allocation11 + $0x4ec] sm:$0xff]
    %v2612 = vld [vmem:[#allocation11 + $0x4f4] sm:$0xff]
    %v2613 = vld [vmem:[#allocation11 + $0x4fc] sm:$0xff]
    %v2614 = vld [vmem:[#allocation11 + $0x504] sm:$0xf]
    %v2615 = vld [vmem:[#allocation11 + $0x508] sm:$0xff]
    %v2616 = vld [vmem:[#allocation11 + $0x510] sm:$0xff]
    %v2617 = vld [vmem:[#allocation11 + $0x518] sm:$0xff]
    %v2618 = vld [vmem:[#allocation11 + $0x520] sm:$0xf]
    %v2619 = vld [vmem:[#allocation11 + $0x524] sm:$0xff]
    %v2620 = vld [vmem:[#allocation11 + $0x52c] sm:$0xff]
    %v2621 = vld [vmem:[#allocation11 + $0x534] sm:$0xff]
    %v2622 = vld [vmem:[#allocation11 + $0x53c] sm:$0xf]
    %v2623 = vld [vmem:[#allocation11 + $0x540] sm:$0xff]
    %v2624 = vld [vmem:[#allocation11 + $0x548] sm:$0xff]
    %v2625 = vld [vmem:[#allocation11 + $0x550] sm:$0xff]
    %v2626 = vld [vmem:[#allocation11 + $0x558] sm:$0xf]
    %v2627 = vld [vmem:[#allocation11 + $0x55c] sm:$0xff]
    %v2628 = vld [vmem:[#allocation11 + $0x564] sm:$0xff]
    %v2629 = vld [vmem:[#allocation11 + $0x56c] sm:$0xff]
    %v2630 = vld [vmem:[#allocation11 + $0x574] sm:$0xf]
    %v2631 = vld [vmem:[#allocation11 + $0x578] sm:$0xff]
    %v2632 = vld [vmem:[#allocation11 + $0x580] sm:$0xff]
    %v2633 = vld [vmem:[#allocation11 + $0x588] sm:$0xff]
    %v2634 = vld [vmem:[#allocation11 + $0x590] sm:$0xf]
    %v2635 = vld [vmem:[#allocation11 + $0x594] sm:$0xff]
    %v2636 = vld [vmem:[#allocation11 + $0x59c] sm:$0xff]
    %v2637 = vld [vmem:[#allocation11 + $0x5a4] sm:$0xff]
    %v2638 = vld [vmem:[#allocation11 + $0x5ac] sm:$0xf]
    %v2639 = vld [vmem:[#allocation11 + $0x5b0] sm:$0xff]
    %v2640 = vld [vmem:[#allocation11 + $0x5b8] sm:$0xff]
    %v2641 = vld [vmem:[#allocation11 + $0x5c0] sm:$0xff]
    %v2642 = vld [vmem:[#allocation11 + $0x5c8] sm:$0xf]
    %v2643 = vld [vmem:[#allocation11 + $0x5cc] sm:$0xff]
    %v2644 = vld [vmem:[#allocation11 + $0x5d4] sm:$0xff]
    %v2645 = vld [vmem:[#allocation11 + $0x5dc] sm:$0xff]
    %v2646 = vld [vmem:[#allocation11 + $0x5e4] sm:$0xf]
    %v2647 = vld [vmem:[#allocation11 + $0x5e8] sm:$0xff]
    %v2648 = vld [vmem:[#allocation11 + $0x5f0] sm:$0xff]
    %v2649 = vld [vmem:[#allocation11 + $0x5f8] sm:$0xff]
    %v2650 = vld [vmem:[#allocation11 + $0x600] sm:$0xf]
    %v2651 = vld [vmem:[#allocation11 + $0x604] sm:$0xff]
    %v2652 = vld [vmem:[#allocation11 + $0x60c] sm:$0xff]
    %v2653 = vld [vmem:[#allocation11 + $0x614] sm:$0xff]
    %v2654 = vld [vmem:[#allocation11 + $0x61c] sm:$0xf]
    %v2655 = vld [vmem:[#allocation11 + $0x620] sm:$0xff]
    %v2656 = vld [vmem:[#allocation11 + $0x628] sm:$0xff]
    %v2657 = vld [vmem:[#allocation11 + $0x630] sm:$0xff]
    %v2658 = vld [vmem:[#allocation11 + $0x638] sm:$0xf]
    %v2659 = vld [vmem:[#allocation11 + $0x63c] sm:$0xff]
    %v2660 = vld [vmem:[#allocation11 + $0x644] sm:$0xff]
    %v2661 = vld [vmem:[#allocation11 + $0x64c] sm:$0xff]
    %v2662 = vld [vmem:[#allocation11 + $0x654] sm:$0xf]
    %v2663 = vld [vmem:[#allocation11 + $0x658] sm:$0xff]
    %v2664 = vld [vmem:[#allocation11 + $0x660] sm:$0xff]
    %v2665 = vld [vmem:[#allocation11 + $0x668] sm:$0xff]
    %v2666 = vld [vmem:[#allocation11 + $0x670] sm:$0xf]
    %v2667 = vld [vmem:[#allocation11 + $0x674] sm:$0xff]
    %v2668 = vld [vmem:[#allocation11 + $0x67c] sm:$0xff]
    %v2669 = vld [vmem:[#allocation11 + $0x684] sm:$0xff]
    %v2670 = vld [vmem:[#allocation11 + $0x68c] sm:$0xf]
    %v2671 = vld [vmem:[#allocation11 + $0x690] sm:$0xff]
    %v2672 = vld [vmem:[#allocation11 + $0x698] sm:$0xff]
    %v2673 = vld [vmem:[#allocation11 + $0x6a0] sm:$0xff]
    %v2674 = vld [vmem:[#allocation11 + $0x6a8] sm:$0xf]
    %v2675 = vld [vmem:[#allocation11 + $0x6ac] sm:$0xff]
    %v2676 = vld [vmem:[#allocation11 + $0x6b4] sm:$0xff]
    %v2677 = vld [vmem:[#allocation11 + $0x6bc] sm:$0xff]
    %v2678 = vld [vmem:[#allocation11 + $0x6c4] sm:$0xf]
    %v2679 = vld [vmem:[#allocation11 + $0x6c8] sm:$0xff]
    %v2680 = vld [vmem:[#allocation11 + $0x6d0] sm:$0xff]
    %v2681 = vld [vmem:[#allocation11 + $0x6d8] sm:$0xff]
    %v2682 = vld [vmem:[#allocation11 + $0x6e0] sm:$0xf]
    %v2683 = vld [vmem:[#allocation11 + $0x6e4] sm:$0xff]
    %v2684 = vld [vmem:[#allocation11 + $0x6ec] sm:$0xff]
    %v2685 = vld [vmem:[#allocation11 + $0x6f4] sm:$0xff]
    %v2686 = vld [vmem:[#allocation11 + $0x6fc] sm:$0xf]
    %v2688 = vlaneseq
    %v2689 = vshrl.u32 %v2688, 7
    %v2690 = vsub.s32 0, %v2689
    %v2691 = vrot.slane %v112, %v2690
    %v2692 = vlaneseq
    %v2693 = vshrl.u32 %v2692, 7
    %v2694 = vsub.s32 1, %v2693
    %v2695 = vrot.slane %v112, %v2694
    %v2696 = vlaneseq
    %v2697 = vshrl.u32 %v2696, 7
    %v2698 = vsub.s32 2, %v2697
    %v2699 = vrot.slane %v112, %v2698
    %v2700 = vlaneseq
    %v2701 = vshrl.u32 %v2700, 7
    %v2702 = vsub.s32 3, %v2701
    %v2703 = vrot.slane %v112, %v2702
    %v2704 = vlaneseq
    %v2705 = vshrl.u32 %v2704, 7
    %v2706 = vsub.s32 4, %v2705
    %v2707 = vrot.slane %v112, %v2706
    %v2708 = vlaneseq
    %v2709 = vshrl.u32 %v2708, 7
    %v2710 = vsub.s32 5, %v2709
    %v2711 = vrot.slane %v112, %v2710
    %v2712 = vlaneseq
    %v2713 = vshrl.u32 %v2712, 7
    %v2714 = vsub.s32 6, %v2713
    %v2715 = vrot.slane %v112, %v2714
    %v2979 = vunpack.c.l.b16 %v2431
    %v2980 = vunpack.c.h.b16 %v2431
    %v2981 = vunpack.c.l.b16 %v2432
    %v2982 = vunpack.c.h.b16 %v2432
    %v2983 = vunpack.c.l.b16 %v2433
    %v2984 = vunpack.c.h.b16 %v2433
    %v2985 = vunpack.c.l.b16 %v2434
    %v2986 = vunpack.c.l.b16 %v2435
    %v2987 = vunpack.c.h.b16 %v2435
    %v2988 = vunpack.c.l.b16 %v2436
    %v2989 = vunpack.c.h.b16 %v2436
    %v2990 = vunpack.c.l.b16 %v2437
    %v2991 = vunpack.c.h.b16 %v2437
    %v2992 = vunpack.c.l.b16 %v2438
    %v2993 = vunpack.c.l.b16 %v2439
    %v2994 = vunpack.c.h.b16 %v2439
    %v2995 = vunpack.c.l.b16 %v2440
    %v2996 = vunpack.c.h.b16 %v2440
    %v2997 = vunpack.c.l.b16 %v2441
    %v2998 = vunpack.c.h.b16 %v2441
    %v2999 = vunpack.c.l.b16 %v2442
    %v3000 = vunpack.c.l.b16 %v2443
    %v3001 = vunpack.c.h.b16 %v2443
    %v3002 = vunpack.c.l.b16 %v2444
    %v3003 = vunpack.c.h.b16 %v2444
    %v3004 = vunpack.c.l.b16 %v2445
    %v3005 = vunpack.c.h.b16 %v2445
    %v3006 = vunpack.c.l.b16 %v2446
    %v3007 = vunpack.c.l.b16 %v2447
    %v3008 = vunpack.c.h.b16 %v2447
    %v3009 = vunpack.c.l.b16 %v2448
    %v3010 = vunpack.c.h.b16 %v2448
    %v3011 = vunpack.c.l.b16 %v2449
    %v3012 = vunpack.c.h.b16 %v2449
    %v3013 = vunpack.c.l.b16 %v2450
    %v3014 = vunpack.c.l.b16 %v2451
    %v3015 = vunpack.c.h.b16 %v2451
    %v3016 = vunpack.c.l.b16 %v2452
    %v3017 = vunpack.c.h.b16 %v2452
    %v3018 = vunpack.c.l.b16 %v2453
    %v3019 = vunpack.c.h.b16 %v2453
    %v3020 = vunpack.c.l.b16 %v2454
    %v3021 = vunpack.c.l.b16 %v2455
    %v3022 = vunpack.c.h.b16 %v2455
    %v3023 = vunpack.c.l.b16 %v2456
    %v3024 = vunpack.c.h.b16 %v2456
    %v3025 = vunpack.c.l.b16 %v2457
    %v3026 = vunpack.c.h.b16 %v2457
    %v3027 = vunpack.c.l.b16 %v2458
    %v3028 = vunpack.c.l.b16 %v2459
    %v3029 = vunpack.c.h.b16 %v2459
    %v3030 = vunpack.c.l.b16 %v2460
    %v3031 = vunpack.c.h.b16 %v2460
    %v3032 = vunpack.c.l.b16 %v2461
    %v3033 = vunpack.c.h.b16 %v2461
    %v3034 = vunpack.c.l.b16 %v2462
    %v3035 = vunpack.c.l.b16 %v2463
    %v3036 = vunpack.c.h.b16 %v2463
    %v3037 = vunpack.c.l.b16 %v2464
    %v3038 = vunpack.c.h.b16 %v2464
    %v3039 = vunpack.c.l.b16 %v2465
    %v3040 = vunpack.c.h.b16 %v2465
    %v3041 = vunpack.c.l.b16 %v2466
    %v3042 = vunpack.c.l.b16 %v2467
    %v3043 = vunpack.c.h.b16 %v2467
    %v3044 = vunpack.c.l.b16 %v2468
    %v3045 = vunpack.c.h.b16 %v2468
    %v3046 = vunpack.c.l.b16 %v2469
    %v3047 = vunpack.c.h.b16 %v2469
    %v3048 = vunpack.c.l.b16 %v2470
    %v3049 = vunpack.c.l.b16 %v2471
    %v3050 = vunpack.c.h.b16 %v2471
    %v3051 = vunpack.c.l.b16 %v2472
    %v3052 = vunpack.c.h.b16 %v2472
    %v3053 = vunpack.c.l.b16 %v2473
    %v3054 = vunpack.c.h.b16 %v2473
    %v3055 = vunpack.c.l.b16 %v2474
    %v3056 = vunpack.c.l.b16 %v2475
    %v3057 = vunpack.c.h.b16 %v2475
    %v3058 = vunpack.c.l.b16 %v2476
    %v3059 = vunpack.c.h.b16 %v2476
    %v3060 = vunpack.c.l.b16 %v2477
    %v3061 = vunpack.c.h.b16 %v2477
    %v3062 = vunpack.c.l.b16 %v2478
    %v3063 = vunpack.c.l.b16 %v2479
    %v3064 = vunpack.c.h.b16 %v2479
    %v3065 = vunpack.c.l.b16 %v2480
    %v3066 = vunpack.c.h.b16 %v2480
    %v3067 = vunpack.c.l.b16 %v2481
    %v3068 = vunpack.c.h.b16 %v2481
    %v3069 = vunpack.c.l.b16 %v2482
    %v3070 = vunpack.c.l.b16 %v2483
    %v3071 = vunpack.c.h.b16 %v2483
    %v3072 = vunpack.c.l.b16 %v2484
    %v3073 = vunpack.c.h.b16 %v2484
    %v3074 = vunpack.c.l.b16 %v2485
    %v3075 = vunpack.c.h.b16 %v2485
    %v3076 = vunpack.c.l.b16 %v2486
    %v3077 = vunpack.c.l.b16 %v2487
    %v3078 = vunpack.c.h.b16 %v2487
    %v3079 = vunpack.c.l.b16 %v2488
    %v3080 = vunpack.c.h.b16 %v2488
    %v3081 = vunpack.c.l.b16 %v2489
    %v3082 = vunpack.c.h.b16 %v2489
    %v3083 = vunpack.c.l.b16 %v2490
    %v3084 = vunpack.c.l.b16 %v2491
    %v3085 = vunpack.c.h.b16 %v2491
    %v3086 = vunpack.c.l.b16 %v2492
    %v3087 = vunpack.c.h.b16 %v2492
    %v3088 = vunpack.c.l.b16 %v2493
    %v3089 = vunpack.c.h.b16 %v2493
    %v3090 = vunpack.c.l.b16 %v2494
    %v3091 = vunpack.c.l.b16 %v2495
    %v3092 = vunpack.c.h.b16 %v2495
    %v3093 = vunpack.c.l.b16 %v2496
    %v3094 = vunpack.c.h.b16 %v2496
    %v3095 = vunpack.c.l.b16 %v2497
    %v3096 = vunpack.c.h.b16 %v2497
    %v3097 = vunpack.c.l.b16 %v2498
    %v3098 = vunpack.c.l.b16 %v2499
    %v3099 = vunpack.c.h.b16 %v2499
    %v3100 = vunpack.c.l.b16 %v2500
    %v3101 = vunpack.c.h.b16 %v2500
    %v3102 = vunpack.c.l.b16 %v2501
    %v3103 = vunpack.c.h.b16 %v2501
    %v3104 = vunpack.c.l.b16 %v2502
    %v3105 = vunpack.c.l.b16 %v2503
    %v3106 = vunpack.c.h.b16 %v2503
    %v3107 = vunpack.c.l.b16 %v2504
    %v3108 = vunpack.c.h.b16 %v2504
    %v3109 = vunpack.c.l.b16 %v2505
    %v3110 = vunpack.c.h.b16 %v2505
    %v3111 = vunpack.c.l.b16 %v2506
    %v3112 = vunpack.c.l.b16 %v2507
    %v3113 = vunpack.c.h.b16 %v2507
    %v3114 = vunpack.c.l.b16 %v2508
    %v3115 = vunpack.c.h.b16 %v2508
    %v3116 = vunpack.c.l.b16 %v2509
    %v3117 = vunpack.c.h.b16 %v2509
    %v3118 = vunpack.c.l.b16 %v2510
    %v3119 = vunpack.c.l.b16 %v2511
    %v3120 = vunpack.c.h.b16 %v2511
    %v3121 = vunpack.c.l.b16 %v2512
    %v3122 = vunpack.c.h.b16 %v2512
    %v3123 = vunpack.c.l.b16 %v2513
    %v3124 = vunpack.c.h.b16 %v2513
    %v3125 = vunpack.c.l.b16 %v2514
    %v3126 = vunpack.c.l.b16 %v2515
    %v3127 = vunpack.c.h.b16 %v2515
    %v3128 = vunpack.c.l.b16 %v2516
    %v3129 = vunpack.c.h.b16 %v2516
    %v3130 = vunpack.c.l.b16 %v2517
    %v3131 = vunpack.c.h.b16 %v2517
    %v3132 = vunpack.c.l.b16 %v2518
    %v3133 = vunpack.c.l.b16 %v2519
    %v3134 = vunpack.c.h.b16 %v2519
    %v3135 = vunpack.c.l.b16 %v2520
    %v3136 = vunpack.c.h.b16 %v2520
    %v3137 = vunpack.c.l.b16 %v2521
    %v3138 = vunpack.c.h.b16 %v2521
    %v3139 = vunpack.c.l.b16 %v2522
    %v3140 = vunpack.c.l.b16 %v2523
    %v3141 = vunpack.c.h.b16 %v2523
    %v3142 = vunpack.c.l.b16 %v2524
    %v3143 = vunpack.c.h.b16 %v2524
    %v3144 = vunpack.c.l.b16 %v2525
    %v3145 = vunpack.c.h.b16 %v2525
    %v3146 = vunpack.c.l.b16 %v2526
    %v3147 = vunpack.c.l.b16 %v2527
    %v3148 = vunpack.c.h.b16 %v2527
    %v3149 = vunpack.c.l.b16 %v2528
    %v3150 = vunpack.c.h.b16 %v2528
    %v3151 = vunpack.c.l.b16 %v2529
    %v3152 = vunpack.c.h.b16 %v2529
    %v3153 = vunpack.c.l.b16 %v2530
    %v3154 = vunpack.c.l.b16 %v2531
    %v3155 = vunpack.c.h.b16 %v2531
    %v3156 = vunpack.c.l.b16 %v2532
    %v3157 = vunpack.c.h.b16 %v2532
    %v3158 = vunpack.c.l.b16 %v2533
    %v3159 = vunpack.c.h.b16 %v2533
    %v3160 = vunpack.c.l.b16 %v2534
    %v3161 = vunpack.c.l.b16 %v2535
    %v3162 = vunpack.c.h.b16 %v2535
    %v3163 = vunpack.c.l.b16 %v2536
    %v3164 = vunpack.c.h.b16 %v2536
    %v3165 = vunpack.c.l.b16 %v2537
    %v3166 = vunpack.c.h.b16 %v2537
    %v3167 = vunpack.c.l.b16 %v2538
    %v3168 = vunpack.c.l.b16 %v2539
    %v3169 = vunpack.c.h.b16 %v2539
    %v3170 = vunpack.c.l.b16 %v2540
    %v3171 = vunpack.c.h.b16 %v2540
    %v3172 = vunpack.c.l.b16 %v2541
    %v3173 = vunpack.c.h.b16 %v2541
    %v3174 = vunpack.c.l.b16 %v2542
    %v3175 = vunpack.c.l.b16 %v2543
    %v3176 = vunpack.c.h.b16 %v2543
    %v3177 = vunpack.c.l.b16 %v2544
    %v3178 = vunpack.c.h.b16 %v2544
    %v3179 = vunpack.c.l.b16 %v2545
    %v3180 = vunpack.c.h.b16 %v2545
    %v3181 = vunpack.c.l.b16 %v2546
    %v3182 = vunpack.c.l.b16 %v2547
    %v3183 = vunpack.c.h.b16 %v2547
    %v3184 = vunpack.c.l.b16 %v2548
    %v3185 = vunpack.c.h.b16 %v2548
    %v3186 = vunpack.c.l.b16 %v2549
    %v3187 = vunpack.c.h.b16 %v2549
    %v3188 = vunpack.c.l.b16 %v2550
    %v3189 = vunpack.c.l.b16 %v2551
    %v3190 = vunpack.c.h.b16 %v2551
    %v3191 = vunpack.c.l.b16 %v2552
    %v3192 = vunpack.c.h.b16 %v2552
    %v3193 = vunpack.c.l.b16 %v2553
    %v3194 = vunpack.c.h.b16 %v2553
    %v3195 = vunpack.c.l.b16 %v2554
    %v3196 = vunpack.c.l.b16 %v2555
    %v3197 = vunpack.c.h.b16 %v2555
    %v3198 = vunpack.c.l.b16 %v2556
    %v3199 = vunpack.c.h.b16 %v2556
    %v3200 = vunpack.c.l.b16 %v2557
    %v3201 = vunpack.c.h.b16 %v2557
    %v3202 = vunpack.c.l.b16 %v2558
    %v3203 = vunpack.c.l.b16 %v2559
    %v3204 = vunpack.c.h.b16 %v2559
    %v3205 = vunpack.c.l.b16 %v2560
    %v3206 = vunpack.c.h.b16 %v2560
    %v3207 = vunpack.c.l.b16 %v2561
    %v3208 = vunpack.c.h.b16 %v2561
    %v3209 = vunpack.c.l.b16 %v2562
    %v3210 = vunpack.c.l.b16 %v2563
    %v3211 = vunpack.c.h.b16 %v2563
    %v3212 = vunpack.c.l.b16 %v2564
    %v3213 = vunpack.c.h.b16 %v2564
    %v3214 = vunpack.c.l.b16 %v2565
    %v3215 = vunpack.c.h.b16 %v2565
    %v3216 = vunpack.c.l.b16 %v2566
    %v3217 = vunpack.c.l.b16 %v2567
    %v3218 = vunpack.c.h.b16 %v2567
    %v3219 = vunpack.c.l.b16 %v2568
    %v3220 = vunpack.c.h.b16 %v2568
    %v3221 = vunpack.c.l.b16 %v2569
    %v3222 = vunpack.c.h.b16 %v2569
    %v3223 = vunpack.c.l.b16 %v2570
    %v3224 = vunpack.c.l.b16 %v2571
    %v3225 = vunpack.c.h.b16 %v2571
    %v3226 = vunpack.c.l.b16 %v2572
    %v3227 = vunpack.c.h.b16 %v2572
    %v3228 = vunpack.c.l.b16 %v2573
    %v3229 = vunpack.c.h.b16 %v2573
    %v3230 = vunpack.c.l.b16 %v2574
    %v3231 = vunpack.c.l.b16 %v2575
    %v3232 = vunpack.c.h.b16 %v2575
    %v3233 = vunpack.c.l.b16 %v2576
    %v3234 = vunpack.c.h.b16 %v2576
    %v3235 = vunpack.c.l.b16 %v2577
    %v3236 = vunpack.c.h.b16 %v2577
    %v3237 = vunpack.c.l.b16 %v2578
    %v3238 = vunpack.c.l.b16 %v2579
    %v3239 = vunpack.c.h.b16 %v2579
    %v3240 = vunpack.c.l.b16 %v2580
    %v3241 = vunpack.c.h.b16 %v2580
    %v3242 = vunpack.c.l.b16 %v2581
    %v3243 = vunpack.c.h.b16 %v2581
    %v3244 = vunpack.c.l.b16 %v2582
    %v3245 = vunpack.c.l.b16 %v2583
    %v3246 = vunpack.c.h.b16 %v2583
    %v3247 = vunpack.c.l.b16 %v2584
    %v3248 = vunpack.c.h.b16 %v2584
    %v3249 = vunpack.c.l.b16 %v2585
    %v3250 = vunpack.c.h.b16 %v2585
    %v3251 = vunpack.c.l.b16 %v2586
    %v3252 = vunpack.c.l.b16 %v2587
    %v3253 = vunpack.c.h.b16 %v2587
    %v3254 = vunpack.c.l.b16 %v2588
    %v3255 = vunpack.c.h.b16 %v2588
    %v3256 = vunpack.c.l.b16 %v2589
    %v3257 = vunpack.c.h.b16 %v2589
    %v3258 = vunpack.c.l.b16 %v2590
    %v3259 = vunpack.c.l.b16 %v2591
    %v3260 = vunpack.c.h.b16 %v2591
    %v3261 = vunpack.c.l.b16 %v2592
    %v3262 = vunpack.c.h.b16 %v2592
    %v3263 = vunpack.c.l.b16 %v2593
    %v3264 = vunpack.c.h.b16 %v2593
    %v3265 = vunpack.c.l.b16 %v2594
    %v3266 = vunpack.c.l.b16 %v2595
    %v3267 = vunpack.c.h.b16 %v2595
    %v3268 = vunpack.c.l.b16 %v2596
    %v3269 = vunpack.c.h.b16 %v2596
    %v3270 = vunpack.c.l.b16 %v2597
    %v3271 = vunpack.c.h.b16 %v2597
    %v3272 = vunpack.c.l.b16 %v2598
    %v3273 = vunpack.c.l.b16 %v2599
    %v3274 = vunpack.c.h.b16 %v2599
    %v3275 = vunpack.c.l.b16 %v2600
    %v3276 = vunpack.c.h.b16 %v2600
    %v3277 = vunpack.c.l.b16 %v2601
    %v3278 = vunpack.c.h.b16 %v2601
    %v3279 = vunpack.c.l.b16 %v2602
    %v3280 = vunpack.c.l.b16 %v2603
    %v3281 = vunpack.c.h.b16 %v2603
    %v3282 = vunpack.c.l.b16 %v2604
    %v3283 = vunpack.c.h.b16 %v2604
    %v3284 = vunpack.c.l.b16 %v2605
    %v3285 = vunpack.c.h.b16 %v2605
    %v3286 = vunpack.c.l.b16 %v2606
    %v3287 = vunpack.c.l.b16 %v2607
    %v3288 = vunpack.c.h.b16 %v2607
    %v3289 = vunpack.c.l.b16 %v2608
    %v3290 = vunpack.c.h.b16 %v2608
    %v3291 = vunpack.c.l.b16 %v2609
    %v3292 = vunpack.c.h.b16 %v2609
    %v3293 = vunpack.c.l.b16 %v2610
    %v3294 = vunpack.c.l.b16 %v2611
    %v3295 = vunpack.c.h.b16 %v2611
    %v3296 = vunpack.c.l.b16 %v2612
    %v3297 = vunpack.c.h.b16 %v2612
    %v3298 = vunpack.c.l.b16 %v2613
    %v3299 = vunpack.c.h.b16 %v2613
    %v3300 = vunpack.c.l.b16 %v2614
    %v3301 = vunpack.c.l.b16 %v2615
    %v3302 = vunpack.c.h.b16 %v2615
    %v3303 = vunpack.c.l.b16 %v2616
    %v3304 = vunpack.c.h.b16 %v2616
    %v3305 = vunpack.c.l.b16 %v2617
    %v3306 = vunpack.c.h.b16 %v2617
    %v3307 = vunpack.c.l.b16 %v2618
    %v3308 = vunpack.c.l.b16 %v2619
    %v3309 = vunpack.c.h.b16 %v2619
    %v3310 = vunpack.c.l.b16 %v2620
    %v3311 = vunpack.c.h.b16 %v2620
    %v3312 = vunpack.c.l.b16 %v2621
    %v3313 = vunpack.c.h.b16 %v2621
    %v3314 = vunpack.c.l.b16 %v2622
    %v3315 = vunpack.c.l.b16 %v2623
    %v3316 = vunpack.c.h.b16 %v2623
    %v3317 = vunpack.c.l.b16 %v2624
    %v3318 = vunpack.c.h.b16 %v2624
    %v3319 = vunpack.c.l.b16 %v2625
    %v3320 = vunpack.c.h.b16 %v2625
    %v3321 = vunpack.c.l.b16 %v2626
    %v3322 = vunpack.c.l.b16 %v2627
    %v3323 = vunpack.c.h.b16 %v2627
    %v3324 = vunpack.c.l.b16 %v2628
    %v3325 = vunpack.c.h.b16 %v2628
    %v3326 = vunpack.c.l.b16 %v2629
    %v3327 = vunpack.c.h.b16 %v2629
    %v3328 = vunpack.c.l.b16 %v2630
    %v3329 = vunpack.c.l.b16 %v2631
    %v3330 = vunpack.c.h.b16 %v2631
    %v3331 = vunpack.c.l.b16 %v2632
    %v3332 = vunpack.c.h.b16 %v2632
    %v3333 = vunpack.c.l.b16 %v2633
    %v3334 = vunpack.c.h.b16 %v2633
    %v3335 = vunpack.c.l.b16 %v2634
    %v3336 = vunpack.c.l.b16 %v2635
    %v3337 = vunpack.c.h.b16 %v2635
    %v3338 = vunpack.c.l.b16 %v2636
    %v3339 = vunpack.c.h.b16 %v2636
    %v3340 = vunpack.c.l.b16 %v2637
    %v3341 = vunpack.c.h.b16 %v2637
    %v3342 = vunpack.c.l.b16 %v2638
    %v3343 = vunpack.c.l.b16 %v2639
    %v3344 = vunpack.c.h.b16 %v2639
    %v3345 = vunpack.c.l.b16 %v2640
    %v3346 = vunpack.c.h.b16 %v2640
    %v3347 = vunpack.c.l.b16 %v2641
    %v3348 = vunpack.c.h.b16 %v2641
    %v3349 = vunpack.c.l.b16 %v2642
    %v3350 = vunpack.c.l.b16 %v2643
    %v3351 = vunpack.c.h.b16 %v2643
    %v3352 = vunpack.c.l.b16 %v2644
    %v3353 = vunpack.c.h.b16 %v2644
    %v3354 = vunpack.c.l.b16 %v2645
    %v3355 = vunpack.c.h.b16 %v2645
    %v3356 = vunpack.c.l.b16 %v2646
    %v3357 = vunpack.c.l.b16 %v2647
    %v3358 = vunpack.c.h.b16 %v2647
    %v3359 = vunpack.c.l.b16 %v2648
    %v3360 = vunpack.c.h.b16 %v2648
    %v3361 = vunpack.c.l.b16 %v2649
    %v3362 = vunpack.c.h.b16 %v2649
    %v3363 = vunpack.c.l.b16 %v2650
    %v3364 = vunpack.c.l.b16 %v2651
    %v3365 = vunpack.c.h.b16 %v2651
    %v3366 = vunpack.c.l.b16 %v2652
    %v3367 = vunpack.c.h.b16 %v2652
    %v3368 = vunpack.c.l.b16 %v2653
    %v3369 = vunpack.c.h.b16 %v2653
    %v3370 = vunpack.c.l.b16 %v2654
    %v3371 = vunpack.c.l.b16 %v2655
    %v3372 = vunpack.c.h.b16 %v2655
    %v3373 = vunpack.c.l.b16 %v2656
    %v3374 = vunpack.c.h.b16 %v2656
    %v3375 = vunpack.c.l.b16 %v2657
    %v3376 = vunpack.c.h.b16 %v2657
    %v3377 = vunpack.c.l.b16 %v2658
    %v3378 = vunpack.c.l.b16 %v2659
    %v3379 = vunpack.c.h.b16 %v2659
    %v3380 = vunpack.c.l.b16 %v2660
    %v3381 = vunpack.c.h.b16 %v2660
    %v3382 = vunpack.c.l.b16 %v2661
    %v3383 = vunpack.c.h.b16 %v2661
    %v3384 = vunpack.c.l.b16 %v2662
    %v3385 = vunpack.c.l.b16 %v2663
    %v3386 = vunpack.c.h.b16 %v2663
    %v3387 = vunpack.c.l.b16 %v2664
    %v3388 = vunpack.c.h.b16 %v2664
    %v3389 = vunpack.c.l.b16 %v2665
    %v3390 = vunpack.c.h.b16 %v2665
    %v3391 = vunpack.c.l.b16 %v2666
    %v3392 = vunpack.c.l.b16 %v2667
    %v3393 = vunpack.c.h.b16 %v2667
    %v3394 = vunpack.c.l.b16 %v2668
    %v3395 = vunpack.c.h.b16 %v2668
    %v3396 = vunpack.c.l.b16 %v2669
    %v3397 = vunpack.c.h.b16 %v2669
    %v3398 = vunpack.c.l.b16 %v2670
    %v3399 = vunpack.c.l.b16 %v2671
    %v3400 = vunpack.c.h.b16 %v2671
    %v3401 = vunpack.c.l.b16 %v2672
    %v3402 = vunpack.c.h.b16 %v2672
    %v3403 = vunpack.c.l.b16 %v2673
    %v3404 = vunpack.c.h.b16 %v2673
    %v3405 = vunpack.c.l.b16 %v2674
    %v3406 = vunpack.c.l.b16 %v2675
    %v3407 = vunpack.c.h.b16 %v2675
    %v3408 = vunpack.c.l.b16 %v2676
    %v3409 = vunpack.c.h.b16 %v2676
    %v3410 = vunpack.c.l.b16 %v2677
    %v3411 = vunpack.c.h.b16 %v2677
    %v3412 = vunpack.c.l.b16 %v2678
    %v3413 = vunpack.c.l.b16 %v2679
    %v3414 = vunpack.c.h.b16 %v2679
    %v3415 = vunpack.c.l.b16 %v2680
    %v3416 = vunpack.c.h.b16 %v2680
    %v3417 = vunpack.c.l.b16 %v2681
    %v3418 = vunpack.c.h.b16 %v2681
    %v3419 = vunpack.c.l.b16 %v2682
    %v3420 = vunpack.c.l.b16 %v2683
    %v3421 = vunpack.c.h.b16 %v2683
    %v3422 = vunpack.c.l.b16 %v2684
    %v3423 = vunpack.c.h.b16 %v2684
    %v3424 = vunpack.c.l.b16 %v2685
    %v3425 = vunpack.c.h.b16 %v2685
    %v3426 = vunpack.c.l.b16 %v2686
    %v3427 = vpack.c.b16 %v2986, %v2979
    %v3428 = vpack.c.b16 %v2987, %v2980
    %v3429 = vpack.c.b16 %v2988, %v2981
    %v3430 = vpack.c.b16 %v2989, %v2982
    %v3431 = vpack.c.b16 %v2990, %v2983
    %v3432 = vpack.c.b16 %v2991, %v2984
    %v3433 = vpack.c.b16 %v2992, %v2985
    %v3434 = vpack.c.b16 %v3000, %v2993
    %v3435 = vpack.c.b16 %v3001, %v2994
    %v3436 = vpack.c.b16 %v3002, %v2995
    %v3437 = vpack.c.b16 %v3003, %v2996
    %v3438 = vpack.c.b16 %v3004, %v2997
    %v3439 = vpack.c.b16 %v3005, %v2998
    %v3440 = vpack.c.b16 %v3006, %v2999
    %v3441 = vpack.c.b16 %v3014, %v3007
    %v3442 = vpack.c.b16 %v3015, %v3008
    %v3443 = vpack.c.b16 %v3016, %v3009
    %v3444 = vpack.c.b16 %v3017, %v3010
    %v3445 = vpack.c.b16 %v3018, %v3011
    %v3446 = vpack.c.b16 %v3019, %v3012
    %v3447 = vpack.c.b16 %v3020, %v3013
    %v3448 = vpack.c.b16 %v3028, %v3021
    %v3449 = vpack.c.b16 %v3029, %v3022
    %v3450 = vpack.c.b16 %v3030, %v3023
    %v3451 = vpack.c.b16 %v3031, %v3024
    %v3452 = vpack.c.b16 %v3032, %v3025
    %v3453 = vpack.c.b16 %v3033, %v3026
    %v3454 = vpack.c.b16 %v3034, %v3027
    %v3455 = vpack.c.b16 %v3042, %v3035
    %v3456 = vpack.c.b16 %v3043, %v3036
    %v3457 = vpack.c.b16 %v3044, %v3037
    %v3458 = vpack.c.b16 %v3045, %v3038
    %v3459 = vpack.c.b16 %v3046, %v3039
    %v3460 = vpack.c.b16 %v3047, %v3040
    %v3461 = vpack.c.b16 %v3048, %v3041
    %v3462 = vpack.c.b16 %v3056, %v3049
    %v3463 = vpack.c.b16 %v3057, %v3050
    %v3464 = vpack.c.b16 %v3058, %v3051
    %v3465 = vpack.c.b16 %v3059, %v3052
    %v3466 = vpack.c.b16 %v3060, %v3053
    %v3467 = vpack.c.b16 %v3061, %v3054
    %v3468 = vpack.c.b16 %v3062, %v3055
    %v3469 = vpack.c.b16 %v3070, %v3063
    %v3470 = vpack.c.b16 %v3071, %v3064
    %v3471 = vpack.c.b16 %v3072, %v3065
    %v3472 = vpack.c.b16 %v3073, %v3066
    %v3473 = vpack.c.b16 %v3074, %v3067
    %v3474 = vpack.c.b16 %v3075, %v3068
    %v3475 = vpack.c.b16 %v3076, %v3069
    %v3476 = vpack.c.b16 %v3084, %v3077
    %v3477 = vpack.c.b16 %v3085, %v3078
    %v3478 = vpack.c.b16 %v3086, %v3079
    %v3479 = vpack.c.b16 %v3087, %v3080
    %v3480 = vpack.c.b16 %v3088, %v3081
    %v3481 = vpack.c.b16 %v3089, %v3082
    %v3482 = vpack.c.b16 %v3090, %v3083
    %v3483 = vpack.c.b16 %v3098, %v3091
    %v3484 = vpack.c.b16 %v3099, %v3092
    %v3485 = vpack.c.b16 %v3100, %v3093
    %v3486 = vpack.c.b16 %v3101, %v3094
    %v3487 = vpack.c.b16 %v3102, %v3095
    %v3488 = vpack.c.b16 %v3103, %v3096
    %v3489 = vpack.c.b16 %v3104, %v3097
    %v3490 = vpack.c.b16 %v3112, %v3105
    %v3491 = vpack.c.b16 %v3113, %v3106
    %v3492 = vpack.c.b16 %v3114, %v3107
    %v3493 = vpack.c.b16 %v3115, %v3108
    %v3494 = vpack.c.b16 %v3116, %v3109
    %v3495 = vpack.c.b16 %v3117, %v3110
    %v3496 = vpack.c.b16 %v3118, %v3111
    %v3497 = vpack.c.b16 %v3126, %v3119
    %v3498 = vpack.c.b16 %v3127, %v3120
    %v3499 = vpack.c.b16 %v3128, %v3121
    %v3500 = vpack.c.b16 %v3129, %v3122
    %v3501 = vpack.c.b16 %v3130, %v3123
    %v3502 = vpack.c.b16 %v3131, %v3124
    %v3503 = vpack.c.b16 %v3132, %v3125
    %v3504 = vpack.c.b16 %v3140, %v3133
    %v3505 = vpack.c.b16 %v3141, %v3134
    %v3506 = vpack.c.b16 %v3142, %v3135
    %v3507 = vpack.c.b16 %v3143, %v3136
    %v3508 = vpack.c.b16 %v3144, %v3137
    %v3509 = vpack.c.b16 %v3145, %v3138
    %v3510 = vpack.c.b16 %v3146, %v3139
    %v3511 = vpack.c.b16 %v3154, %v3147
    %v3512 = vpack.c.b16 %v3155, %v3148
    %v3513 = vpack.c.b16 %v3156, %v3149
    %v3514 = vpack.c.b16 %v3157, %v3150
    %v3515 = vpack.c.b16 %v3158, %v3151
    %v3516 = vpack.c.b16 %v3159, %v3152
    %v3517 = vpack.c.b16 %v3160, %v3153
    %v3518 = vpack.c.b16 %v3168, %v3161
    %v3519 = vpack.c.b16 %v3169, %v3162
    %v3520 = vpack.c.b16 %v3170, %v3163
    %v3521 = vpack.c.b16 %v3171, %v3164
    %v3522 = vpack.c.b16 %v3172, %v3165
    %v3523 = vpack.c.b16 %v3173, %v3166
    %v3524 = vpack.c.b16 %v3174, %v3167
    %v3525 = vpack.c.b16 %v3182, %v3175
    %v3526 = vpack.c.b16 %v3183, %v3176
    %v3527 = vpack.c.b16 %v3184, %v3177
    %v3528 = vpack.c.b16 %v3185, %v3178
    %v3529 = vpack.c.b16 %v3186, %v3179
    %v3530 = vpack.c.b16 %v3187, %v3180
    %v3531 = vpack.c.b16 %v3188, %v3181
    %v3532 = vpack.c.b16 %v3196, %v3189
    %v3533 = vpack.c.b16 %v3197, %v3190
    %v3534 = vpack.c.b16 %v3198, %v3191
    %v3535 = vpack.c.b16 %v3199, %v3192
    %v3536 = vpack.c.b16 %v3200, %v3193
    %v3537 = vpack.c.b16 %v3201, %v3194
    %v3538 = vpack.c.b16 %v3202, %v3195
    %v3539 = vpack.c.b16 %v3210, %v3203
    %v3540 = vpack.c.b16 %v3211, %v3204
    %v3541 = vpack.c.b16 %v3212, %v3205
    %v3542 = vpack.c.b16 %v3213, %v3206
    %v3543 = vpack.c.b16 %v3214, %v3207
    %v3544 = vpack.c.b16 %v3215, %v3208
    %v3545 = vpack.c.b16 %v3216, %v3209
    %v3546 = vpack.c.b16 %v3224, %v3217
    %v3547 = vpack.c.b16 %v3225, %v3218
    %v3548 = vpack.c.b16 %v3226, %v3219
    %v3549 = vpack.c.b16 %v3227, %v3220
    %v3550 = vpack.c.b16 %v3228, %v3221
    %v3551 = vpack.c.b16 %v3229, %v3222
    %v3552 = vpack.c.b16 %v3230, %v3223
    %v3553 = vpack.c.b16 %v3238, %v3231
    %v3554 = vpack.c.b16 %v3239, %v3232
    %v3555 = vpack.c.b16 %v3240, %v3233
    %v3556 = vpack.c.b16 %v3241, %v3234
    %v3557 = vpack.c.b16 %v3242, %v3235
    %v3558 = vpack.c.b16 %v3243, %v3236
    %v3559 = vpack.c.b16 %v3244, %v3237
    %v3560 = vpack.c.b16 %v3252, %v3245
    %v3561 = vpack.c.b16 %v3253, %v3246
    %v3562 = vpack.c.b16 %v3254, %v3247
    %v3563 = vpack.c.b16 %v3255, %v3248
    %v3564 = vpack.c.b16 %v3256, %v3249
    %v3565 = vpack.c.b16 %v3257, %v3250
    %v3566 = vpack.c.b16 %v3258, %v3251
    %v3567 = vpack.c.b16 %v3266, %v3259
    %v3568 = vpack.c.b16 %v3267, %v3260
    %v3569 = vpack.c.b16 %v3268, %v3261
    %v3570 = vpack.c.b16 %v3269, %v3262
    %v3571 = vpack.c.b16 %v3270, %v3263
    %v3572 = vpack.c.b16 %v3271, %v3264
    %v3573 = vpack.c.b16 %v3272, %v3265
    %v3574 = vpack.c.b16 %v3280, %v3273
    %v3575 = vpack.c.b16 %v3281, %v3274
    %v3576 = vpack.c.b16 %v3282, %v3275
    %v3577 = vpack.c.b16 %v3283, %v3276
    %v3578 = vpack.c.b16 %v3284, %v3277
    %v3579 = vpack.c.b16 %v3285, %v3278
    %v3580 = vpack.c.b16 %v3286, %v3279
    %v3581 = vpack.c.b16 %v3294, %v3287
    %v3582 = vpack.c.b16 %v3295, %v3288
    %v3583 = vpack.c.b16 %v3296, %v3289
    %v3584 = vpack.c.b16 %v3297, %v3290
    %v3585 = vpack.c.b16 %v3298, %v3291
    %v3586 = vpack.c.b16 %v3299, %v3292
    %v3587 = vpack.c.b16 %v3300, %v3293
    %v3588 = vpack.c.b16 %v3308, %v3301
    %v3589 = vpack.c.b16 %v3309, %v3302
    %v3590 = vpack.c.b16 %v3310, %v3303
    %v3591 = vpack.c.b16 %v3311, %v3304
    %v3592 = vpack.c.b16 %v3312, %v3305
    %v3593 = vpack.c.b16 %v3313, %v3306
    %v3594 = vpack.c.b16 %v3314, %v3307
    %v3595 = vpack.c.b16 %v3322, %v3315
    %v3596 = vpack.c.b16 %v3323, %v3316
    %v3597 = vpack.c.b16 %v3324, %v3317
    %v3598 = vpack.c.b16 %v3325, %v3318
    %v3599 = vpack.c.b16 %v3326, %v3319
    %v3600 = vpack.c.b16 %v3327, %v3320
    %v3601 = vpack.c.b16 %v3328, %v3321
    %v3602 = vpack.c.b16 %v3336, %v3329
    %v3603 = vpack.c.b16 %v3337, %v3330
    %v3604 = vpack.c.b16 %v3338, %v3331
    %v3605 = vpack.c.b16 %v3339, %v3332
    %v3606 = vpack.c.b16 %v3340, %v3333
    %v3607 = vpack.c.b16 %v3341, %v3334
    %v3608 = vpack.c.b16 %v3342, %v3335
    %v3609 = vpack.c.b16 %v3350, %v3343
    %v3610 = vpack.c.b16 %v3351, %v3344
    %v3611 = vpack.c.b16 %v3352, %v3345
    %v3612 = vpack.c.b16 %v3353, %v3346
    %v3613 = vpack.c.b16 %v3354, %v3347
    %v3614 = vpack.c.b16 %v3355, %v3348
    %v3615 = vpack.c.b16 %v3356, %v3349
    %v3616 = vpack.c.b16 %v3364, %v3357
    %v3617 = vpack.c.b16 %v3365, %v3358
    %v3618 = vpack.c.b16 %v3366, %v3359
    %v3619 = vpack.c.b16 %v3367, %v3360
    %v3620 = vpack.c.b16 %v3368, %v3361
    %v3621 = vpack.c.b16 %v3369, %v3362
    %v3622 = vpack.c.b16 %v3370, %v3363
    %v3623 = vpack.c.b16 %v3378, %v3371
    %v3624 = vpack.c.b16 %v3379, %v3372
    %v3625 = vpack.c.b16 %v3380, %v3373
    %v3626 = vpack.c.b16 %v3381, %v3374
    %v3627 = vpack.c.b16 %v3382, %v3375
    %v3628 = vpack.c.b16 %v3383, %v3376
    %v3629 = vpack.c.b16 %v3384, %v3377
    %v3630 = vpack.c.b16 %v3392, %v3385
    %v3631 = vpack.c.b16 %v3393, %v3386
    %v3632 = vpack.c.b16 %v3394, %v3387
    %v3633 = vpack.c.b16 %v3395, %v3388
    %v3634 = vpack.c.b16 %v3396, %v3389
    %v3635 = vpack.c.b16 %v3397, %v3390
    %v3636 = vpack.c.b16 %v3398, %v3391
    %v3637 = vpack.c.b16 %v3406, %v3399
    %v3638 = vpack.c.b16 %v3407, %v3400
    %v3639 = vpack.c.b16 %v3408, %v3401
    %v3640 = vpack.c.b16 %v3409, %v3402
    %v3641 = vpack.c.b16 %v3410, %v3403
    %v3642 = vpack.c.b16 %v3411, %v3404
    %v3643 = vpack.c.b16 %v3412, %v3405
    %v3644 = vpack.c.b16 %v3420, %v3413
    %v3645 = vpack.c.b16 %v3421, %v3414
    %v3646 = vpack.c.b16 %v3422, %v3415
    %v3647 = vpack.c.b16 %v3423, %v3416
    %v3648 = vpack.c.b16 %v3424, %v3417
    %v3649 = vpack.c.b16 %v3425, %v3418
    %v3650 = vpack.c.b16 %v3426, %v3419
    %3875 = vmatprep.subr.bf16.mxu0 %v3428
    %3876 = vmatpush1.bf16.msra.mxu0 %v3427
    %3877 = vmatprep.subr.bf16.mxu0 %v3435
    %3878 = vmatpush1.bf16.msra.mxu0 %v3434
    %3879 = vmatprep.subr.bf16.mxu0 %v3442
    %3880 = vmatpush1.bf16.msra.mxu0 %v3441
    %3881 = vmatprep.subr.bf16.mxu0 %v3449
    %3882 = vmatpush1.bf16.msra.mxu0 %v3448
    %3883 = vmatprep.subr.bf16.mxu0 %v3456
    %3884 = vmatpush1.bf16.msra.mxu0 %v3455
    %3885 = vmatprep.subr.bf16.mxu0 %v3463
    %3886 = vmatpush1.bf16.msra.mxu0 %v3462
    %3887 = vmatprep.subr.bf16.mxu0 %v3470
    %3888 = vmatpush1.bf16.msra.mxu0 %v3469
    %3889 = vmatprep.subr.bf16.mxu0 %v3477
    %3890 = vmatpush1.bf16.msra.mxu0 %v3476
    %3891 = vmatprep.subr.bf16.mxu0 %v3484
    %3892 = vmatpush1.bf16.msra.mxu0 %v3483
    %3893 = vmatprep.subr.bf16.mxu0 %v3491
    %3894 = vmatpush1.bf16.msra.mxu0 %v3490
    %3895 = vmatprep.subr.bf16.mxu0 %v3498
    %3896 = vmatpush1.bf16.msra.mxu0 %v3497
    %3897 = vmatprep.subr.bf16.mxu0 %v3505
    %3898 = vmatpush1.bf16.msra.mxu0 %v3504
    %3899 = vmatprep.subr.bf16.mxu0 %v3512
    %3900 = vmatpush1.bf16.msra.mxu0 %v3511
    %3901 = vmatprep.subr.bf16.mxu0 %v3519
    %3902 = vmatpush1.bf16.msra.mxu0 %v3518
    %3903 = vmatprep.subr.bf16.mxu0 %v3526
    %3904 = vmatpush1.bf16.msra.mxu0 %v3525
    %3905 = vmatprep.subr.bf16.mxu0 %v3533
    %3906 = vmatpush1.bf16.msra.mxu0 %v3532
    %3907 = vmatprep.mubr.bf16.mxu0 %v2428
    %3908 = vmatmul.mubr.bf16.gmra.mrb[0].mxu0 %v2427
    %v3909 = vpop.f32.mrb[0].mxu0
    %v3910 = vadd.f32 %v2691, %v3909
    %v3911 = vpop.f32.mrb[0].mxu0
    %v3912 = vadd.f32 %v2695, %v3911
    %v3913 = vpop.f32.mrb[0].mxu0
    %v3914 = vpop.f32.mrb[0].mxu0
    %3915 = vdwg.mxu0
    %3916 = vmatprep.subr.bf16.mxu0 %v3540
    %3917 = vmatpush1.bf16.msra.mxu0 %v3539
    %3918 = vmatprep.subr.bf16.mxu0 %v3547
    %3919 = vmatpush1.bf16.msra.mxu0 %v3546
    %3920 = vmatprep.subr.bf16.mxu0 %v3554
    %3921 = vmatpush1.bf16.msra.mxu0 %v3553
    %3922 = vmatprep.subr.bf16.mxu0 %v3561
    %3923 = vmatpush1.bf16.msra.mxu0 %v3560
    %3924 = vmatprep.subr.bf16.mxu0 %v3568
    %3925 = vmatpush1.bf16.msra.mxu0 %v3567
    %3926 = vmatprep.subr.bf16.mxu0 %v3575
    %3927 = vmatpush1.bf16.msra.mxu0 %v3574
    %3928 = vmatprep.subr.bf16.mxu0 %v3582
    %3929 = vmatpush1.bf16.msra.mxu0 %v3581
    %3930 = vmatprep.subr.bf16.mxu0 %v3589
    %3931 = vmatpush1.bf16.msra.mxu0 %v3588
    %3932 = vmatprep.subr.bf16.mxu0 %v3596
    %3933 = vmatpush1.bf16.msra.mxu0 %v3595
    %3934 = vmatprep.subr.bf16.mxu0 %v3603
    %3935 = vmatpush1.bf16.msra.mxu0 %v3602
    %3936 = vmatprep.subr.bf16.mxu0 %v3610
    %3937 = vmatpush1.bf16.msra.mxu0 %v3609
    %3938 = vmatprep.subr.bf16.mxu0 %v3617
    %3939 = vmatpush1.bf16.msra.mxu0 %v3616
    %3940 = vmatprep.subr.bf16.mxu0 %v3624
    %3941 = vmatpush1.bf16.msra.mxu0 %v3623
    %3942 = vmatprep.subr.bf16.mxu0 %v3631
    %3943 = vmatpush1.bf16.msra.mxu0 %v3630
    %3944 = vmatprep.subr.bf16.mxu0 %v3638
    %3945 = vmatpush1.bf16.msra.mxu0 %v3637
    %3946 = vmatprep.subr.bf16.mxu0 %v3645
    %3947 = vmatpush1.bf16.msra.mxu0 %v3644
    %3948 = vmatprep.mubr.bf16.mxu0 %v2430
    %3949 = vmatmul.mubr.bf16.gmra.mrb[0].mxu0 %v2429
    %v3950 = vpop.f32.mrb[0].mxu0
    %v3951 = vadd.f32 %v3910, %v3950
    %v3952 = vpop.f32.mrb[0].mxu0
    %v3953 = vadd.f32 %v3912, %v3952
    %v3954 = vpop.f32.mrb[0].mxu0
    %v3955 = vpop.f32.mrb[0].mxu0
    %3956 = vdwg.mxu0
    %3957 = vmatprep.subr.bf16.mxu0 %v3430
    %3958 = vmatpush1.bf16.msra.mxu0 %v3429
    %3959 = vmatprep.subr.bf16.mxu0 %v3437
    %3960 = vmatpush1.bf16.msra.mxu0 %v3436
    %3961 = vmatprep.subr.bf16.mxu0 %v3444
    %3962 = vmatpush1.bf16.msra.mxu0 %v3443
    %3963 = vmatprep.subr.bf16.mxu0 %v3451
    %3964 = vmatpush1.bf16.msra.mxu0 %v3450
    %3965 = vmatprep.subr.bf16.mxu0 %v3458
    %3966 = vmatpush1.bf16.msra.mxu0 %v3457
    %3967 = vmatprep.subr.bf16.mxu0 %v3465
    %3968 = vmatpush1.bf16.msra.mxu0 %v3464
    %3969 = vmatprep.subr.bf16.mxu0 %v3472
    %3970 = vmatpush1.bf16.msra.mxu0 %v3471
    %3971 = vmatprep.subr.bf16.mxu0 %v3479
    %3972 = vmatpush1.bf16.msra.mxu0 %v3478
    %3973 = vmatprep.subr.bf16.mxu0 %v3486
    %3974 = vmatpush1.bf16.msra.mxu0 %v3485
    %3975 = vmatprep.subr.bf16.mxu0 %v3493
    %3976 = vmatpush1.bf16.msra.mxu0 %v3492
    %3977 = vmatprep.subr.bf16.mxu0 %v3500
    %3978 = vmatpush1.bf16.msra.mxu0 %v3499
    %3979 = vmatprep.subr.bf16.mxu0 %v3507
    %3980 = vmatpush1.bf16.msra.mxu0 %v3506
    %3981 = vmatprep.subr.bf16.mxu0 %v3514
    %3982 = vmatpush1.bf16.msra.mxu0 %v3513
    %3983 = vmatprep.subr.bf16.mxu0 %v3521
    %3984 = vmatpush1.bf16.msra.mxu0 %v3520
    %3985 = vmatprep.subr.bf16.mxu0 %v3528
    %3986 = vmatpush1.bf16.msra.mxu0 %v3527
    %3987 = vmatprep.subr.bf16.mxu0 %v3535
    %3988 = vmatpush1.bf16.msra.mxu0 %v3534
    %3989 = vmatprep.mubr.bf16.mxu0 %v2428
    %3990 = vmatmul.mubr.bf16.gmra.mrb[0].mxu0 %v2427
    %v3991 = vpop.f32.mrb[0].mxu0
    %v3992 = vadd.f32 %v2699, %v3991
    %v3993 = vpop.f32.mrb[0].mxu0
    %v3994 = vadd.f32 %v2703, %v3993
    %v3995 = vpop.f32.mrb[0].mxu0
    %v3996 = vpop.f32.mrb[0].mxu0
    %3997 = vdwg.mxu0
    %3998 = vmatprep.subr.bf16.mxu0 %v3542
    %3999 = vmatpush1.bf16.msra.mxu0 %v3541
    %4000 = vmatprep.subr.bf16.mxu0 %v3549
    %4001 = vmatpush1.bf16.msra.mxu0 %v3548
    %4002 = vmatprep.subr.bf16.mxu0 %v3556
    %4003 = vmatpush1.bf16.msra.mxu0 %v3555
    %4004 = vmatprep.subr.bf16.mxu0 %v3563
    %4005 = vmatpush1.bf16.msra.mxu0 %v3562
    %4006 = vmatprep.subr.bf16.mxu0 %v3570
    %4007 = vmatpush1.bf16.msra.mxu0 %v3569
    %4008 = vmatprep.subr.bf16.mxu0 %v3577
    %4009 = vmatpush1.bf16.msra.mxu0 %v3576
    %4010 = vmatprep.subr.bf16.mxu0 %v3584
    %4011 = vmatpush1.bf16.msra.mxu0 %v3583
    %4012 = vmatprep.subr.bf16.mxu0 %v3591
    %4013 = vmatpush1.bf16.msra.mxu0 %v3590
    %4014 = vmatprep.subr.bf16.mxu0 %v3598
    %4015 = vmatpush1.bf16.msra.mxu0 %v3597
    %4016 = vmatprep.subr.bf16.mxu0 %v3605
    %4017 = vmatpush1.bf16.msra.mxu0 %v3604
    %4018 = vmatprep.subr.bf16.mxu0 %v3612
    %4019 = vmatpush1.bf16.msra.mxu0 %v3611
    %4020 = vmatprep.subr.bf16.mxu0 %v3619
    %4021 = vmatpush1.bf16.msra.mxu0 %v3618
    %4022 = vmatprep.subr.bf16.mxu0 %v3626
    %4023 = vmatpush1.bf16.msra.mxu0 %v3625
    %4024 = vmatprep.subr.bf16.mxu0 %v3633
    %4025 = vmatpush1.bf16.msra.mxu0 %v3632
    %4026 = vmatprep.subr.bf16.mxu0 %v3640
    %4027 = vmatpush1.bf16.msra.mxu0 %v3639
    %4028 = vmatprep.subr.bf16.mxu0 %v3647
    %4029 = vmatpush1.bf16.msra.mxu0 %v3646
    %4030 = vmatprep.mubr.bf16.mxu0 %v2430
    %4031 = vmatmul.mubr.bf16.gmra.mrb[0].mxu0 %v2429
    %v4032 = vpop.f32.mrb[0].mxu0
    %v4033 = vadd.f32 %v3992, %v4032
    %v4034 = vpop.f32.mrb[0].mxu0
    %v4035 = vadd.f32 %v3994, %v4034
    %v4036 = vpop.f32.mrb[0].mxu0
    %v4037 = vpop.f32.mrb[0].mxu0
    %4038 = vdwg.mxu0
    %4039 = vmatprep.subr.bf16.mxu0 %v3432
    %4040 = vmatpush1.bf16.msra.mxu0 %v3431
    %4041 = vmatprep.subr.bf16.mxu0 %v3439
    %4042 = vmatpush1.bf16.msra.mxu0 %v3438
    %4043 = vmatprep.subr.bf16.mxu0 %v3446
    %4044 = vmatpush1.bf16.msra.mxu0 %v3445
    %4045 = vmatprep.subr.bf16.mxu0 %v3453
    %4046 = vmatpush1.bf16.msra.mxu0 %v3452
    %4047 = vmatprep.subr.bf16.mxu0 %v3460
    %4048 = vmatpush1.bf16.msra.mxu0 %v3459
    %4049 = vmatprep.subr.bf16.mxu0 %v3467
    %4050 = vmatpush1.bf16.msra.mxu0 %v3466
    %4051 = vmatprep.subr.bf16.mxu0 %v3474
    %4052 = vmatpush1.bf16.msra.mxu0 %v3473
    %4053 = vmatprep.subr.bf16.mxu0 %v3481
    %4054 = vmatpush1.bf16.msra.mxu0 %v3480
    %4055 = vmatprep.subr.bf16.mxu0 %v3488
    %4056 = vmatpush1.bf16.msra.mxu0 %v3487
    %4057 = vmatprep.subr.bf16.mxu0 %v3495
    %4058 = vmatpush1.bf16.msra.mxu0 %v3494
    %4059 = vmatprep.subr.bf16.mxu0 %v3502
    %4060 = vmatpush1.bf16.msra.mxu0 %v3501
    %4061 = vmatprep.subr.bf16.mxu0 %v3509
    %4062 = vmatpush1.bf16.msra.mxu0 %v3508
    %4063 = vmatprep.subr.bf16.mxu0 %v3516
    %4064 = vmatpush1.bf16.msra.mxu0 %v3515
    %4065 = vmatprep.subr.bf16.mxu0 %v3523
    %4066 = vmatpush1.bf16.msra.mxu0 %v3522
    %4067 = vmatprep.subr.bf16.mxu0 %v3530
    %4068 = vmatpush1.bf16.msra.mxu0 %v3529
    %4069 = vmatprep.subr.bf16.mxu0 %v3537
    %4070 = vmatpush1.bf16.msra.mxu0 %v3536
    %4071 = vmatprep.mubr.bf16.mxu0 %v2428
    %4072 = vmatmul.mubr.bf16.gmra.mrb[0].mxu0 %v2427
    %v4073 = vpop.f32.mrb[0].mxu0
    %v4074 = vadd.f32 %v2707, %v4073
    %v4075 = vpop.f32.mrb[0].mxu0
    %v4076 = vadd.f32 %v2711, %v4075
    %v4077 = vpop.f32.mrb[0].mxu0
    %v4078 = vpop.f32.mrb[0].mxu0
    %4079 = vdwg.mxu0
    %4080 = vmatprep.subr.bf16.mxu0 %v3544
    %4081 = vmatpush1.bf16.msra.mxu0 %v3543
    %4082 = vmatprep.subr.bf16.mxu0 %v3551
    %4083 = vmatpush1.bf16.msra.mxu0 %v3550
    %4084 = vmatprep.subr.bf16.mxu0 %v3558
    %4085 = vmatpush1.bf16.msra.mxu0 %v3557
    %4086 = vmatprep.subr.bf16.mxu0 %v3565
    %4087 = vmatpush1.bf16.msra.mxu0 %v3564
    %4088 = vmatprep.subr.bf16.mxu0 %v3572
    %4089 = vmatpush1.bf16.msra.mxu0 %v3571
    %4090 = vmatprep.subr.bf16.mxu0 %v3579
    %4091 = vmatpush1.bf16.msra.mxu0 %v3578
    %4092 = vmatprep.subr.bf16.mxu0 %v3586
    %4093 = vmatpush1.bf16.msra.mxu0 %v3585
    %4094 = vmatprep.subr.bf16.mxu0 %v3593
    %4095 = vmatpush1.bf16.msra.mxu0 %v3592
    %4096 = vmatprep.subr.bf16.mxu0 %v3600
    %4097 = vmatpush1.bf16.msra.mxu0 %v3599
    %4098 = vmatprep.subr.bf16.mxu0 %v3607
    %4099 = vmatpush1.bf16.msra.mxu0 %v3606
    %4100 = vmatprep.subr.bf16.mxu0 %v3614
    %4101 = vmatpush1.bf16.msra.mxu0 %v3613
    %4102 = vmatprep.subr.bf16.mxu0 %v3621
    %4103 = vmatpush1.bf16.msra.mxu0 %v3620
    %4104 = vmatprep.subr.bf16.mxu0 %v3628
    %4105 = vmatpush1.bf16.msra.mxu0 %v3627
    %4106 = vmatprep.subr.bf16.mxu0 %v3635
    %4107 = vmatpush1.bf16.msra.mxu0 %v3634
    %4108 = vmatprep.subr.bf16.mxu0 %v3642
    %4109 = vmatpush1.bf16.msra.mxu0 %v3641
    %4110 = vmatprep.subr.bf16.mxu0 %v3649
    %4111 = vmatpush1.bf16.msra.mxu0 %v3648
    %4112 = vmatprep.mubr.bf16.mxu0 %v2430
    %4113 = vmatmul.mubr.bf16.gmra.mrb[0].mxu0 %v2429
    %v4114 = vpop.f32.mrb[0].mxu0
    %v4115 = vadd.f32 %v4074, %v4114
    %v4116 = vpop.f32.mrb[0].mxu0
    %v4117 = vadd.f32 %v4076, %v4116
    %v4118 = vpop.f32.mrb[0].mxu0
    %v4119 = vpop.f32.mrb[0].mxu0
    %4120 = vdwg.mxu0
    %4121 = vmatprep.subr.bf16.mxu0 0
    %4122 = vmatpush1.bf16.msra.mxu0 %v3433
    %4123 = vmatprep.subr.bf16.mxu0 0
    %4124 = vmatpush1.bf16.msra.mxu0 %v3440
    %4125 = vmatprep.subr.bf16.mxu0 0
    %4126 = vmatpush1.bf16.msra.mxu0 %v3447
    %4127 = vmatprep.subr.bf16.mxu0 0
    %4128 = vmatpush1.bf16.msra.mxu0 %v3454
    %4129 = vmatprep.subr.bf16.mxu0 0
    %4130 = vmatpush1.bf16.msra.mxu0 %v3461
    %4131 = vmatprep.subr.bf16.mxu0 0
    %4132 = vmatpush1.bf16.msra.mxu0 %v3468
    %4133 = vmatprep.subr.bf16.mxu0 0
    %4134 = vmatpush1.bf16.msra.mxu0 %v3475
    %4135 = vmatprep.subr.bf16.mxu0 0
    %4136 = vmatpush1.bf16.msra.mxu0 %v3482
    %4137 = vmatprep.subr.bf16.mxu0 0
    %4138 = vmatpush1.bf16.msra.mxu0 %v3489
    %4139 = vmatprep.subr.bf16.mxu0 0
    %4140 = vmatpush1.bf16.msra.mxu0 %v3496
    %4141 = vmatprep.subr.bf16.mxu0 0
    %4142 = vmatpush1.bf16.msra.mxu0 %v3503
    %4143 = vmatprep.subr.bf16.mxu0 0
    %4144 = vmatpush1.bf16.msra.mxu0 %v3510
    %4145 = vmatprep.subr.bf16.mxu0 0
    %4146 = vmatpush1.bf16.msra.mxu0 %v3517
    %4147 = vmatprep.subr.bf16.mxu0 0
    %4148 = vmatpush1.bf16.msra.mxu0 %v3524
    %4149 = vmatprep.subr.bf16.mxu0 0
    %4150 = vmatpush1.bf16.msra.mxu0 %v3531
    %4151 = vmatprep.subr.bf16.mxu0 0
    %4152 = vmatpush1.bf16.msra.mxu0 %v3538
    %4153 = vmatprep.mubr.bf16.mxu0 %v2428
    %4154 = vmatmul.mubr.bf16.gmra.mrb[0].mxu0 %v2427
    %v4155 = vpop.f32.mrb[0].mxu0
    %v4156 = vadd.f32 %v2715, %v4155
    %v4157 = vpop.f32.mrb[0].mxu0
    %v4158 = vpop.f32.mrb[0].mxu0
    %v4159 = vpop.f32.mrb[0].mxu0
    %4160 = vdwg.mxu0
    %4161 = vmatprep.subr.bf16.mxu0 0
    %4162 = vmatpush1.bf16.msra.mxu0 %v3545
    %4163 = vmatprep.subr.bf16.mxu0 0
    %4164 = vmatpush1.bf16.msra.mxu0 %v3552
    %4165 = vmatprep.subr.bf16.mxu0 0
    %4166 = vmatpush1.bf16.msra.mxu0 %v3559
    %4167 = vmatprep.subr.bf16.mxu0 0
    %4168 = vmatpush1.bf16.msra.mxu0 %v3566
    %4169 = vmatprep.subr.bf16.mxu0 0
    %4170 = vmatpush1.bf16.msra.mxu0 %v3573
    %4171 = vmatprep.subr.bf16.mxu0 0
    %4172 = vmatpush1.bf16.msra.mxu0 %v3580
    %4173 = vmatprep.subr.bf16.mxu0 0
    %4174 = vmatpush1.bf16.msra.mxu0 %v3587
    %4175 = vmatprep.subr.bf16.mxu0 0
    %4176 = vmatpush1.bf16.msra.mxu0 %v3594
    %4177 = vmatprep.subr.bf16.mxu0 0
    %4178 = vmatpush1.bf16.msra.mxu0 %v3601
    %4179 = vmatprep.subr.bf16.mxu0 0
    %4180 = vmatpush1.bf16.msra.mxu0 %v3608
    %4181 = vmatprep.subr.bf16.mxu0 0
    %4182 = vmatpush1.bf16.msra.mxu0 %v3615
    %4183 = vmatprep.subr.bf16.mxu0 0
    %4184 = vmatpush1.bf16.msra.mxu0 %v3622
    %4185 = vmatprep.subr.bf16.mxu0 0
    %4186 = vmatpush1.bf16.msra.mxu0 %v3629
    %4187 = vmatprep.subr.bf16.mxu0 0
    %4188 = vmatpush1.bf16.msra.mxu0 %v3636
    %4189 = vmatprep.subr.bf16.mxu0 0
    %4190 = vmatpush1.bf16.msra.mxu0 %v3643
    %4191 = vmatprep.subr.bf16.mxu0 0
    %4192 = vmatpush1.bf16.msra.mxu0 %v3650
    %4193 = vmatprep.mubr.bf16.mxu0 %v2430
    %4194 = vmatmul.mubr.bf16.gmra.mrb[0].mxu0 %v2429
    %v4195 = vpop.f32.mrb[0].mxu0
    %v4196 = vadd.f32 %v4156, %v4195
    %v4197 = vpop.f32.mrb[0].mxu0
    %v4198 = vpop.f32.mrb[0].mxu0
    %v4199 = vpop.f32.mrb[0].mxu0
    %4200 = vdwg.mxu0
    %v4201 = vxor.u32 %v3951, 2147483648
    %v4202 = vxor.u32 %v3953, 2147483648
    %v4203 = vxor.u32 %v4033, 2147483648
    %v4204 = vxor.u32 %v4035, 2147483648
    %v4205 = vxor.u32 %v4115, 2147483648
    %v4206 = vxor.u32 %v4117, 2147483648
    %v4207 = vxor.u32 %v4196, 2147483648
    %v4208 = vmul.f32 %v4201, 1.442695
    %v4209 = vpow.pop %v4208
    %v4210 = vmul.f32 %v4202, 1.442695
    %v4211 = vpow.pop %v4210
    %v4212 = vmul.f32 %v4203, 1.442695
    %v4213 = vpow.pop %v4212
    %v4214 = vmul.f32 %v4204, 1.442695
    %v4215 = vpow.pop %v4214
    %v4216 = vmul.f32 %v4205, 1.442695
    %v4217 = vpow.pop %v4216
    %v4218 = vmul.f32 %v4206, 1.442695
    %v4219 = vpow.pop %v4218
    %v4220 = vmul.f32 %v4207, 1.442695
    %v4221 = vpow.pop %v4220
    %v4222 = vadd.f32 %v4209, 1.0
    %v4223 = vadd.f32 %v4211, 1.0
    %v4224 = vadd.f32 %v4213, 1.0
    %v4225 = vadd.f32 %v4215, 1.0
    %v4226 = vadd.f32 %v4217, 1.0
    %v4227 = vadd.f32 %v4219, 1.0
    %v4228 = vadd.f32 %v4221, 1.0
    %v4229 = vrcp.pop %v4222
    %v4230 = vmul.f32 1.0, %v4229
    %v4231 = vrcp.pop %v4223
    %v4232 = vmul.f32 1.0, %v4231
    %v4233 = vrcp.pop %v4224
    %v4234 = vmul.f32 1.0, %v4233
    %v4235 = vrcp.pop %v4225
    %v4236 = vmul.f32 1.0, %v4235
    %v4237 = vrcp.pop %v4226
    %v4238 = vmul.f32 1.0, %v4237
    %v4239 = vrcp.pop %v4227
    %v4240 = vmul.f32 1.0, %v4239
    %v4241 = vrcp.pop %v4228
    %v4242 = vmul.f32 1.0, %v4241
    %v4243 = vpack.c.bf16 %v4230, %v4230
    %v4244 = vpack.c.bf16 %v4232, %v4232
    %v4245 = vpack.c.bf16 %v4234, %v4234
    %v4246 = vpack.c.bf16 %v4236, %v4236
    %v4247 = vpack.c.bf16 %v4238, %v4238
    %v4248 = vpack.c.bf16 %v4240, %v4240
    %v4249 = vpack.c.bf16 %v4242, %v4242
    %v4257 = vunpack.c.l.b16 %v4243
    %v4258 = vunpack.c.l.b16 %v4244
    %v4259 = vunpack.c.l.b16 %v4245
    %v4260 = vunpack.c.l.b16 %v4246
    %v4261 = vunpack.c.l.b16 %v4247
    %v4262 = vunpack.c.l.b16 %v4248
    %v4263 = vunpack.c.l.b16 %v4249
    %v4264 = vpack.c.b16 %v4258, %v4257
    %v4265 = vpack.c.b16 %v4260, %v4259
    %v4266 = vpack.c.b16 %v4262, %v4261
    %v4267 = vpack.c.b16 %v4263, %v4263
    %4272 = vst [vmem:[#allocation13] sm:$0xff] %v4264
    %4273 = vst [vmem:[#allocation13 + $0x8] sm:$0xff] %v4265
    %4274 = vst [vmem:[#allocation13 + $0x10] sm:$0xff] %v4266
    %4275 = vst [vmem:[#allocation13 + $0x18] sm:$0xf] %v4267
    %4276 = vst [vmem:[#allocation14] sm:$0xff] %v2116
    %4277 = vst [vmem:[#allocation14 + $0x8] sm:$0xff] %v2118
    // Predicated region
    $region54: #{tpu_custom_call.1} parent=1 // pred_check
      _
    $region55: #{tpu_custom_call.1} parent=1 // pred_check_branch
      %4279 = sbr.rel (0) target = $region57
    $region56: #{tpu_custom_call.1} parent=1 // pred_region
      %s4281 = ssub.s32 448, 448
      %4282 = vsyncadd [#allocation4], %s4281
      %s4284 = sshll.u32 [#allocation13], 4
      %s4285 = int_to_ptr.vmem [resolvable:$true] %s4284
      %4287 = dma.vmem_to_hbm [thread:$0]  %s4285, 448, %s7, [#allocation4]
    $region57: #{tpu_custom_call.1} parent=1 // pred_fallthru
      _
    // Predicated region
    $region58: #{tpu_custom_call.1} parent=1 // pred_check
      _
    $region59: #{tpu_custom_call.1} parent=1 // pred_check_branch
      %4289 = sbr.rel (0) target = $region61
    $region60: #{tpu_custom_call.1} parent=1 // pred_region
      %s4291 = ssub.s32 256, 256
      %4292 = vsyncadd [#allocation15], %s4291
      %s4294 = sshll.u32 [#allocation14], 4
      %s4295 = int_to_ptr.vmem [resolvable:$true] %s4294
      %4297 = dma.vmem_to_hbm [thread:$0]  %s4295, 256, %s8, [#allocation15]
    $region61: #{tpu_custom_call.1} parent=1 // pred_fallthru
      _
    // Predicated region
    $region62: #{tpu_custom_call.1} parent=1 // pred_check
      _
    $region63: #{tpu_custom_call.1} parent=1 // pred_check_branch
      %4299 = sbr.rel (0) target = $region65
    $region64: #{tpu_custom_call.1} parent=1 // pred_region
      %4300 = dma.done [#allocation4], 448
    $region65: #{tpu_custom_call.1} parent=1 // pred_fallthru
      _
    // Predicated region
    $region66: #{tpu_custom_call.1} parent=1 // pred_check
      _
    $region67: #{tpu_custom_call.1} parent=1 // pred_check_branch
      %4302 = sbr.rel (0) target = $region69
    $region68: #{tpu_custom_call.1} parent=1 // pred_region
      %4303 = dma.done [#allocation15], 256
    $region69: #{tpu_custom_call.1} parent=1 // pred_fallthru
      _
    %4304 = vsyncpa [#allocation3], 1
    %4305 = vsyncpa [#allocation6], 1
    %4306 = vsyncpa [#allocation9], 1
    %4307 = vsyncpa [#allocation12], 1
    %4308 = vsyncpa [#allocation4], 1
    %4309 = vsyncpa [#allocation15], 1

</llo_original>
